<compile_context>
chip_gen: v7x
topology: tpu7x:2x2x1
jax: 0.10.0
libtpu: 0.0.40
codegen_flags: <defaults>
</compile_context>

<pallas_src>
import jax
import jax.numpy as jnp
from jax.experimental import pallas as pl
from jax.experimental.pallas import tpu as pltpu


# Logical layer widths of the PyTorch module and their 128-padded counterparts.
LOGICAL_DIMS = [784, 500, 100, 50, 25, 10]


def _round_up(n, m):
    return ((n + m - 1) // m) * m


PADDED_DIMS = [_round_up(d, 128) for d in LOGICAL_DIMS]  # [896, 512, 128, 128, 128, 128]


def fullynet_kernel(x_ref,
                    w1_ref, b1_ref,
                    w2_ref, b2_ref,
                    w3_ref, b3_ref,
                    w4_ref, b4_ref,
                    w5_ref, b5_ref,
                    out_ref):
    # x tile arrives as bf16; MXU dots accumulate in f32, bias/ReLU in f32.
    x = x_ref[...]

    # fc1 + relu  (drop1 == identity at inference)
    a1 = jnp.maximum(
        jnp.dot(x, w1_ref[...], preferred_element_type=jnp.float32) + b1_ref[...], 0.0)
    # fc2 + relu
    a2 = jnp.maximum(
        jnp.dot(a1.astype(jnp.bfloat16), w2_ref[...],
                preferred_element_type=jnp.float32) + b2_ref[...], 0.0)
    # fc3 + relu
    a3 = jnp.maximum(
        jnp.dot(a2.astype(jnp.bfloat16), w3_ref[...],
                preferred_element_type=jnp.float32) + b3_ref[...], 0.0)
    # fc4 + relu
    a4 = jnp.maximum(
        jnp.dot(a3.astype(jnp.bfloat16), w4_ref[...],
                preferred_element_type=jnp.float32) + b4_ref[...], 0.0)
    # fc5 (no activation)
    z5 = jnp.dot(a4.astype(jnp.bfloat16), w5_ref[...],
                 preferred_element_type=jnp.float32) + b5_ref[...]

    out_ref[...] = z5.astype(out_ref.dtype)


def _pick_tm(batch):
    """Row-tile heuristic: clamp tiny batches (bf16 sublane pack = 16 rows),
    grow the tile for big batches to amortize per-grid-step overhead while
    keeping at least 2 grid steps so both v7x TensorCores get work."""
    if batch <= 128:
        return max(16, min(128, _round_up(batch, 16)))
    for tm in (512, 256):
        if batch >= 2 * tm:
            return tm
    return 128


def fullynet_forward(x, params, *, tm=None):
    """x: (B, 784) f32.  params: list of 5 (W bf16 (in_pad,out_pad), b f32 (1,out_pad))."""
    B, in_dim = x.shape
    in_pad = PADDED_DIMS[0]
    out_pad = PADDED_DIMS[-1]
    out_dim = LOGICAL_DIMS[-1]

    if tm is None:
        tm = _pick_tm(B)
    b_pad = _round_up(max(B, tm), tm)

    # Single fused pad-after-cast: bf16 halves the dominant x HBM stream and we
    # avoid materializing a separate f32 zero-filled (b_pad, 896) buffer.
    x_p = jnp.pad(x.astype(jnp.bfloat16), ((0, b_pad - B), (0, in_pad - in_dim)))

    grid = (b_pad // tm,)

    x_spec = pl.BlockSpec((tm, in_pad), lambda i: (i, 0))
    args = [x_p]
    for w, b in params:
        args.append(w)
        args.append(b)

    def make_in_specs(weight_pipeline_kwargs):
        specs = [x_spec]
        for w, b in params:
            # Weights/biases are grid-invariant (index_map constant): VMEM-resident.
            specs.append(pl.BlockSpec(w.shape, lambda i: (0, 0), **weight_pipeline_kwargs))
            specs.append(pl.BlockSpec(b.shape, lambda i: (0, 0), **weight_pipeline_kwargs))
        return specs

    flops = 2 * b_pad * sum(PADDED_DIMS[i] * PADDED_DIMS[i + 1] for i in range(5))
    weight_bytes = sum(w.size * w.dtype.itemsize + b.size * b.dtype.itemsize
                       for w, b in params)
    bytes_accessed = (weight_bytes
                      + x_p.size * x_p.dtype.itemsize
                      + b_pad * out_pad * 4)

    def call(weight_pipeline_kwargs):
        return pl.pallas_call(
            fullynet_kernel,
            out_shape=jax.ShapeDtypeStruct((b_pad, out_pad), jnp.float32),
            grid=grid,
            in_specs=make_in_specs(weight_pipeline_kwargs),
            out_specs=pl.BlockSpec((tm, out_pad), lambda i: (i, 0)),
            compiler_params=pltpu.CompilerParams(
                dimension_semantics=("parallel",),
                vmem_limit_bytes=32 * 1024 * 1024,
            ),
            cost_estimate=pl.CostEstimate(
                flops=flops, transcendentals=0, bytes_accessed=bytes_accessed),
        )(*args)

    # Single-buffer the constant weight/bias blocks; fall back to default
    # double-buffering if this jax build rejects Buffered(1).
    try:
        out_p = call({"pipeline_mode": pl.Buffered(1)})
    except Exception:
        out_p = call({})

    # Slice padded batch rows / padded output lanes back to the logical shape.
    return out_p[:B, :out_dim]


def init_params(key):
    """Kaiming-normal (fan_in, relu) weights, zero biases — matches _initialize_weights.
    Weights stored transposed as (in_features, out_features), zero-padded to 128-multiples
    and cast to bf16; biases kept f32 (2-D for TPU layout)."""
    params = []
    for i in range(5):
        fan_in, fan_out = LOGICAL_DIMS[i], LOGICAL_DIMS[i + 1]
        in_p, out_p = PADDED_DIMS[i], PADDED_DIMS[i + 1]
        key, sub = jax.random.split(key)
        std = (2.0 / fan_in) ** 0.5  # kaiming_normal_, mode='fan_in', relu gain
        w = std * jax.random.normal(sub, (fan_in, fan_out), dtype=jnp.float32)
        w_pad = jnp.zeros((in_p, out_p), dtype=jnp.float32).at[:fan_in, :fan_out].set(w)
        w_pad = w_pad.astype(jnp.bfloat16)
        b_pad = jnp.zeros((1, out_p), dtype=jnp.float32)
        params.append((w_pad, b_pad))
    return params


def reference_forward(x, params):
    """Pure-JAX reference using the same padded bf16 weights / f32 accumulation."""
    B, in_dim = x.shape
    h = jnp.zeros((B, PADDED_DIMS[0]), dtype=jnp.float32).at[:, :in_dim].set(x)
    for i, (w, b) in enumerate(params):
        h = jnp.dot(h.astype(jnp.bfloat16), w, preferred_element_type=jnp.float32) + b
        if i < 4:
            h = jnp.maximum(h, 0.0)
    return h[:, :LOGICAL_DIMS[-1]]


if __name__ == "__main__":
    key = jax.random.PRNGKey(0)
    input_size = 784  # FashionMNIST 28*28 flattened

    kx, kp, kx2 = jax.random.split(key, 3)
    params = init_params(kp)

    # Tiny batch (serving case): tm clamps to 16 rows instead of padding to 128.
    batch = 8
    x = jax.random.normal(kx, (batch, input_size), dtype=jnp.float32)
    out = jax.block_until_ready(fullynet_forward(x, params))
    ref = reference_forward(x, params)
    assert out.shape == (batch, 10)
    assert jnp.allclose(out, ref, atol=1e-2, rtol=1e-2), (
        float(jnp.max(jnp.abs(out - ref))))

    # Non-multiple-of-tile batch: exercises batch padding + multi-step grid.
    batch2 = 300
    x2 = jax.random.normal(kx2, (batch2, input_size), dtype=jnp.float32)
    out2 = jax.block_until_ready(fullynet_forward(x2, params))
    ref2 = reference_forward(x2, params)
    assert out2.shape == (batch2, 10)
    assert jnp.allclose(out2, ref2, atol=1e-2, rtol=1e-2), (
        float(jnp.max(jnp.abs(out2 - ref2))))

    print("KERNEL_OK")
</pallas_src>

<mosaic_0001>
module attributes {stable_mosaic.version = 11 : i64} {
  func.func @fullynet_kernel(%arg0: i32, %arg1: memref<16x896xbf16, #tpu.memory_space<vmem>>, %arg2: memref<896x512xbf16, #tpu.memory_space<vmem>>, %arg3: memref<1x512xf32, #tpu.memory_space<vmem>>, %arg4: memref<512x128xbf16, #tpu.memory_space<vmem>>, %arg5: memref<1x128xf32, #tpu.memory_space<vmem>>, %arg6: memref<128x128xbf16, #tpu.memory_space<vmem>>, %arg7: memref<1x128xf32, #tpu.memory_space<vmem>>, %arg8: memref<128x128xbf16, #tpu.memory_space<vmem>>, %arg9: memref<1x128xf32, #tpu.memory_space<vmem>>, %arg10: memref<128x128xbf16, #tpu.memory_space<vmem>>, %arg11: memref<1x128xf32, #tpu.memory_space<vmem>>, %arg12: memref<16x128xf32, #tpu.memory_space<vmem>>) attributes {dimension_semantics = [#tpu.dimension_semantics<parallel>], iteration_bounds = array<i64: 1>, scalar_prefetch = 0 : i64, scratch_operands = 0 : i64, tpu.core_type = #tpu.core_type<tc>, window_params = [{transform_indices = @transform_0, window_bounds = array<i64: 16, 896>}, {pipeline_mode = #tpu.pipeline_mode<synchronous>, transform_indices = @transform_1, window_bounds = array<i64: 896, 512>}, {pipeline_mode = #tpu.pipeline_mode<synchronous>, transform_indices = @transform_2, window_bounds = array<i64: 1, 512>}, {pipeline_mode = #tpu.pipeline_mode<synchronous>, transform_indices = @transform_3, window_bounds = array<i64: 512, 128>}, {pipeline_mode = #tpu.pipeline_mode<synchronous>, transform_indices = @transform_4, window_bounds = array<i64: 1, 128>}, {pipeline_mode = #tpu.pipeline_mode<synchronous>, transform_indices = @transform_5, window_bounds = array<i64: 128, 128>}, {pipeline_mode = #tpu.pipeline_mode<synchronous>, transform_indices = @transform_6, window_bounds = array<i64: 1, 128>}, {pipeline_mode = #tpu.pipeline_mode<synchronous>, transform_indices = @transform_7, window_bounds = array<i64: 128, 128>}, {pipeline_mode = #tpu.pipeline_mode<synchronous>, transform_indices = @transform_8, window_bounds = array<i64: 1, 128>}, {pipeline_mode = #tpu.pipeline_mode<synchronous>, transform_indices = @transform_9, window_bounds = array<i64: 128, 128>}, {pipeline_mode = #tpu.pipeline_mode<synchronous>, transform_indices = @transform_10, window_bounds = array<i64: 1, 128>}, {transform_indices = @transform_11, window_bounds = array<i64: 16, 128>}]} {
    %c0 = arith.constant 0 : index
    %c0_0 = arith.constant 0 : index
    %0 = vector.load %arg1[%c0, %c0_0] : memref<16x896xbf16, #tpu.memory_space<vmem>>, vector<16x896xbf16>
    %c0_1 = arith.constant 0 : index
    %c0_2 = arith.constant 0 : index
    %1 = vector.load %arg2[%c0_1, %c0_2] : memref<896x512xbf16, #tpu.memory_space<vmem>>, vector<896x512xbf16>
    %cst = arith.constant dense<0.000000e+00> : vector<16x512xf32>
    %2 = tpu.matmul %0, %1, %cst {dimension_numbers = #tpu.dot_dimension_numbers<[1], [0], [0], [1], [0, 0, 1, 1], [], []>} : vector<16x896xbf16>, vector<896x512xbf16>, vector<16x512xf32> -> vector<16x512xf32>
    %c0_3 = arith.constant 0 : index
    %c0_4 = arith.constant 0 : index
    %3 = vector.load %arg3[%c0_3, %c0_4] : memref<1x512xf32, #tpu.memory_space<vmem>>, vector<1x512xf32>
    %4 = vector.broadcast %3 : vector<1x512xf32> to vector<16x512xf32>
    %5 = arith.addf %2, %4 : vector<16x512xf32>
    %cst_5 = arith.constant 0.000000e+00 : f32
    %6 = vector.broadcast %cst_5 : f32 to vector<16x512xf32>
    %7 = arith.maximumf %5, %6 : vector<16x512xf32>
    %8 = arith.truncf %7 : vector<16x512xf32> to vector<16x512xbf16>
    %c0_6 = arith.constant 0 : index
    %c0_7 = arith.constant 0 : index
    %9 = vector.load %arg4[%c0_6, %c0_7] : memref<512x128xbf16, #tpu.memory_space<vmem>>, vector<512x128xbf16>
    %cst_8 = arith.constant dense<0.000000e+00> : vector<16x128xf32>
    %10 = tpu.matmul %8, %9, %cst_8 {dimension_numbers = #tpu.dot_dimension_numbers<[1], [0], [0], [1], [0, 0, 1, 1], [], []>} : vector<16x512xbf16>, vector<512x128xbf16>, vector<16x128xf32> -> vector<16x128xf32>
    %c0_9 = arith.constant 0 : index
    %c0_10 = arith.constant 0 : index
    %11 = vector.load %arg5[%c0_9, %c0_10] : memref<1x128xf32, #tpu.memory_space<vmem>>, vector<1x128xf32>
    %12 = vector.broadcast %11 : vector<1x128xf32> to vector<16x128xf32>
    %13 = arith.addf %10, %12 : vector<16x128xf32>
    %cst_11 = arith.constant 0.000000e+00 : f32
    %14 = vector.broadcast %cst_11 : f32 to vector<16x128xf32>
    %15 = arith.maximumf %13, %14 : vector<16x128xf32>
    %16 = arith.truncf %15 : vector<16x128xf32> to vector<16x128xbf16>
    %c0_12 = arith.constant 0 : index
    %c0_13 = arith.constant 0 : index
    %17 = vector.load %arg6[%c0_12, %c0_13] : memref<128x128xbf16, #tpu.memory_space<vmem>>, vector<128x128xbf16>
    %cst_14 = arith.constant dense<0.000000e+00> : vector<16x128xf32>
    %18 = tpu.matmul %16, %17, %cst_14 {dimension_numbers = #tpu.dot_dimension_numbers<[1], [0], [0], [1], [0, 0, 1, 1], [], []>} : vector<16x128xbf16>, vector<128x128xbf16>, vector<16x128xf32> -> vector<16x128xf32>
    %c0_15 = arith.constant 0 : index
    %c0_16 = arith.constant 0 : index
    %19 = vector.load %arg7[%c0_15, %c0_16] : memref<1x128xf32, #tpu.memory_space<vmem>>, vector<1x128xf32>
    %20 = vector.broadcast %19 : vector<1x128xf32> to vector<16x128xf32>
    %21 = arith.addf %18, %20 : vector<16x128xf32>
    %cst_17 = arith.constant 0.000000e+00 : f32
    %22 = vector.broadcast %cst_17 : f32 to vector<16x128xf32>
    %23 = arith.maximumf %21, %22 : vector<16x128xf32>
    %24 = arith.truncf %23 : vector<16x128xf32> to vector<16x128xbf16>
    %c0_18 = arith.constant 0 : index
    %c0_19 = arith.constant 0 : index
    %25 = vector.load %arg8[%c0_18, %c0_19] : memref<128x128xbf16, #tpu.memory_space<vmem>>, vector<128x128xbf16>
    %cst_20 = arith.constant dense<0.000000e+00> : vector<16x128xf32>
    %26 = tpu.matmul %24, %25, %cst_20 {dimension_numbers = #tpu.dot_dimension_numbers<[1], [0], [0], [1], [0, 0, 1, 1], [], []>} : vector<16x128xbf16>, vector<128x128xbf16>, vector<16x128xf32> -> vector<16x128xf32>
    %c0_21 = arith.constant 0 : index
    %c0_22 = arith.constant 0 : index
    %27 = vector.load %arg9[%c0_21, %c0_22] : memref<1x128xf32, #tpu.memory_space<vmem>>, vector<1x128xf32>
    %28 = vector.broadcast %27 : vector<1x128xf32> to vector<16x128xf32>
    %29 = arith.addf %26, %28 : vector<16x128xf32>
    %cst_23 = arith.constant 0.000000e+00 : f32
    %30 = vector.broadcast %cst_23 : f32 to vector<16x128xf32>
    %31 = arith.maximumf %29, %30 : vector<16x128xf32>
    %32 = arith.truncf %31 : vector<16x128xf32> to vector<16x128xbf16>
    %c0_24 = arith.constant 0 : index
    %c0_25 = arith.constant 0 : index
    %33 = vector.load %arg10[%c0_24, %c0_25] : memref<128x128xbf16, #tpu.memory_space<vmem>>, vector<128x128xbf16>
    %cst_26 = arith.constant dense<0.000000e+00> : vector<16x128xf32>
    %34 = tpu.matmul %32, %33, %cst_26 {dimension_numbers = #tpu.dot_dimension_numbers<[1], [0], [0], [1], [0, 0, 1, 1], [], []>} : vector<16x128xbf16>, vector<128x128xbf16>, vector<16x128xf32> -> vector<16x128xf32>
    %c0_27 = arith.constant 0 : index
    %c0_28 = arith.constant 0 : index
    %35 = vector.load %arg11[%c0_27, %c0_28] : memref<1x128xf32, #tpu.memory_space<vmem>>, vector<1x128xf32>
    %36 = vector.broadcast %35 : vector<1x128xf32> to vector<16x128xf32>
    %37 = arith.addf %34, %36 : vector<16x128xf32>
    %c0_29 = arith.constant 0 : index
    %c0_30 = arith.constant 0 : index
    %38 = vector.load %arg12[%c0_29, %c0_30] : memref<16x128xf32, #tpu.memory_space<vmem>>, vector<16x128xf32>
    tpu.vector_store %arg12[%c0_29, %c0_30], %37 {strides = array<i32>} : memref<16x128xf32, #tpu.memory_space<vmem>>, vector<16x128xf32>,
    return
  }
  func.func @transform_0(%arg0: i32) -> (i32, i32) {
    %c0_i32 = arith.constant 0 : i32
    %c0_i32_0 = arith.constant 0 : i32
    return %arg0, %c0_i32 : i32, i32
  }
  func.func @transform_1(%arg0: i32) -> (i32, i32) {
    %c0_i32 = arith.constant 0 : i32
    %c0_i32_0 = arith.constant 0 : i32
    %c0_i32_1 = arith.constant 0 : i32
    return %c0_i32, %c0_i32_0 : i32, i32
  }
  func.func @transform_2(%arg0: i32) -> (i32, i32) {
    %c0_i32 = arith.constant 0 : i32
    %c0_i32_0 = arith.constant 0 : i32
    %c0_i32_1 = arith.constant 0 : i32
    return %c0_i32, %c0_i32_0 : i32, i32
  }
  func.func @transform_3(%arg0: i32) -> (i32, i32) {
    %c0_i32 = arith.constant 0 : i32
    %c0_i32_0 = arith.constant 0 : i32
    %c0_i32_1 = arith.constant 0 : i32
    return %c0_i32, %c0_i32_0 : i32, i32
  }
  func.func @transform_4(%arg0: i32) -> (i32, i32) {
    %c0_i32 = arith.constant 0 : i32
    %c0_i32_0 = arith.constant 0 : i32
    %c0_i32_1 = arith.constant 0 : i32
    return %c0_i32, %c0_i32_0 : i32, i32
  }
  func.func @transform_5(%arg0: i32) -> (i32, i32) {
    %c0_i32 = arith.constant 0 : i32
    %c0_i32_0 = arith.constant 0 : i32
    %c0_i32_1 = arith.constant 0 : i32
    return %c0_i32, %c0_i32_0 : i32, i32
  }
  func.func @transform_6(%arg0: i32) -> (i32, i32) {
    %c0_i32 = arith.constant 0 : i32
    %c0_i32_0 = arith.constant 0 : i32
    %c0_i32_1 = arith.constant 0 : i32
    return %c0_i32, %c0_i32_0 : i32, i32
  }
  func.func @transform_7(%arg0: i32) -> (i32, i32) {
    %c0_i32 = arith.constant 0 : i32
    %c0_i32_0 = arith.constant 0 : i32
    %c0_i32_1 = arith.constant 0 : i32
    return %c0_i32, %c0_i32_0 : i32, i32
  }
  func.func @transform_8(%arg0: i32) -> (i32, i32) {
    %c0_i32 = arith.constant 0 : i32
    %c0_i32_0 = arith.constant 0 : i32
    %c0_i32_1 = arith.constant 0 : i32
    return %c0_i32, %c0_i32_0 : i32, i32
  }
  func.func @transform_9(%arg0: i32) -> (i32, i32) {
    %c0_i32 = arith.constant 0 : i32
    %c0_i32_0 = arith.constant 0 : i32
    %c0_i32_1 = arith.constant 0 : i32
    return %c0_i32, %c0_i32_0 : i32, i32
  }
  func.func @transform_10(%arg0: i32) -> (i32, i32) {
    %c0_i32 = arith.constant 0 : i32
    %c0_i32_0 = arith.constant 0 : i32
    %c0_i32_1 = arith.constant 0 : i32
    return %c0_i32, %c0_i32_0 : i32, i32
  }
  func.func @transform_11(%arg0: i32) -> (i32, i32) {
    %c0_i32 = arith.constant 0 : i32
    %c0_i32_0 = arith.constant 0 : i32
    return %arg0, %c0_i32 : i32, i32
  }
}

module attributes {stable_mosaic.version = 11 : i64} {
  func.func @fullynet_kernel(%arg0: i32, %arg1: memref<16x896xbf16, #tpu.memory_space<vmem>>, %arg2: memref<896x512xbf16, #tpu.memory_space<vmem>>, %arg3: memref<1x512xf32, #tpu.memory_space<vmem>>, %arg4: memref<512x128xbf16, #tpu.memory_space<vmem>>, %arg5: memref<1x128xf32, #tpu.memory_space<vmem>>, %arg6: memref<128x128xbf16, #tpu.memory_space<vmem>>, %arg7: memref<1x128xf32, #tpu.memory_space<vmem>>, %arg8: memref<128x128xbf16, #tpu.memory_space<vmem>>, %arg9: memref<1x128xf32, #tpu.memory_space<vmem>>, %arg10: memref<128x128xbf16, #tpu.memory_space<vmem>>, %arg11: memref<1x128xf32, #tpu.memory_space<vmem>>, %arg12: memref<16x128xf32, #tpu.memory_space<vmem>>) attributes {dimension_semantics = [#tpu.dimension_semantics<parallel>], iteration_bounds = array<i64: 1>, scalar_prefetch = 0 : i64, scratch_operands = 0 : i64, tpu.core_type = #tpu.core_type<tc>, window_params = [{transform_indices = @transform_0, window_bounds = array<i64: 16, 896>}, {pipeline_mode = #tpu.pipeline_mode<synchronous>, transform_indices = @transform_1, window_bounds = array<i64: 896, 512>}, {pipeline_mode = #tpu.pipeline_mode<synchronous>, transform_indices = @transform_2, window_bounds = array<i64: 1, 512>}, {pipeline_mode = #tpu.pipeline_mode<synchronous>, transform_indices = @transform_3, window_bounds = array<i64: 512, 128>}, {pipeline_mode = #tpu.pipeline_mode<synchronous>, transform_indices = @transform_4, window_bounds = array<i64: 1, 128>}, {pipeline_mode = #tpu.pipeline_mode<synchronous>, transform_indices = @transform_5, window_bounds = array<i64: 128, 128>}, {pipeline_mode = #tpu.pipeline_mode<synchronous>, transform_indices = @transform_6, window_bounds = array<i64: 1, 128>}, {pipeline_mode = #tpu.pipeline_mode<synchronous>, transform_indices = @transform_7, window_bounds = array<i64: 128, 128>}, {pipeline_mode = #tpu.pipeline_mode<synchronous>, transform_indices = @transform_8, window_bounds = array<i64: 1, 128>}, {pipeline_mode = #tpu.pipeline_mode<synchronous>, transform_indices = @transform_9, window_bounds = array<i64: 128, 128>}, {pipeline_mode = #tpu.pipeline_mode<synchronous>, transform_indices = @transform_10, window_bounds = array<i64: 1, 128>}, {transform_indices = @transform_11, window_bounds = array<i64: 16, 128>}]} {
    %c0 = arith.constant 0 : index
    %c0_0 = arith.constant 0 : index
    %0 = vector.load %arg1[%c0, %c0_0] : memref<16x896xbf16, #tpu.memory_space<vmem>>, vector<16x896xbf16>
    %c0_1 = arith.constant 0 : index
    %c0_2 = arith.constant 0 : index
    %1 = vector.load %arg2[%c0_1, %c0_2] : memref<896x512xbf16, #tpu.memory_space<vmem>>, vector<896x512xbf16>
    %cst = arith.constant dense<0.000000e+00> : vector<16x512xf32>
    %2 = tpu.matmul %0, %1, %cst {dimension_numbers = #tpu.dot_dimension_numbers<[1], [0], [0], [1], [0, 0, 1, 1], [], []>} : vector<16x896xbf16>, vector<896x512xbf16>, vector<16x512xf32> -> vector<16x512xf32>
    %c0_3 = arith.constant 0 : index
    %c0_4 = arith.constant 0 : index
    %3 = vector.load %arg3[%c0_3, %c0_4] : memref<1x512xf32, #tpu.memory_space<vmem>>, vector<1x512xf32>
    %4 = vector.broadcast %3 : vector<1x512xf32> to vector<16x512xf32>
    %5 = arith.addf %2, %4 : vector<16x512xf32>
    %cst_5 = arith.constant 0.000000e+00 : f32
    %6 = vector.broadcast %cst_5 : f32 to vector<16x512xf32>
    %7 = arith.maximumf %5, %6 : vector<16x512xf32>
    %8 = arith.truncf %7 : vector<16x512xf32> to vector<16x512xbf16>
    %c0_6 = arith.constant 0 : index
    %c0_7 = arith.constant 0 : index
    %9 = vector.load %arg4[%c0_6, %c0_7] : memref<512x128xbf16, #tpu.memory_space<vmem>>, vector<512x128xbf16>
    %cst_8 = arith.constant dense<0.000000e+00> : vector<16x128xf32>
    %10 = tpu.matmul %8, %9, %cst_8 {dimension_numbers = #tpu.dot_dimension_numbers<[1], [0], [0], [1], [0, 0, 1, 1], [], []>} : vector<16x512xbf16>, vector<512x128xbf16>, vector<16x128xf32> -> vector<16x128xf32>
    %c0_9 = arith.constant 0 : index
    %c0_10 = arith.constant 0 : index
    %11 = vector.load %arg5[%c0_9, %c0_10] : memref<1x128xf32, #tpu.memory_space<vmem>>, vector<1x128xf32>
    %12 = vector.broadcast %11 : vector<1x128xf32> to vector<16x128xf32>
    %13 = arith.addf %10, %12 : vector<16x128xf32>
    %cst_11 = arith.constant 0.000000e+00 : f32
    %14 = vector.broadcast %cst_11 : f32 to vector<16x128xf32>
    %15 = arith.maximumf %13, %14 : vector<16x128xf32>
    %16 = arith.truncf %15 : vector<16x128xf32> to vector<16x128xbf16>
    %c0_12 = arith.constant 0 : index
    %c0_13 = arith.constant 0 : index
    %17 = vector.load %arg6[%c0_12, %c0_13] : memref<128x128xbf16, #tpu.memory_space<vmem>>, vector<128x128xbf16>
    %cst_14 = arith.constant dense<0.000000e+00> : vector<16x128xf32>
    %18 = tpu.matmul %16, %17, %cst_14 {dimension_numbers = #tpu.dot_dimension_numbers<[1], [0], [0], [1], [0, 0, 1, 1], [], []>} : vector<16x128xbf16>, vector<128x128xbf16>, vector<16x128xf32> -> vector<16x128xf32>
    %c0_15 = arith.constant 0 : index
    %c0_16 = arith.constant 0 : index
    %19 = vector.load %arg7[%c0_15, %c0_16] : memref<1x128xf32, #tpu.memory_space<vmem>>, vector<1x128xf32>
    %20 = vector.broadcast %19 : vector<1x128xf32> to vector<16x128xf32>
    %21 = arith.addf %18, %20 : vector<16x128xf32>
    %cst_17 = arith.constant 0.000000e+00 : f32
    %22 = vector.broadcast %cst_17 : f32 to vector<16x128xf32>
    %23 = arith.maximumf %21, %22 : vector<16x128xf32>
    %24 = arith.truncf %23 : vector<16x128xf32> to vector<16x128xbf16>
    %c0_18 = arith.constant 0 : index
    %c0_19 = arith.constant 0 : index
    %25 = vector.load %arg8[%c0_18, %c0_19] : memref<128x128xbf16, #tpu.memory_space<vmem>>, vector<128x128xbf16>
    %cst_20 = arith.constant dense<0.000000e+00> : vector<16x128xf32>
    %26 = tpu.matmul %24, %25, %cst_20 {dimension_numbers = #tpu.dot_dimension_numbers<[1], [0], [0], [1], [0, 0, 1, 1], [], []>} : vector<16x128xbf16>, vector<128x128xbf16>, vector<16x128xf32> -> vector<16x128xf32>
    %c0_21 = arith.constant 0 : index
    %c0_22 = arith.constant 0 : index
    %27 = vector.load %arg9[%c0_21, %c0_22] : memref<1x128xf32, #tpu.memory_space<vmem>>, vector<1x128xf32>
    %28 = vector.broadcast %27 : vector<1x128xf32> to vector<16x128xf32>
    %29 = arith.addf %26, %28 : vector<16x128xf32>
    %cst_23 = arith.constant 0.000000e+00 : f32
    %30 = vector.broadcast %cst_23 : f32 to vector<16x128xf32>
    %31 = arith.maximumf %29, %30 : vector<16x128xf32>
    %32 = arith.truncf %31 : vector<16x128xf32> to vector<16x128xbf16>
    %c0_24 = arith.constant 0 : index
    %c0_25 = arith.constant 0 : index
    %33 = vector.load %arg10[%c0_24, %c0_25] : memref<128x128xbf16, #tpu.memory_space<vmem>>, vector<128x128xbf16>
    %cst_26 = arith.constant dense<0.000000e+00> : vector<16x128xf32>
    %34 = tpu.matmul %32, %33, %cst_26 {dimension_numbers = #tpu.dot_dimension_numbers<[1], [0], [0], [1], [0, 0, 1, 1], [], []>} : vector<16x128xbf16>, vector<128x128xbf16>, vector<16x128xf32> -> vector<16x128xf32>
    %c0_27 = arith.constant 0 : index
    %c0_28 = arith.constant 0 : index
    %35 = vector.load %arg11[%c0_27, %c0_28] : memref<1x128xf32, #tpu.memory_space<vmem>>, vector<1x128xf32>
    %36 = vector.broadcast %35 : vector<1x128xf32> to vector<16x128xf32>
    %37 = arith.addf %34, %36 : vector<16x128xf32>
    %c0_29 = arith.constant 0 : index
    %c0_30 = arith.constant 0 : index
    %38 = vector.load %arg12[%c0_29, %c0_30] : memref<16x128xf32, #tpu.memory_space<vmem>>, vector<16x128xf32>
    tpu.vector_store %arg12[%c0_29, %c0_30], %37 {strides = array<i32>} : memref<16x128xf32, #tpu.memory_space<vmem>>, vector<16x128xf32>,
    return
  }
  func.func @transform_0(%arg0: i32) -> (i32, i32) {
    %c0_i32 = arith.constant 0 : i32
    %c0_i32_0 = arith.constant 0 : i32
    return %arg0, %c0_i32 : i32, i32
  }
  func.func @transform_1(%arg0: i32) -> (i32, i32) {
    %c0_i32 = arith.constant 0 : i32
    %c0_i32_0 = arith.constant 0 : i32
    %c0_i32_1 = arith.constant 0 : i32
    return %c0_i32, %c0_i32_0 : i32, i32
  }
  func.func @transform_2(%arg0: i32) -> (i32, i32) {
    %c0_i32 = arith.constant 0 : i32
    %c0_i32_0 = arith.constant 0 : i32
    %c0_i32_1 = arith.constant 0 : i32
    return %c0_i32, %c0_i32_0 : i32, i32
  }
  func.func @transform_3(%arg0: i32) -> (i32, i32) {
    %c0_i32 = arith.constant 0 : i32
    %c0_i32_0 = arith.constant 0 : i32
    %c0_i32_1 = arith.constant 0 : i32
    return %c0_i32, %c0_i32_0 : i32, i32
  }
  func.func @transform_4(%arg0: i32) -> (i32, i32) {
    %c0_i32 = arith.constant 0 : i32
    %c0_i32_0 = arith.constant 0 : i32
    %c0_i32_1 = arith.constant 0 : i32
    return %c0_i32, %c0_i32_0 : i32, i32
  }
  func.func @transform_5(%arg0: i32) -> (i32, i32) {
    %c0_i32 = arith.constant 0 : i32
    %c0_i32_0 = arith.constant 0 : i32
    %c0_i32_1 = arith.constant 0 : i32
    return %c0_i32, %c0_i32_0 : i32, i32
  }
  func.func @transform_6(%arg0: i32) -> (i32, i32) {
    %c0_i32 = arith.constant 0 : i32
    %c0_i32_0 = arith.constant 0 : i32
    %c0_i32_1 = arith.constant 0 : i32
    return %c0_i32, %c0_i32_0 : i32, i32
  }
  func.func @transform_7(%arg0: i32) -> (i32, i32) {
    %c0_i32 = arith.constant 0 : i32
    %c0_i32_0 = arith.constant 0 : i32
    %c0_i32_1 = arith.constant 0 : i32
    return %c0_i32, %c0_i32_0 : i32, i32
  }
  func.func @transform_8(%arg0: i32) -> (i32, i32) {
    %c0_i32 = arith.constant 0 : i32
    %c0_i32_0 = arith.constant 0 : i32
    %c0_i32_1 = arith.constant 0 : i32
    return %c0_i32, %c0_i32_0 : i32, i32
  }
  func.func @transform_9(%arg0: i32) -> (i32, i32) {
    %c0_i32 = arith.constant 0 : i32
    %c0_i32_0 = arith.constant 0 : i32
    %c0_i32_1 = arith.constant 0 : i32
    return %c0_i32, %c0_i32_0 : i32, i32
  }
  func.func @transform_10(%arg0: i32) -> (i32, i32) {
    %c0_i32 = arith.constant 0 : i32
    %c0_i32_0 = arith.constant 0 : i32
    %c0_i32_1 = arith.constant 0 : i32
    return %c0_i32, %c0_i32_0 : i32, i32
  }
  func.func @transform_11(%arg0: i32) -> (i32, i32) {
    %c0_i32 = arith.constant 0 : i32
    %c0_i32_0 = arith.constant 0 : i32
    return %arg0, %c0_i32 : i32, i32
  }
}

</mosaic_0001>

<llo_original>
// kernel: tpu_custom_call.1
$region0: #{tpu_custom_call.1}
  #allocation0 [shape = 'u32[]', space=smem, size = 0x4, offset = 0x4, fixed_abs, tag = 'smem constant byte address 0x4 - core index']
  #allocation1 [shape = 'u32[144,128]{1,0:T(1,128)}', space=vmem, size = 0x12000, scoped, tag = 'internal scratch']
  %s0 = inlined_call_operand.hbm [shape: bf16[16,896], index: 0, kind: input, shape index: {}]
  %s1 = inlined_call_operand.hbm [shape: bf16[896,512], index: 1, kind: input, shape index: {}]
  %s2 = inlined_call_operand.vmem [shape: f32[1,512], index: 2, kind: input, shape index: {}]
  %s3 = inlined_call_operand.hbm [shape: bf16[512,128], index: 3, kind: input, shape index: {}]
  %s4 = inlined_call_operand.vmem [shape: f32[1,128], index: 4, kind: input, shape index: {}]
  %s5 = inlined_call_operand.hbm [shape: bf16[128,128], index: 5, kind: input, shape index: {}]
  %s6 = inlined_call_operand.vmem [shape: f32[1,128], index: 6, kind: input, shape index: {}]
  %s7 = inlined_call_operand.hbm [shape: bf16[128,128], index: 7, kind: input, shape index: {}]
  %s8 = inlined_call_operand.vmem [shape: f32[1,128], index: 8, kind: input, shape index: {}]
  %s9 = inlined_call_operand.hbm [shape: bf16[128,128], index: 9, kind: input, shape index: {}]
  %s10 = inlined_call_operand.vmem [shape: f32[1,128], index: 10, kind: input, shape index: {}]
  %s11 = inlined_call_operand.hbm [shape: f32[16,128], index: 11, kind: output, shape index: {}]
  %s12 = sld [smem:[#allocation0]]
  $region78: #{tpu_custom_call.1} parent=0
    _
  %s14 = ssub.s32 1, %s12
  %s15 = scalar_select 0, %s14, %s12
  $region1: #{tpu_custom_call.1} parent=0
    #allocation2 [shape = 'u8[28672]{0}', space=vmem, size = 0x7000, scoped, tag = 'input window, operand 0, single buffered']
    #allocation3 [shape = 's32[1]{0}', space=sflag, size = 0x4, scoped, tag = 'scoped memory for tpu_custom_call.1']
    #allocation4 [shape = 's32[1]{0}', space=sflag, size = 0x4, scoped, tag = 'scoped memory for tpu_custom_call.1']
    #allocation5 [shape = 'u8[917504]{0}', space=vmem, size = 0xe0000, scoped, tag = 'input window, operand 1, single buffered']
    #allocation6 [shape = 's32[1]{0}', space=sflag, size = 0x4, scoped, tag = 'scoped memory for tpu_custom_call.1']
    #allocation7 [shape = 'u8[131072]{0}', space=vmem, size = 0x20000, scoped, tag = 'input window, operand 3, single buffered']
    #allocation8 [shape = 'u8[32768]{0}', space=vmem, size = 0x8000, scoped, tag = 'input window, operand 5, single buffered']
    #allocation9 [shape = 's32[1]{0}', space=sflag, size = 0x4, scoped, tag = 'scoped memory for tpu_custom_call.1']
    #allocation10 [shape = 'u8[32768]{0}', space=vmem, size = 0x8000, scoped, tag = 'input window, operand 7, single buffered']
    #allocation11 [shape = 'u8[32768]{0}', space=vmem, size = 0x8000, scoped, tag = 'input window, operand 9, single buffered']
    #allocation12 [shape = 's32[1]{0}', space=sflag, size = 0x4, scoped, tag = 'scoped memory for tpu_custom_call.1']
    #allocation13 [shape = 'u8[8192]{0}', space=vmem, size = 0x2000, scoped, tag = 'output window, operand 0, single buffered']
    %16 = vsyncpa [#allocation3], 0
    %17 = vsyncpa [#allocation6], 0
    %18 = vsyncpa [#allocation9], 0
    %19 = vsyncpa [#allocation12], 0
    %20 = vsyncpa [#allocation4], 0
    // Predicated region
    $region2: #{tpu_custom_call.1} parent=1 // pred_check
      _
    $region3: #{tpu_custom_call.1} parent=1 // pred_check_branch
      %22 = sbr.rel (0) target = $region5
    $region4: #{tpu_custom_call.1} parent=1 // pred_region
      %s24 = ssub.s32 896, 896
      %25 = vsyncadd [#allocation3], %s24
      %s26 = sshll.u32 [#allocation2], 4
      %s27 = int_to_ptr.vmem [resolvable:$true] %s26
      %32 = dma.hbm_to_vmem [thread:$0]  %s0, 896, %s27, [#allocation3], 448, 448, 28
    $region5: #{tpu_custom_call.1} parent=1 // pred_fallthru
      _
    // Predicated region
    $region6: #{tpu_custom_call.1} parent=1 // pred_check
      _
    $region7: #{tpu_custom_call.1} parent=1 // pred_check_branch
      %34 = sbr.rel (0) target = $region9
    $region8: #{tpu_custom_call.1} parent=1 // pred_region
      %s36 = ssub.s32 28672, 28672
      %37 = vsyncadd [#allocation6], %s36
      %s38 = sshll.u32 [#allocation5], 4
      %s39 = int_to_ptr.vmem [resolvable:$true] %s38
      %44 = dma.hbm_to_vmem [thread:$0]  %s1, 28672, %s39, [#allocation6], 256, 256, 16
    $region9: #{tpu_custom_call.1} parent=1 // pred_fallthru
      _
    // Predicated region
    $region10: #{tpu_custom_call.1} parent=1 // pred_check
      _
    $region11: #{tpu_custom_call.1} parent=1 // pred_check_branch
      %46 = sbr.rel (0) target = $region13
    $region12: #{tpu_custom_call.1} parent=1 // pred_region
      _
    $region13: #{tpu_custom_call.1} parent=1 // pred_fallthru
      _
    // Predicated region
    $region14: #{tpu_custom_call.1} parent=1 // pred_check
      _
    $region15: #{tpu_custom_call.1} parent=1 // pred_check_branch
      %48 = sbr.rel (0) target = $region17
    $region16: #{tpu_custom_call.1} parent=1 // pred_region
      %s50 = ssub.s32 4096, 4096
      %51 = vsyncadd [#allocation6], %s50
      %s52 = sshll.u32 [#allocation7], 4
      %s53 = int_to_ptr.vmem [resolvable:$true] %s52
      %58 = dma.hbm_to_vmem [thread:$0]  %s3, 4096, %s53, [#allocation6], 64, 64, 4
    $region17: #{tpu_custom_call.1} parent=1 // pred_fallthru
      _
    // Predicated region
    $region18: #{tpu_custom_call.1} parent=1 // pred_check
      _
    $region19: #{tpu_custom_call.1} parent=1 // pred_check_branch
      %60 = sbr.rel (0) target = $region21
    $region20: #{tpu_custom_call.1} parent=1 // pred_region
      _
    $region21: #{tpu_custom_call.1} parent=1 // pred_fallthru
      _
    // Predicated region
    $region22: #{tpu_custom_call.1} parent=1 // pred_check
      _
    $region23: #{tpu_custom_call.1} parent=1 // pred_check_branch
      %62 = sbr.rel (0) target = $region25
    $region24: #{tpu_custom_call.1} parent=1 // pred_region
      %s64 = ssub.s32 1024, 1024
      %65 = vsyncadd [#allocation9], %s64
      %s66 = sshll.u32 [#allocation8], 4
      %s67 = int_to_ptr.vmem [resolvable:$true] %s66
      %72 = dma.hbm_to_vmem [thread:$0]  %s5, 1024, %s67, [#allocation9], 64, 64, 4
    $region25: #{tpu_custom_call.1} parent=1 // pred_fallthru
      _
    // Predicated region
    $region26: #{tpu_custom_call.1} parent=1 // pred_check
      _
    $region27: #{tpu_custom_call.1} parent=1 // pred_check_branch
      %74 = sbr.rel (0) target = $region29
    $region28: #{tpu_custom_call.1} parent=1 // pred_region
      _
    $region29: #{tpu_custom_call.1} parent=1 // pred_fallthru
      _
    // Predicated region
    $region30: #{tpu_custom_call.1} parent=1 // pred_check
      _
    $region31: #{tpu_custom_call.1} parent=1 // pred_check_branch
      %76 = sbr.rel (0) target = $region33
    $region32: #{tpu_custom_call.1} parent=1 // pred_region
      %s78 = ssub.s32 1024, 1024
      %79 = vsyncadd [#allocation9], %s78
      %s80 = sshll.u32 [#allocation10], 4
      %s81 = int_to_ptr.vmem [resolvable:$true] %s80
      %86 = dma.hbm_to_vmem [thread:$0]  %s7, 1024, %s81, [#allocation9], 64, 64, 4
    $region33: #{tpu_custom_call.1} parent=1 // pred_fallthru
      _
    // Predicated region
    $region34: #{tpu_custom_call.1} parent=1 // pred_check
      _
    $region35: #{tpu_custom_call.1} parent=1 // pred_check_branch
      %88 = sbr.rel (0) target = $region37
    $region36: #{tpu_custom_call.1} parent=1 // pred_region
      _
    $region37: #{tpu_custom_call.1} parent=1 // pred_fallthru
      _
    // Predicated region
    $region38: #{tpu_custom_call.1} parent=1 // pred_check
      _
    $region39: #{tpu_custom_call.1} parent=1 // pred_check_branch
      %90 = sbr.rel (0) target = $region41
    $region40: #{tpu_custom_call.1} parent=1 // pred_region
      %s92 = ssub.s32 1024, 1024
      %93 = vsyncadd [#allocation12], %s92
      %s94 = sshll.u32 [#allocation11], 4
      %s95 = int_to_ptr.vmem [resolvable:$true] %s94
      %100 = dma.hbm_to_vmem [thread:$0]  %s9, 1024, %s95, [#allocation12], 64, 64, 4
    $region41: #{tpu_custom_call.1} parent=1 // pred_fallthru
      _
    // Predicated region
    $region42: #{tpu_custom_call.1} parent=1 // pred_check
      _
    $region43: #{tpu_custom_call.1} parent=1 // pred_check_branch
      %102 = sbr.rel (0) target = $region45
    $region44: #{tpu_custom_call.1} parent=1 // pred_region
      _
    $region45: #{tpu_custom_call.1} parent=1 // pred_fallthru
      _
    // Predicated region
    $region46: #{tpu_custom_call.1} parent=1 // pred_check
      _
    $region47: #{tpu_custom_call.1} parent=1 // pred_check_branch
      %104 = sbr.rel (0) target = $region49
    $region48: #{tpu_custom_call.1} parent=1 // pred_region
      %105 = dma.done [#allocation3], 896
    $region49: #{tpu_custom_call.1} parent=1 // pred_fallthru
      _
    // Predicated region
    $region50: #{tpu_custom_call.1} parent=1 // pred_check
      _
    $region51: #{tpu_custom_call.1} parent=1 // pred_check_branch
      %107 = sbr.rel (0) target = $region53
    $region52: #{tpu_custom_call.1} parent=1 // pred_region
      %108 = dma.done [#allocation6], 28672
    $region53: #{tpu_custom_call.1} parent=1 // pred_fallthru
      _
    // Predicated region
    $region54: #{tpu_custom_call.1} parent=1 // pred_check
      _
    $region55: #{tpu_custom_call.1} parent=1 // pred_check_branch
      %110 = sbr.rel (0) target = $region57
    $region56: #{tpu_custom_call.1} parent=1 // pred_region
      %111 = dma.done [#allocation6], 4096
    $region57: #{tpu_custom_call.1} parent=1 // pred_fallthru
      _
    // Predicated region
    $region58: #{tpu_custom_call.1} parent=1 // pred_check
      _
    $region59: #{tpu_custom_call.1} parent=1 // pred_check_branch
      %113 = sbr.rel (0) target = $region61
    $region60: #{tpu_custom_call.1} parent=1 // pred_region
      %114 = dma.done [#allocation9], 1024
    $region61: #{tpu_custom_call.1} parent=1 // pred_fallthru
      _
    // Predicated region
    $region62: #{tpu_custom_call.1} parent=1 // pred_check
      _
    $region63: #{tpu_custom_call.1} parent=1 // pred_check_branch
      %116 = sbr.rel (0) target = $region65
    $region64: #{tpu_custom_call.1} parent=1 // pred_region
      %117 = dma.done [#allocation9], 1024
    $region65: #{tpu_custom_call.1} parent=1 // pred_fallthru
      _
    // Predicated region
    $region66: #{tpu_custom_call.1} parent=1 // pred_check
      _
    $region67: #{tpu_custom_call.1} parent=1 // pred_check_branch
      %119 = sbr.rel (0) target = $region69
    $region68: #{tpu_custom_call.1} parent=1 // pred_region
      %120 = dma.done [#allocation12], 1024
    $region69: #{tpu_custom_call.1} parent=1 // pred_fallthru
      _
    %v122 = vld [vmem:[#allocation2] sm:$0xff]
    %v123 = vld [vmem:[#allocation2 + $0x8] sm:$0xff]
    %v124 = vld [vmem:[#allocation2 + $0x10] sm:$0xff]
    %v125 = vld [vmem:[#allocation2 + $0x18] sm:$0xf]
    %v126 = vld [vmem:[#allocation2 + $0x1c] sm:$0xff]
    %v127 = vld [vmem:[#allocation2 + $0x24] sm:$0xff]
    %v128 = vld [vmem:[#allocation2 + $0x2c] sm:$0xff]
    %v129 = vld [vmem:[#allocation2 + $0x34] sm:$0xf]
    %v130 = vld [vmem:[#allocation5] sm:$0xff]
    %v131 = vld [vmem:[#allocation5 + $0x8] sm:$0xff]
    %v132 = vld [vmem:[#allocation5 + $0x10] sm:$0xff]
    %v133 = vld [vmem:[#allocation5 + $0x18] sm:$0xff]
    %v134 = vld [vmem:[#allocation5 + $0x20] sm:$0xff]
    %v135 = vld [vmem:[#allocation5 + $0x28] sm:$0xff]
    %v136 = vld [vmem:[#allocation5 + $0x30] sm:$0xff]
    %v137 = vld [vmem:[#allocation5 + $0x38] sm:$0xff]
    %v138 = vld [vmem:[#allocation5 + $0x40] sm:$0xff]
    %v139 = vld [vmem:[#allocation5 + $0x48] sm:$0xff]
    %v140 = vld [vmem:[#allocation5 + $0x50] sm:$0xff]
    %v141 = vld [vmem:[#allocation5 + $0x58] sm:$0xff]
    %v142 = vld [vmem:[#allocation5 + $0x60] sm:$0xff]
    %v143 = vld [vmem:[#allocation5 + $0x68] sm:$0xff]
    %v144 = vld [vmem:[#allocation5 + $0x70] sm:$0xff]
    %v145 = vld [vmem:[#allocation5 + $0x78] sm:$0xff]
    %v146 = vld [vmem:[#allocation5 + $0x80] sm:$0xff]
    %v147 = vld [vmem:[#allocation5 + $0x88] sm:$0xff]
    %v148 = vld [vmem:[#allocation5 + $0x90] sm:$0xff]
    %v149 = vld [vmem:[#allocation5 + $0x98] sm:$0xff]
    %v150 = vld [vmem:[#allocation5 + $0xa0] sm:$0xff]
    %v151 = vld [vmem:[#allocation5 + $0xa8] sm:$0xff]
    %v152 = vld [vmem:[#allocation5 + $0xb0] sm:$0xff]
    %v153 = vld [vmem:[#allocation5 + $0xb8] sm:$0xff]
    %v154 = vld [vmem:[#allocation5 + $0xc0] sm:$0xff]
    %v155 = vld [vmem:[#allocation5 + $0xc8] sm:$0xff]
    %v156 = vld [vmem:[#allocation5 + $0xd0] sm:$0xff]
    %v157 = vld [vmem:[#allocation5 + $0xd8] sm:$0xff]
    %v158 = vld [vmem:[#allocation5 + $0xe0] sm:$0xff]
    %v159 = vld [vmem:[#allocation5 + $0xe8] sm:$0xff]
    %v160 = vld [vmem:[#allocation5 + $0xf0] sm:$0xff]
    %v161 = vld [vmem:[#allocation5 + $0xf8] sm:$0xff]
    %v162 = vld [vmem:[#allocation5 + $0x100] sm:$0xff]
    %v163 = vld [vmem:[#allocation5 + $0x108] sm:$0xff]
    %v164 = vld [vmem:[#allocation5 + $0x110] sm:$0xff]
    %v165 = vld [vmem:[#allocation5 + $0x118] sm:$0xff]
    %v166 = vld [vmem:[#allocation5 + $0x120] sm:$0xff]
    %v167 = vld [vmem:[#allocation5 + $0x128] sm:$0xff]
    %v168 = vld [vmem:[#allocation5 + $0x130] sm:$0xff]
    %v169 = vld [vmem:[#allocation5 + $0x138] sm:$0xff]
    %v170 = vld [vmem:[#allocation5 + $0x140] sm:$0xff]
    %v171 = vld [vmem:[#allocation5 + $0x148] sm:$0xff]
    %v172 = vld [vmem:[#allocation5 + $0x150] sm:$0xff]
    %v173 = vld [vmem:[#allocation5 + $0x158] sm:$0xff]
    %v174 = vld [vmem:[#allocation5 + $0x160] sm:$0xff]
    %v175 = vld [vmem:[#allocation5 + $0x168] sm:$0xff]
    %v176 = vld [vmem:[#allocation5 + $0x170] sm:$0xff]
    %v177 = vld [vmem:[#allocation5 + $0x178] sm:$0xff]
    %v178 = vld [vmem:[#allocation5 + $0x180] sm:$0xff]
    %v179 = vld [vmem:[#allocation5 + $0x188] sm:$0xff]
    %v180 = vld [vmem:[#allocation5 + $0x190] sm:$0xff]
    %v181 = vld [vmem:[#allocation5 + $0x198] sm:$0xff]
    %v182 = vld [vmem:[#allocation5 + $0x1a0] sm:$0xff]
    %v183 = vld [vmem:[#allocation5 + $0x1a8] sm:$0xff]
    %v184 = vld [vmem:[#allocation5 + $0x1b0] sm:$0xff]
    %v185 = vld [vmem:[#allocation5 + $0x1b8] sm:$0xff]
    %v186 = vld [vmem:[#allocation5 + $0x1c0] sm:$0xff]
    %v187 = vld [vmem:[#allocation5 + $0x1c8] sm:$0xff]
    %v188 = vld [vmem:[#allocation5 + $0x1d0] sm:$0xff]
    %v189 = vld [vmem:[#allocation5 + $0x1d8] sm:$0xff]
    %v190 = vld [vmem:[#allocation5 + $0x1e0] sm:$0xff]
    %v191 = vld [vmem:[#allocation5 + $0x1e8] sm:$0xff]
    %v192 = vld [vmem:[#allocation5 + $0x1f0] sm:$0xff]
    %v193 = vld [vmem:[#allocation5 + $0x1f8] sm:$0xff]
    %v194 = vld [vmem:[#allocation5 + $0x200] sm:$0xff]
    %v195 = vld [vmem:[#allocation5 + $0x208] sm:$0xff]
    %v196 = vld [vmem:[#allocation5 + $0x210] sm:$0xff]
    %v197 = vld [vmem:[#allocation5 + $0x218] sm:$0xff]
    %v198 = vld [vmem:[#allocation5 + $0x220] sm:$0xff]
    %v199 = vld [vmem:[#allocation5 + $0x228] sm:$0xff]
    %v200 = vld [vmem:[#allocation5 + $0x230] sm:$0xff]
    %v201 = vld [vmem:[#allocation5 + $0x238] sm:$0xff]
    %v202 = vld [vmem:[#allocation5 + $0x240] sm:$0xff]
    %v203 = vld [vmem:[#allocation5 + $0x248] sm:$0xff]
    %v204 = vld [vmem:[#allocation5 + $0x250] sm:$0xff]
    %v205 = vld [vmem:[#allocation5 + $0x258] sm:$0xff]
    %v206 = vld [vmem:[#allocation5 + $0x260] sm:$0xff]
    %v207 = vld [vmem:[#allocation5 + $0x268] sm:$0xff]
    %v208 = vld [vmem:[#allocation5 + $0x270] sm:$0xff]
    %v209 = vld [vmem:[#allocation5 + $0x278] sm:$0xff]
    %v210 = vld [vmem:[#allocation5 + $0x280] sm:$0xff]
    %v211 = vld [vmem:[#allocation5 + $0x288] sm:$0xff]
    %v212 = vld [vmem:[#allocation5 + $0x290] sm:$0xff]
    %v213 = vld [vmem:[#allocation5 + $0x298] sm:$0xff]
    %v214 = vld [vmem:[#allocation5 + $0x2a0] sm:$0xff]
    %v215 = vld [vmem:[#allocation5 + $0x2a8] sm:$0xff]
    %v216 = vld [vmem:[#allocation5 + $0x2b0] sm:$0xff]
    %v217 = vld [vmem:[#allocation5 + $0x2b8] sm:$0xff]
    %v218 = vld [vmem:[#allocation5 + $0x2c0] sm:$0xff]
    %v219 = vld [vmem:[#allocation5 + $0x2c8] sm:$0xff]
    %v220 = vld [vmem:[#allocation5 + $0x2d0] sm:$0xff]
    %v221 = vld [vmem:[#allocation5 + $0x2d8] sm:$0xff]
    %v222 = vld [vmem:[#allocation5 + $0x2e0] sm:$0xff]
    %v223 = vld [vmem:[#allocation5 + $0x2e8] sm:$0xff]
    %v224 = vld [vmem:[#allocation5 + $0x2f0] sm:$0xff]
    %v225 = vld [vmem:[#allocation5 + $0x2f8] sm:$0xff]
    %v226 = vld [vmem:[#allocation5 + $0x300] sm:$0xff]
    %v227 = vld [vmem:[#allocation5 + $0x308] sm:$0xff]
    %v228 = vld [vmem:[#allocation5 + $0x310] sm:$0xff]
    %v229 = vld [vmem:[#allocation5 + $0x318] sm:$0xff]
    %v230 = vld [vmem:[#allocation5 + $0x320] sm:$0xff]
    %v231 = vld [vmem:[#allocation5 + $0x328] sm:$0xff]
    %v232 = vld [vmem:[#allocation5 + $0x330] sm:$0xff]
    %v233 = vld [vmem:[#allocation5 + $0x338] sm:$0xff]
    %v234 = vld [vmem:[#allocation5 + $0x340] sm:$0xff]
    %v235 = vld [vmem:[#allocation5 + $0x348] sm:$0xff]
    %v236 = vld [vmem:[#allocation5 + $0x350] sm:$0xff]
    %v237 = vld [vmem:[#allocation5 + $0x358] sm:$0xff]
    %v238 = vld [vmem:[#allocation5 + $0x360] sm:$0xff]
    %v239 = vld [vmem:[#allocation5 + $0x368] sm:$0xff]
    %v240 = vld [vmem:[#allocation5 + $0x370] sm:$0xff]
    %v241 = vld [vmem:[#allocation5 + $0x378] sm:$0xff]
    %v242 = vld [vmem:[#allocation5 + $0x380] sm:$0xff]
    %v243 = vld [vmem:[#allocation5 + $0x388] sm:$0xff]
    %v244 = vld [vmem:[#allocation5 + $0x390] sm:$0xff]
    %v245 = vld [vmem:[#allocation5 + $0x398] sm:$0xff]
    %v246 = vld [vmem:[#allocation5 + $0x3a0] sm:$0xff]
    %v247 = vld [vmem:[#allocation5 + $0x3a8] sm:$0xff]
    %v248 = vld [vmem:[#allocation5 + $0x3b0] sm:$0xff]
    %v249 = vld [vmem:[#allocation5 + $0x3b8] sm:$0xff]
    %v250 = vld [vmem:[#allocation5 + $0x3c0] sm:$0xff]
    %v251 = vld [vmem:[#allocation5 + $0x3c8] sm:$0xff]
    %v252 = vld [vmem:[#allocation5 + $0x3d0] sm:$0xff]
    %v253 = vld [vmem:[#allocation5 + $0x3d8] sm:$0xff]
    %v254 = vld [vmem:[#allocation5 + $0x3e0] sm:$0xff]
    %v255 = vld [vmem:[#allocation5 + $0x3e8] sm:$0xff]
    %v256 = vld [vmem:[#allocation5 + $0x3f0] sm:$0xff]
    %v257 = vld [vmem:[#allocation5 + $0x3f8] sm:$0xff]
    %v258 = vld [vmem:[#allocation5 + $0x400] sm:$0xff]
    %v259 = vld [vmem:[#allocation5 + $0x408] sm:$0xff]
    %v260 = vld [vmem:[#allocation5 + $0x410] sm:$0xff]
    %v261 = vld [vmem:[#allocation5 + $0x418] sm:$0xff]
    %v262 = vld [vmem:[#allocation5 + $0x420] sm:$0xff]
    %v263 = vld [vmem:[#allocation5 + $0x428] sm:$0xff]
    %v264 = vld [vmem:[#allocation5 + $0x430] sm:$0xff]
    %v265 = vld [vmem:[#allocation5 + $0x438] sm:$0xff]
    %v266 = vld [vmem:[#allocation5 + $0x440] sm:$0xff]
    %v267 = vld [vmem:[#allocation5 + $0x448] sm:$0xff]
    %v268 = vld [vmem:[#allocation5 + $0x450] sm:$0xff]
    %v269 = vld [vmem:[#allocation5 + $0x458] sm:$0xff]
    %v270 = vld [vmem:[#allocation5 + $0x460] sm:$0xff]
    %v271 = vld [vmem:[#allocation5 + $0x468] sm:$0xff]
    %v272 = vld [vmem:[#allocation5 + $0x470] sm:$0xff]
    %v273 = vld [vmem:[#allocation5 + $0x478] sm:$0xff]
    %v274 = vld [vmem:[#allocation5 + $0x480] sm:$0xff]
    %v275 = vld [vmem:[#allocation5 + $0x488] sm:$0xff]
    %v276 = vld [vmem:[#allocation5 + $0x490] sm:$0xff]
    %v277 = vld [vmem:[#allocation5 + $0x498] sm:$0xff]
    %v278 = vld [vmem:[#allocation5 + $0x4a0] sm:$0xff]
    %v279 = vld [vmem:[#allocation5 + $0x4a8] sm:$0xff]
    %v280 = vld [vmem:[#allocation5 + $0x4b0] sm:$0xff]
    %v281 = vld [vmem:[#allocation5 + $0x4b8] sm:$0xff]
    %v282 = vld [vmem:[#allocation5 + $0x4c0] sm:$0xff]
    %v283 = vld [vmem:[#allocation5 + $0x4c8] sm:$0xff]
    %v284 = vld [vmem:[#allocation5 + $0x4d0] sm:$0xff]
    %v285 = vld [vmem:[#allocation5 + $0x4d8] sm:$0xff]
    %v286 = vld [vmem:[#allocation5 + $0x4e0] sm:$0xff]
    %v287 = vld [vmem:[#allocation5 + $0x4e8] sm:$0xff]
    %v288 = vld [vmem:[#allocation5 + $0x4f0] sm:$0xff]
    %v289 = vld [vmem:[#allocation5 + $0x4f8] sm:$0xff]
    %v290 = vld [vmem:[#allocation5 + $0x500] sm:$0xff]
    %v291 = vld [vmem:[#allocation5 + $0x508] sm:$0xff]
    %v292 = vld [vmem:[#allocation5 + $0x510] sm:$0xff]
    %v293 = vld [vmem:[#allocation5 + $0x518] sm:$0xff]
    %v294 = vld [vmem:[#allocation5 + $0x520] sm:$0xff]
    %v295 = vld [vmem:[#allocation5 + $0x528] sm:$0xff]
    %v296 = vld [vmem:[#allocation5 + $0x530] sm:$0xff]
    %v297 = vld [vmem:[#allocation5 + $0x538] sm:$0xff]
    %v298 = vld [vmem:[#allocation5 + $0x540] sm:$0xff]
    %v299 = vld [vmem:[#allocation5 + $0x548] sm:$0xff]
    %v300 = vld [vmem:[#allocation5 + $0x550] sm:$0xff]
    %v301 = vld [vmem:[#allocation5 + $0x558] sm:$0xff]
    %v302 = vld [vmem:[#allocation5 + $0x560] sm:$0xff]
    %v303 = vld [vmem:[#allocation5 + $0x568] sm:$0xff]
    %v304 = vld [vmem:[#allocation5 + $0x570] sm:$0xff]
    %v305 = vld [vmem:[#allocation5 + $0x578] sm:$0xff]
    %v306 = vld [vmem:[#allocation5 + $0x580] sm:$0xff]
    %v307 = vld [vmem:[#allocation5 + $0x588] sm:$0xff]
    %v308 = vld [vmem:[#allocation5 + $0x590] sm:$0xff]
    %v309 = vld [vmem:[#allocation5 + $0x598] sm:$0xff]
    %v310 = vld [vmem:[#allocation5 + $0x5a0] sm:$0xff]
    %v311 = vld [vmem:[#allocation5 + $0x5a8] sm:$0xff]
    %v312 = vld [vmem:[#allocation5 + $0x5b0] sm:$0xff]
    %v313 = vld [vmem:[#allocation5 + $0x5b8] sm:$0xff]
    %v314 = vld [vmem:[#allocation5 + $0x5c0] sm:$0xff]
    %v315 = vld [vmem:[#allocation5 + $0x5c8] sm:$0xff]
    %v316 = vld [vmem:[#allocation5 + $0x5d0] sm:$0xff]
    %v317 = vld [vmem:[#allocation5 + $0x5d8] sm:$0xff]
    %v318 = vld [vmem:[#allocation5 + $0x5e0] sm:$0xff]
    %v319 = vld [vmem:[#allocation5 + $0x5e8] sm:$0xff]
    %v320 = vld [vmem:[#allocation5 + $0x5f0] sm:$0xff]
    %v321 = vld [vmem:[#allocation5 + $0x5f8] sm:$0xff]
    %v322 = vld [vmem:[#allocation5 + $0x600] sm:$0xff]
    %v323 = vld [vmem:[#allocation5 + $0x608] sm:$0xff]
    %v324 = vld [vmem:[#allocation5 + $0x610] sm:$0xff]
    %v325 = vld [vmem:[#allocation5 + $0x618] sm:$0xff]
    %v326 = vld [vmem:[#allocation5 + $0x620] sm:$0xff]
    %v327 = vld [vmem:[#allocation5 + $0x628] sm:$0xff]
    %v328 = vld [vmem:[#allocation5 + $0x630] sm:$0xff]
    %v329 = vld [vmem:[#allocation5 + $0x638] sm:$0xff]
    %v330 = vld [vmem:[#allocation5 + $0x640] sm:$0xff]
    %v331 = vld [vmem:[#allocation5 + $0x648] sm:$0xff]
    %v332 = vld [vmem:[#allocation5 + $0x650] sm:$0xff]
    %v333 = vld [vmem:[#allocation5 + $0x658] sm:$0xff]
    %v334 = vld [vmem:[#allocation5 + $0x660] sm:$0xff]
    %v335 = vld [vmem:[#allocation5 + $0x668] sm:$0xff]
    %v336 = vld [vmem:[#allocation5 + $0x670] sm:$0xff]
    %v337 = vld [vmem:[#allocation5 + $0x678] sm:$0xff]
    %v338 = vld [vmem:[#allocation5 + $0x680] sm:$0xff]
    %v339 = vld [vmem:[#allocation5 + $0x688] sm:$0xff]
    %v340 = vld [vmem:[#allocation5 + $0x690] sm:$0xff]
    %v341 = vld [vmem:[#allocation5 + $0x698] sm:$0xff]
    %v342 = vld [vmem:[#allocation5 + $0x6a0] sm:$0xff]
    %v343 = vld [vmem:[#allocation5 + $0x6a8] sm:$0xff]
    %v344 = vld [vmem:[#allocation5 + $0x6b0] sm:$0xff]
    %v345 = vld [vmem:[#allocation5 + $0x6b8] sm:$0xff]
    %v346 = vld [vmem:[#allocation5 + $0x6c0] sm:$0xff]
    %v347 = vld [vmem:[#allocation5 + $0x6c8] sm:$0xff]
    %v348 = vld [vmem:[#allocation5 + $0x6d0] sm:$0xff]
    %v349 = vld [vmem:[#allocation5 + $0x6d8] sm:$0xff]
    %v350 = vld [vmem:[#allocation5 + $0x6e0] sm:$0xff]
    %v351 = vld [vmem:[#allocation5 + $0x6e8] sm:$0xff]
    %v352 = vld [vmem:[#allocation5 + $0x6f0] sm:$0xff]
    %v353 = vld [vmem:[#allocation5 + $0x6f8] sm:$0xff]
    %v354 = vld [vmem:[%s2] sm:$0xf]
    %v356 = vlaneseq
    %v357 = vshrl.u32 %v356, 7
    %v358 = vsub.s32 0, %v357
    %v359 = vrot.slane %v354, %v358
    %v360 = vlaneseq
    %v361 = vshrl.u32 %v360, 7
    %v362 = vsub.s32 1, %v361
    %v363 = vrot.slane %v354, %v362
    %v364 = vlaneseq
    %v365 = vshrl.u32 %v364, 7
    %v366 = vsub.s32 2, %v365
    %v367 = vrot.slane %v354, %v366
    %v368 = vlaneseq
    %v369 = vshrl.u32 %v368, 7
    %v370 = vsub.s32 3, %v369
    %v371 = vrot.slane %v354, %v370
    %v384 = vunpack.c.l.b16 %v122
    %v385 = vunpack.c.h.b16 %v122
    %v386 = vunpack.c.l.b16 %v123
    %v387 = vunpack.c.h.b16 %v123
    %v388 = vunpack.c.l.b16 %v124
    %v389 = vunpack.c.h.b16 %v124
    %v390 = vunpack.c.l.b16 %v125
    %v391 = vunpack.c.l.b16 %v126
    %v392 = vunpack.c.h.b16 %v126
    %v393 = vunpack.c.l.b16 %v127
    %v394 = vunpack.c.h.b16 %v127
    %v395 = vunpack.c.l.b16 %v128
    %v396 = vunpack.c.h.b16 %v128
    %v397 = vunpack.c.l.b16 %v129
    %v398 = vpack.c.b16 %v391, %v384
    %v399 = vpack.c.b16 %v392, %v385
    %v400 = vpack.c.b16 %v393, %v386
    %v401 = vpack.c.b16 %v394, %v387
    %v402 = vpack.c.b16 %v395, %v388
    %v403 = vpack.c.b16 %v396, %v389
    %v404 = vpack.c.b16 %v397, %v390
    %v636 = vunpack.c.l.b16 %v130
    %v637 = vunpack.c.h.b16 %v130
    %v638 = vunpack.c.l.b16 %v131
    %v639 = vunpack.c.h.b16 %v131
    %v640 = vunpack.c.l.b16 %v132
    %v641 = vunpack.c.h.b16 %v132
    %v642 = vunpack.c.l.b16 %v133
    %v643 = vunpack.c.h.b16 %v133
    %v644 = vunpack.c.l.b16 %v134
    %v645 = vunpack.c.h.b16 %v134
    %v646 = vunpack.c.l.b16 %v135
    %v647 = vunpack.c.h.b16 %v135
    %v648 = vunpack.c.l.b16 %v136
    %v649 = vunpack.c.h.b16 %v136
    %v650 = vunpack.c.l.b16 %v137
    %v651 = vunpack.c.h.b16 %v137
    %v652 = vunpack.c.l.b16 %v138
    %v653 = vunpack.c.h.b16 %v138
    %v654 = vunpack.c.l.b16 %v139
    %v655 = vunpack.c.h.b16 %v139
    %v656 = vunpack.c.l.b16 %v140
    %v657 = vunpack.c.h.b16 %v140
    %v658 = vunpack.c.l.b16 %v141
    %v659 = vunpack.c.h.b16 %v141
    %v660 = vunpack.c.l.b16 %v142
    %v661 = vunpack.c.h.b16 %v142
    %v662 = vunpack.c.l.b16 %v143
    %v663 = vunpack.c.h.b16 %v143
    %v664 = vunpack.c.l.b16 %v144
    %v665 = vunpack.c.h.b16 %v144
    %v666 = vunpack.c.l.b16 %v145
    %v667 = vunpack.c.h.b16 %v145
    %v668 = vunpack.c.l.b16 %v146
    %v669 = vunpack.c.h.b16 %v146
    %v670 = vunpack.c.l.b16 %v147
    %v671 = vunpack.c.h.b16 %v147
    %v672 = vunpack.c.l.b16 %v148
    %v673 = vunpack.c.h.b16 %v148
    %v674 = vunpack.c.l.b16 %v149
    %v675 = vunpack.c.h.b16 %v149
    %v676 = vunpack.c.l.b16 %v150
    %v677 = vunpack.c.h.b16 %v150
    %v678 = vunpack.c.l.b16 %v151
    %v679 = vunpack.c.h.b16 %v151
    %v680 = vunpack.c.l.b16 %v152
    %v681 = vunpack.c.h.b16 %v152
    %v682 = vunpack.c.l.b16 %v153
    %v683 = vunpack.c.h.b16 %v153
    %v684 = vunpack.c.l.b16 %v154
    %v685 = vunpack.c.h.b16 %v154
    %v686 = vunpack.c.l.b16 %v155
    %v687 = vunpack.c.h.b16 %v155
    %v688 = vunpack.c.l.b16 %v156
    %v689 = vunpack.c.h.b16 %v156
    %v690 = vunpack.c.l.b16 %v157
    %v691 = vunpack.c.h.b16 %v157
    %v692 = vunpack.c.l.b16 %v158
    %v693 = vunpack.c.h.b16 %v158
    %v694 = vunpack.c.l.b16 %v159
    %v695 = vunpack.c.h.b16 %v159
    %v696 = vunpack.c.l.b16 %v160
    %v697 = vunpack.c.h.b16 %v160
    %v698 = vunpack.c.l.b16 %v161
    %v699 = vunpack.c.h.b16 %v161
    %v700 = vunpack.c.l.b16 %v162
    %v701 = vunpack.c.h.b16 %v162
    %v702 = vunpack.c.l.b16 %v163
    %v703 = vunpack.c.h.b16 %v163
    %v704 = vunpack.c.l.b16 %v164
    %v705 = vunpack.c.h.b16 %v164
    %v706 = vunpack.c.l.b16 %v165
    %v707 = vunpack.c.h.b16 %v165
    %v708 = vunpack.c.l.b16 %v166
    %v709 = vunpack.c.h.b16 %v166
    %v710 = vunpack.c.l.b16 %v167
    %v711 = vunpack.c.h.b16 %v167
    %v712 = vunpack.c.l.b16 %v168
    %v713 = vunpack.c.h.b16 %v168
    %v714 = vunpack.c.l.b16 %v169
    %v715 = vunpack.c.h.b16 %v169
    %v716 = vunpack.c.l.b16 %v170
    %v717 = vunpack.c.h.b16 %v170
    %v718 = vunpack.c.l.b16 %v171
    %v719 = vunpack.c.h.b16 %v171
    %v720 = vunpack.c.l.b16 %v172
    %v721 = vunpack.c.h.b16 %v172
    %v722 = vunpack.c.l.b16 %v173
    %v723 = vunpack.c.h.b16 %v173
    %v724 = vunpack.c.l.b16 %v174
    %v725 = vunpack.c.h.b16 %v174
    %v726 = vunpack.c.l.b16 %v175
    %v727 = vunpack.c.h.b16 %v175
    %v728 = vunpack.c.l.b16 %v176
    %v729 = vunpack.c.h.b16 %v176
    %v730 = vunpack.c.l.b16 %v177
    %v731 = vunpack.c.h.b16 %v177
    %v732 = vunpack.c.l.b16 %v178
    %v733 = vunpack.c.h.b16 %v178
    %v734 = vunpack.c.l.b16 %v179
    %v735 = vunpack.c.h.b16 %v179
    %v736 = vunpack.c.l.b16 %v180
    %v737 = vunpack.c.h.b16 %v180
    %v738 = vunpack.c.l.b16 %v181
    %v739 = vunpack.c.h.b16 %v181
    %v740 = vunpack.c.l.b16 %v182
    %v741 = vunpack.c.h.b16 %v182
    %v742 = vunpack.c.l.b16 %v183
    %v743 = vunpack.c.h.b16 %v183
    %v744 = vunpack.c.l.b16 %v184
    %v745 = vunpack.c.h.b16 %v184
    %v746 = vunpack.c.l.b16 %v185
    %v747 = vunpack.c.h.b16 %v185
    %v748 = vunpack.c.l.b16 %v186
    %v749 = vunpack.c.h.b16 %v186
    %v750 = vunpack.c.l.b16 %v187
    %v751 = vunpack.c.h.b16 %v187
    %v752 = vunpack.c.l.b16 %v188
    %v753 = vunpack.c.h.b16 %v188
    %v754 = vunpack.c.l.b16 %v189
    %v755 = vunpack.c.h.b16 %v189
    %v756 = vunpack.c.l.b16 %v190
    %v757 = vunpack.c.h.b16 %v190
    %v758 = vunpack.c.l.b16 %v191
    %v759 = vunpack.c.h.b16 %v191
    %v760 = vunpack.c.l.b16 %v192
    %v761 = vunpack.c.h.b16 %v192
    %v762 = vunpack.c.l.b16 %v193
    %v763 = vunpack.c.h.b16 %v193
    %v764 = vunpack.c.l.b16 %v194
    %v765 = vunpack.c.h.b16 %v194
    %v766 = vunpack.c.l.b16 %v195
    %v767 = vunpack.c.h.b16 %v195
    %v768 = vunpack.c.l.b16 %v196
    %v769 = vunpack.c.h.b16 %v196
    %v770 = vunpack.c.l.b16 %v197
    %v771 = vunpack.c.h.b16 %v197
    %v772 = vunpack.c.l.b16 %v198
    %v773 = vunpack.c.h.b16 %v198
    %v774 = vunpack.c.l.b16 %v199
    %v775 = vunpack.c.h.b16 %v199
    %v776 = vunpack.c.l.b16 %v200
    %v777 = vunpack.c.h.b16 %v200
    %v778 = vunpack.c.l.b16 %v201
    %v779 = vunpack.c.h.b16 %v201
    %v780 = vunpack.c.l.b16 %v202
    %v781 = vunpack.c.h.b16 %v202
    %v782 = vunpack.c.l.b16 %v203
    %v783 = vunpack.c.h.b16 %v203
    %v784 = vunpack.c.l.b16 %v204
    %v785 = vunpack.c.h.b16 %v204
    %v786 = vunpack.c.l.b16 %v205
    %v787 = vunpack.c.h.b16 %v205
    %v788 = vunpack.c.l.b16 %v206
    %v789 = vunpack.c.h.b16 %v206
    %v790 = vunpack.c.l.b16 %v207
    %v791 = vunpack.c.h.b16 %v207
    %v792 = vunpack.c.l.b16 %v208
    %v793 = vunpack.c.h.b16 %v208
    %v794 = vunpack.c.l.b16 %v209
    %v795 = vunpack.c.h.b16 %v209
    %v796 = vunpack.c.l.b16 %v210
    %v797 = vunpack.c.h.b16 %v210
    %v798 = vunpack.c.l.b16 %v211
    %v799 = vunpack.c.h.b16 %v211
    %v800 = vunpack.c.l.b16 %v212
    %v801 = vunpack.c.h.b16 %v212
    %v802 = vunpack.c.l.b16 %v213
    %v803 = vunpack.c.h.b16 %v213
    %v804 = vunpack.c.l.b16 %v214
    %v805 = vunpack.c.h.b16 %v214
    %v806 = vunpack.c.l.b16 %v215
    %v807 = vunpack.c.h.b16 %v215
    %v808 = vunpack.c.l.b16 %v216
    %v809 = vunpack.c.h.b16 %v216
    %v810 = vunpack.c.l.b16 %v217
    %v811 = vunpack.c.h.b16 %v217
    %v812 = vunpack.c.l.b16 %v218
    %v813 = vunpack.c.h.b16 %v218
    %v814 = vunpack.c.l.b16 %v219
    %v815 = vunpack.c.h.b16 %v219
    %v816 = vunpack.c.l.b16 %v220
    %v817 = vunpack.c.h.b16 %v220
    %v818 = vunpack.c.l.b16 %v221
    %v819 = vunpack.c.h.b16 %v221
    %v820 = vunpack.c.l.b16 %v222
    %v821 = vunpack.c.h.b16 %v222
    %v822 = vunpack.c.l.b16 %v223
    %v823 = vunpack.c.h.b16 %v223
    %v824 = vunpack.c.l.b16 %v224
    %v825 = vunpack.c.h.b16 %v224
    %v826 = vunpack.c.l.b16 %v225
    %v827 = vunpack.c.h.b16 %v225
    %v828 = vunpack.c.l.b16 %v226
    %v829 = vunpack.c.h.b16 %v226
    %v830 = vunpack.c.l.b16 %v227
    %v831 = vunpack.c.h.b16 %v227
    %v832 = vunpack.c.l.b16 %v228
    %v833 = vunpack.c.h.b16 %v228
    %v834 = vunpack.c.l.b16 %v229
    %v835 = vunpack.c.h.b16 %v229
    %v836 = vunpack.c.l.b16 %v230
    %v837 = vunpack.c.h.b16 %v230
    %v838 = vunpack.c.l.b16 %v231
    %v839 = vunpack.c.h.b16 %v231
    %v840 = vunpack.c.l.b16 %v232
    %v841 = vunpack.c.h.b16 %v232
    %v842 = vunpack.c.l.b16 %v233
    %v843 = vunpack.c.h.b16 %v233
    %v844 = vunpack.c.l.b16 %v234
    %v845 = vunpack.c.h.b16 %v234
    %v846 = vunpack.c.l.b16 %v235
    %v847 = vunpack.c.h.b16 %v235
    %v848 = vunpack.c.l.b16 %v236
    %v849 = vunpack.c.h.b16 %v236
    %v850 = vunpack.c.l.b16 %v237
    %v851 = vunpack.c.h.b16 %v237
    %v852 = vunpack.c.l.b16 %v238
    %v853 = vunpack.c.h.b16 %v238
    %v854 = vunpack.c.l.b16 %v239
    %v855 = vunpack.c.h.b16 %v239
    %v856 = vunpack.c.l.b16 %v240
    %v857 = vunpack.c.h.b16 %v240
    %v858 = vunpack.c.l.b16 %v241
    %v859 = vunpack.c.h.b16 %v241
    %v860 = vunpack.c.l.b16 %v242
    %v861 = vunpack.c.h.b16 %v242
    %v862 = vunpack.c.l.b16 %v243
    %v863 = vunpack.c.h.b16 %v243
    %v864 = vunpack.c.l.b16 %v244
    %v865 = vunpack.c.h.b16 %v244
    %v866 = vunpack.c.l.b16 %v245
    %v867 = vunpack.c.h.b16 %v245
    %v868 = vunpack.c.l.b16 %v246
    %v869 = vunpack.c.h.b16 %v246
    %v870 = vunpack.c.l.b16 %v247
    %v871 = vunpack.c.h.b16 %v247
    %v872 = vunpack.c.l.b16 %v248
    %v873 = vunpack.c.h.b16 %v248
    %v874 = vunpack.c.l.b16 %v249
    %v875 = vunpack.c.h.b16 %v249
    %v876 = vunpack.c.l.b16 %v250
    %v877 = vunpack.c.h.b16 %v250
    %v878 = vunpack.c.l.b16 %v251
    %v879 = vunpack.c.h.b16 %v251
    %v880 = vunpack.c.l.b16 %v252
    %v881 = vunpack.c.h.b16 %v252
    %v882 = vunpack.c.l.b16 %v253
    %v883 = vunpack.c.h.b16 %v253
    %v884 = vunpack.c.l.b16 %v254
    %v885 = vunpack.c.h.b16 %v254
    %v886 = vunpack.c.l.b16 %v255
    %v887 = vunpack.c.h.b16 %v255
    %v888 = vunpack.c.l.b16 %v256
    %v889 = vunpack.c.h.b16 %v256
    %v890 = vunpack.c.l.b16 %v257
    %v891 = vunpack.c.h.b16 %v257
    %v892 = vunpack.c.l.b16 %v258
    %v893 = vunpack.c.h.b16 %v258
    %v894 = vunpack.c.l.b16 %v259
    %v895 = vunpack.c.h.b16 %v259
    %v896 = vunpack.c.l.b16 %v260
    %v897 = vunpack.c.h.b16 %v260
    %v898 = vunpack.c.l.b16 %v261
    %v899 = vunpack.c.h.b16 %v261
    %v900 = vunpack.c.l.b16 %v262
    %v901 = vunpack.c.h.b16 %v262
    %v902 = vunpack.c.l.b16 %v263
    %v903 = vunpack.c.h.b16 %v263
    %v904 = vunpack.c.l.b16 %v264
    %v905 = vunpack.c.h.b16 %v264
    %v906 = vunpack.c.l.b16 %v265
    %v907 = vunpack.c.h.b16 %v265
    %v908 = vunpack.c.l.b16 %v266
    %v909 = vunpack.c.h.b16 %v266
    %v910 = vunpack.c.l.b16 %v267
    %v911 = vunpack.c.h.b16 %v267
    %v912 = vunpack.c.l.b16 %v268
    %v913 = vunpack.c.h.b16 %v268
    %v914 = vunpack.c.l.b16 %v269
    %v915 = vunpack.c.h.b16 %v269
    %v916 = vunpack.c.l.b16 %v270
    %v917 = vunpack.c.h.b16 %v270
    %v918 = vunpack.c.l.b16 %v271
    %v919 = vunpack.c.h.b16 %v271
    %v920 = vunpack.c.l.b16 %v272
    %v921 = vunpack.c.h.b16 %v272
    %v922 = vunpack.c.l.b16 %v273
    %v923 = vunpack.c.h.b16 %v273
    %v924 = vunpack.c.l.b16 %v274
    %v925 = vunpack.c.h.b16 %v274
    %v926 = vunpack.c.l.b16 %v275
    %v927 = vunpack.c.h.b16 %v275
    %v928 = vunpack.c.l.b16 %v276
    %v929 = vunpack.c.h.b16 %v276
    %v930 = vunpack.c.l.b16 %v277
    %v931 = vunpack.c.h.b16 %v277
    %v932 = vunpack.c.l.b16 %v278
    %v933 = vunpack.c.h.b16 %v278
    %v934 = vunpack.c.l.b16 %v279
    %v935 = vunpack.c.h.b16 %v279
    %v936 = vunpack.c.l.b16 %v280
    %v937 = vunpack.c.h.b16 %v280
    %v938 = vunpack.c.l.b16 %v281
    %v939 = vunpack.c.h.b16 %v281
    %v940 = vunpack.c.l.b16 %v282
    %v941 = vunpack.c.h.b16 %v282
    %v942 = vunpack.c.l.b16 %v283
    %v943 = vunpack.c.h.b16 %v283
    %v944 = vunpack.c.l.b16 %v284
    %v945 = vunpack.c.h.b16 %v284
    %v946 = vunpack.c.l.b16 %v285
    %v947 = vunpack.c.h.b16 %v285
    %v948 = vunpack.c.l.b16 %v286
    %v949 = vunpack.c.h.b16 %v286
    %v950 = vunpack.c.l.b16 %v287
    %v951 = vunpack.c.h.b16 %v287
    %v952 = vunpack.c.l.b16 %v288
    %v953 = vunpack.c.h.b16 %v288
    %v954 = vunpack.c.l.b16 %v289
    %v955 = vunpack.c.h.b16 %v289
    %v956 = vunpack.c.l.b16 %v290
    %v957 = vunpack.c.h.b16 %v290
    %v958 = vunpack.c.l.b16 %v291
    %v959 = vunpack.c.h.b16 %v291
    %v960 = vunpack.c.l.b16 %v292
    %v961 = vunpack.c.h.b16 %v292
    %v962 = vunpack.c.l.b16 %v293
    %v963 = vunpack.c.h.b16 %v293
    %v964 = vunpack.c.l.b16 %v294
    %v965 = vunpack.c.h.b16 %v294
    %v966 = vunpack.c.l.b16 %v295
    %v967 = vunpack.c.h.b16 %v295
    %v968 = vunpack.c.l.b16 %v296
    %v969 = vunpack.c.h.b16 %v296
    %v970 = vunpack.c.l.b16 %v297
    %v971 = vunpack.c.h.b16 %v297
    %v972 = vunpack.c.l.b16 %v298
    %v973 = vunpack.c.h.b16 %v298
    %v974 = vunpack.c.l.b16 %v299
    %v975 = vunpack.c.h.b16 %v299
    %v976 = vunpack.c.l.b16 %v300
    %v977 = vunpack.c.h.b16 %v300
    %v978 = vunpack.c.l.b16 %v301
    %v979 = vunpack.c.h.b16 %v301
    %v980 = vunpack.c.l.b16 %v302
    %v981 = vunpack.c.h.b16 %v302
    %v982 = vunpack.c.l.b16 %v303
    %v983 = vunpack.c.h.b16 %v303
    %v984 = vunpack.c.l.b16 %v304
    %v985 = vunpack.c.h.b16 %v304
    %v986 = vunpack.c.l.b16 %v305
    %v987 = vunpack.c.h.b16 %v305
    %v988 = vunpack.c.l.b16 %v306
    %v989 = vunpack.c.h.b16 %v306
    %v990 = vunpack.c.l.b16 %v307
    %v991 = vunpack.c.h.b16 %v307
    %v992 = vunpack.c.l.b16 %v308
    %v993 = vunpack.c.h.b16 %v308
    %v994 = vunpack.c.l.b16 %v309
    %v995 = vunpack.c.h.b16 %v309
    %v996 = vunpack.c.l.b16 %v310
    %v997 = vunpack.c.h.b16 %v310
    %v998 = vunpack.c.l.b16 %v311
    %v999 = vunpack.c.h.b16 %v311
    %v1000 = vunpack.c.l.b16 %v312
    %v1001 = vunpack.c.h.b16 %v312
    %v1002 = vunpack.c.l.b16 %v313
    %v1003 = vunpack.c.h.b16 %v313
    %v1004 = vunpack.c.l.b16 %v314
    %v1005 = vunpack.c.h.b16 %v314
    %v1006 = vunpack.c.l.b16 %v315
    %v1007 = vunpack.c.h.b16 %v315
    %v1008 = vunpack.c.l.b16 %v316
    %v1009 = vunpack.c.h.b16 %v316
    %v1010 = vunpack.c.l.b16 %v317
    %v1011 = vunpack.c.h.b16 %v317
    %v1012 = vunpack.c.l.b16 %v318
    %v1013 = vunpack.c.h.b16 %v318
    %v1014 = vunpack.c.l.b16 %v319
    %v1015 = vunpack.c.h.b16 %v319
    %v1016 = vunpack.c.l.b16 %v320
    %v1017 = vunpack.c.h.b16 %v320
    %v1018 = vunpack.c.l.b16 %v321
    %v1019 = vunpack.c.h.b16 %v321
    %v1020 = vunpack.c.l.b16 %v322
    %v1021 = vunpack.c.h.b16 %v322
    %v1022 = vunpack.c.l.b16 %v323
    %v1023 = vunpack.c.h.b16 %v323
    %v1024 = vunpack.c.l.b16 %v324
    %v1025 = vunpack.c.h.b16 %v324
    %v1026 = vunpack.c.l.b16 %v325
    %v1027 = vunpack.c.h.b16 %v325
    %v1028 = vunpack.c.l.b16 %v326
    %v1029 = vunpack.c.h.b16 %v326
    %v1030 = vunpack.c.l.b16 %v327
    %v1031 = vunpack.c.h.b16 %v327
    %v1032 = vunpack.c.l.b16 %v328
    %v1033 = vunpack.c.h.b16 %v328
    %v1034 = vunpack.c.l.b16 %v329
    %v1035 = vunpack.c.h.b16 %v329
    %v1036 = vunpack.c.l.b16 %v330
    %v1037 = vunpack.c.h.b16 %v330
    %v1038 = vunpack.c.l.b16 %v331
    %v1039 = vunpack.c.h.b16 %v331
    %v1040 = vunpack.c.l.b16 %v332
    %v1041 = vunpack.c.h.b16 %v332
    %v1042 = vunpack.c.l.b16 %v333
    %v1043 = vunpack.c.h.b16 %v333
    %v1044 = vunpack.c.l.b16 %v334
    %v1045 = vunpack.c.h.b16 %v334
    %v1046 = vunpack.c.l.b16 %v335
    %v1047 = vunpack.c.h.b16 %v335
    %v1048 = vunpack.c.l.b16 %v336
    %v1049 = vunpack.c.h.b16 %v336
    %v1050 = vunpack.c.l.b16 %v337
    %v1051 = vunpack.c.h.b16 %v337
    %v1052 = vunpack.c.l.b16 %v338
    %v1053 = vunpack.c.h.b16 %v338
    %v1054 = vunpack.c.l.b16 %v339
    %v1055 = vunpack.c.h.b16 %v339
    %v1056 = vunpack.c.l.b16 %v340
    %v1057 = vunpack.c.h.b16 %v340
    %v1058 = vunpack.c.l.b16 %v341
    %v1059 = vunpack.c.h.b16 %v341
    %v1060 = vunpack.c.l.b16 %v342
    %v1061 = vunpack.c.h.b16 %v342
    %v1062 = vunpack.c.l.b16 %v343
    %v1063 = vunpack.c.h.b16 %v343
    %v1064 = vunpack.c.l.b16 %v344
    %v1065 = vunpack.c.h.b16 %v344
    %v1066 = vunpack.c.l.b16 %v345
    %v1067 = vunpack.c.h.b16 %v345
    %v1068 = vunpack.c.l.b16 %v346
    %v1069 = vunpack.c.h.b16 %v346
    %v1070 = vunpack.c.l.b16 %v347
    %v1071 = vunpack.c.h.b16 %v347
    %v1072 = vunpack.c.l.b16 %v348
    %v1073 = vunpack.c.h.b16 %v348
    %v1074 = vunpack.c.l.b16 %v349
    %v1075 = vunpack.c.h.b16 %v349
    %v1076 = vunpack.c.l.b16 %v350
    %v1077 = vunpack.c.h.b16 %v350
    %v1078 = vunpack.c.l.b16 %v351
    %v1079 = vunpack.c.h.b16 %v351
    %v1080 = vunpack.c.l.b16 %v352
    %v1081 = vunpack.c.h.b16 %v352
    %v1082 = vunpack.c.l.b16 %v353
    %v1083 = vunpack.c.h.b16 %v353
    %v1084 = vpack.c.b16 %v640, %v636
    %v1085 = vpack.c.b16 %v641, %v637
    %v1086 = vpack.c.b16 %v642, %v638
    %v1087 = vpack.c.b16 %v643, %v639
    %v1088 = vpack.c.b16 %v648, %v644
    %v1089 = vpack.c.b16 %v649, %v645
    %v1090 = vpack.c.b16 %v650, %v646
    %v1091 = vpack.c.b16 %v651, %v647
    %v1092 = vpack.c.b16 %v656, %v652
    %v1093 = vpack.c.b16 %v657, %v653
    %v1094 = vpack.c.b16 %v658, %v654
    %v1095 = vpack.c.b16 %v659, %v655
    %v1096 = vpack.c.b16 %v664, %v660
    %v1097 = vpack.c.b16 %v665, %v661
    %v1098 = vpack.c.b16 %v666, %v662
    %v1099 = vpack.c.b16 %v667, %v663
    %v1100 = vpack.c.b16 %v672, %v668
    %v1101 = vpack.c.b16 %v673, %v669
    %v1102 = vpack.c.b16 %v674, %v670
    %v1103 = vpack.c.b16 %v675, %v671
    %v1104 = vpack.c.b16 %v680, %v676
    %v1105 = vpack.c.b16 %v681, %v677
    %v1106 = vpack.c.b16 %v682, %v678
    %v1107 = vpack.c.b16 %v683, %v679
    %v1108 = vpack.c.b16 %v688, %v684
    %v1109 = vpack.c.b16 %v689, %v685
    %v1110 = vpack.c.b16 %v690, %v686
    %v1111 = vpack.c.b16 %v691, %v687
    %v1112 = vpack.c.b16 %v696, %v692
    %v1113 = vpack.c.b16 %v697, %v693
    %v1114 = vpack.c.b16 %v698, %v694
    %v1115 = vpack.c.b16 %v699, %v695
    %v1116 = vpack.c.b16 %v704, %v700
    %v1117 = vpack.c.b16 %v705, %v701
    %v1118 = vpack.c.b16 %v706, %v702
    %v1119 = vpack.c.b16 %v707, %v703
    %v1120 = vpack.c.b16 %v712, %v708
    %v1121 = vpack.c.b16 %v713, %v709
    %v1122 = vpack.c.b16 %v714, %v710
    %v1123 = vpack.c.b16 %v715, %v711
    %v1124 = vpack.c.b16 %v720, %v716
    %v1125 = vpack.c.b16 %v721, %v717
    %v1126 = vpack.c.b16 %v722, %v718
    %v1127 = vpack.c.b16 %v723, %v719
    %v1128 = vpack.c.b16 %v728, %v724
    %v1129 = vpack.c.b16 %v729, %v725
    %v1130 = vpack.c.b16 %v730, %v726
    %v1131 = vpack.c.b16 %v731, %v727
    %v1132 = vpack.c.b16 %v736, %v732
    %v1133 = vpack.c.b16 %v737, %v733
    %v1134 = vpack.c.b16 %v738, %v734
    %v1135 = vpack.c.b16 %v739, %v735
    %v1136 = vpack.c.b16 %v744, %v740
    %v1137 = vpack.c.b16 %v745, %v741
    %v1138 = vpack.c.b16 %v746, %v742
    %v1139 = vpack.c.b16 %v747, %v743
    %v1140 = vpack.c.b16 %v752, %v748
    %v1141 = vpack.c.b16 %v753, %v749
    %v1142 = vpack.c.b16 %v754, %v750
    %v1143 = vpack.c.b16 %v755, %v751
    %v1144 = vpack.c.b16 %v760, %v756
    %v1145 = vpack.c.b16 %v761, %v757
    %v1146 = vpack.c.b16 %v762, %v758
    %v1147 = vpack.c.b16 %v763, %v759
    %v1148 = vpack.c.b16 %v768, %v764
    %v1149 = vpack.c.b16 %v769, %v765
    %v1150 = vpack.c.b16 %v770, %v766
    %v1151 = vpack.c.b16 %v771, %v767
    %v1152 = vpack.c.b16 %v776, %v772
    %v1153 = vpack.c.b16 %v777, %v773
    %v1154 = vpack.c.b16 %v778, %v774
    %v1155 = vpack.c.b16 %v779, %v775
    %v1156 = vpack.c.b16 %v784, %v780
    %v1157 = vpack.c.b16 %v785, %v781
    %v1158 = vpack.c.b16 %v786, %v782
    %v1159 = vpack.c.b16 %v787, %v783
    %v1160 = vpack.c.b16 %v792, %v788
    %v1161 = vpack.c.b16 %v793, %v789
    %v1162 = vpack.c.b16 %v794, %v790
    %v1163 = vpack.c.b16 %v795, %v791
    %v1164 = vpack.c.b16 %v800, %v796
    %v1165 = vpack.c.b16 %v801, %v797
    %v1166 = vpack.c.b16 %v802, %v798
    %v1167 = vpack.c.b16 %v803, %v799
    %v1168 = vpack.c.b16 %v808, %v804
    %v1169 = vpack.c.b16 %v809, %v805
    %v1170 = vpack.c.b16 %v810, %v806
    %v1171 = vpack.c.b16 %v811, %v807
    %v1172 = vpack.c.b16 %v816, %v812
    %v1173 = vpack.c.b16 %v817, %v813
    %v1174 = vpack.c.b16 %v818, %v814
    %v1175 = vpack.c.b16 %v819, %v815
    %v1176 = vpack.c.b16 %v824, %v820
    %v1177 = vpack.c.b16 %v825, %v821
    %v1178 = vpack.c.b16 %v826, %v822
    %v1179 = vpack.c.b16 %v827, %v823
    %v1180 = vpack.c.b16 %v832, %v828
    %v1181 = vpack.c.b16 %v833, %v829
    %v1182 = vpack.c.b16 %v834, %v830
    %v1183 = vpack.c.b16 %v835, %v831
    %v1184 = vpack.c.b16 %v840, %v836
    %v1185 = vpack.c.b16 %v841, %v837
    %v1186 = vpack.c.b16 %v842, %v838
    %v1187 = vpack.c.b16 %v843, %v839
    %v1188 = vpack.c.b16 %v848, %v844
    %v1189 = vpack.c.b16 %v849, %v845
    %v1190 = vpack.c.b16 %v850, %v846
    %v1191 = vpack.c.b16 %v851, %v847
    %v1192 = vpack.c.b16 %v856, %v852
    %v1193 = vpack.c.b16 %v857, %v853
    %v1194 = vpack.c.b16 %v858, %v854
    %v1195 = vpack.c.b16 %v859, %v855
    %v1196 = vpack.c.b16 %v864, %v860
    %v1197 = vpack.c.b16 %v865, %v861
    %v1198 = vpack.c.b16 %v866, %v862
    %v1199 = vpack.c.b16 %v867, %v863
    %v1200 = vpack.c.b16 %v872, %v868
    %v1201 = vpack.c.b16 %v873, %v869
    %v1202 = vpack.c.b16 %v874, %v870
    %v1203 = vpack.c.b16 %v875, %v871
    %v1204 = vpack.c.b16 %v880, %v876
    %v1205 = vpack.c.b16 %v881, %v877
    %v1206 = vpack.c.b16 %v882, %v878
    %v1207 = vpack.c.b16 %v883, %v879
    %v1208 = vpack.c.b16 %v888, %v884
    %v1209 = vpack.c.b16 %v889, %v885
    %v1210 = vpack.c.b16 %v890, %v886
    %v1211 = vpack.c.b16 %v891, %v887
    %v1212 = vpack.c.b16 %v896, %v892
    %v1213 = vpack.c.b16 %v897, %v893
    %v1214 = vpack.c.b16 %v898, %v894
    %v1215 = vpack.c.b16 %v899, %v895
    %v1216 = vpack.c.b16 %v904, %v900
    %v1217 = vpack.c.b16 %v905, %v901
    %v1218 = vpack.c.b16 %v906, %v902
    %v1219 = vpack.c.b16 %v907, %v903
    %v1220 = vpack.c.b16 %v912, %v908
    %v1221 = vpack.c.b16 %v913, %v909
    %v1222 = vpack.c.b16 %v914, %v910
    %v1223 = vpack.c.b16 %v915, %v911
    %v1224 = vpack.c.b16 %v920, %v916
    %v1225 = vpack.c.b16 %v921, %v917
    %v1226 = vpack.c.b16 %v922, %v918
    %v1227 = vpack.c.b16 %v923, %v919
    %v1228 = vpack.c.b16 %v928, %v924
    %v1229 = vpack.c.b16 %v929, %v925
    %v1230 = vpack.c.b16 %v930, %v926
    %v1231 = vpack.c.b16 %v931, %v927
    %v1232 = vpack.c.b16 %v936, %v932
    %v1233 = vpack.c.b16 %v937, %v933
    %v1234 = vpack.c.b16 %v938, %v934
    %v1235 = vpack.c.b16 %v939, %v935
    %v1236 = vpack.c.b16 %v944, %v940
    %v1237 = vpack.c.b16 %v945, %v941
    %v1238 = vpack.c.b16 %v946, %v942
    %v1239 = vpack.c.b16 %v947, %v943
    %v1240 = vpack.c.b16 %v952, %v948
    %v1241 = vpack.c.b16 %v953, %v949
    %v1242 = vpack.c.b16 %v954, %v950
    %v1243 = vpack.c.b16 %v955, %v951
    %v1244 = vpack.c.b16 %v960, %v956
    %v1245 = vpack.c.b16 %v961, %v957
    %v1246 = vpack.c.b16 %v962, %v958
    %v1247 = vpack.c.b16 %v963, %v959
    %v1248 = vpack.c.b16 %v968, %v964
    %v1249 = vpack.c.b16 %v969, %v965
    %v1250 = vpack.c.b16 %v970, %v966
    %v1251 = vpack.c.b16 %v971, %v967
    %v1252 = vpack.c.b16 %v976, %v972
    %v1253 = vpack.c.b16 %v977, %v973
    %v1254 = vpack.c.b16 %v978, %v974
    %v1255 = vpack.c.b16 %v979, %v975
    %v1256 = vpack.c.b16 %v984, %v980
    %v1257 = vpack.c.b16 %v985, %v981
    %v1258 = vpack.c.b16 %v986, %v982
    %v1259 = vpack.c.b16 %v987, %v983
    %v1260 = vpack.c.b16 %v992, %v988
    %v1261 = vpack.c.b16 %v993, %v989
    %v1262 = vpack.c.b16 %v994, %v990
    %v1263 = vpack.c.b16 %v995, %v991
    %v1264 = vpack.c.b16 %v1000, %v996
    %v1265 = vpack.c.b16 %v1001, %v997
    %v1266 = vpack.c.b16 %v1002, %v998
    %v1267 = vpack.c.b16 %v1003, %v999
    %v1268 = vpack.c.b16 %v1008, %v1004
    %v1269 = vpack.c.b16 %v1009, %v1005
    %v1270 = vpack.c.b16 %v1010, %v1006
    %v1271 = vpack.c.b16 %v1011, %v1007
    %v1272 = vpack.c.b16 %v1016, %v1012
    %v1273 = vpack.c.b16 %v1017, %v1013
    %v1274 = vpack.c.b16 %v1018, %v1014
    %v1275 = vpack.c.b16 %v1019, %v1015
    %v1276 = vpack.c.b16 %v1024, %v1020
    %v1277 = vpack.c.b16 %v1025, %v1021
    %v1278 = vpack.c.b16 %v1026, %v1022
    %v1279 = vpack.c.b16 %v1027, %v1023
    %v1280 = vpack.c.b16 %v1032, %v1028
    %v1281 = vpack.c.b16 %v1033, %v1029
    %v1282 = vpack.c.b16 %v1034, %v1030
    %v1283 = vpack.c.b16 %v1035, %v1031
    %v1284 = vpack.c.b16 %v1040, %v1036
    %v1285 = vpack.c.b16 %v1041, %v1037
    %v1286 = vpack.c.b16 %v1042, %v1038
    %v1287 = vpack.c.b16 %v1043, %v1039
    %v1288 = vpack.c.b16 %v1048, %v1044
    %v1289 = vpack.c.b16 %v1049, %v1045
    %v1290 = vpack.c.b16 %v1050, %v1046
    %v1291 = vpack.c.b16 %v1051, %v1047
    %v1292 = vpack.c.b16 %v1056, %v1052
    %v1293 = vpack.c.b16 %v1057, %v1053
    %v1294 = vpack.c.b16 %v1058, %v1054
    %v1295 = vpack.c.b16 %v1059, %v1055
    %v1296 = vpack.c.b16 %v1064, %v1060
    %v1297 = vpack.c.b16 %v1065, %v1061
    %v1298 = vpack.c.b16 %v1066, %v1062
    %v1299 = vpack.c.b16 %v1067, %v1063
    %v1300 = vpack.c.b16 %v1072, %v1068
    %v1301 = vpack.c.b16 %v1073, %v1069
    %v1302 = vpack.c.b16 %v1074, %v1070
    %v1303 = vpack.c.b16 %v1075, %v1071
    %v1304 = vpack.c.b16 %v1080, %v1076
    %v1305 = vpack.c.b16 %v1081, %v1077
    %v1306 = vpack.c.b16 %v1082, %v1078
    %v1307 = vpack.c.b16 %v1083, %v1079
    %1532 = vmatprep.subr.bf16.mxu0 %v1085
    %1533 = vmatpush1.bf16.msra.mxu0 %v1084
    %1534 = vmatprep.subr.bf16.mxu0 %v1089
    %1535 = vmatpush1.bf16.msra.mxu0 %v1088
    %1536 = vmatprep.subr.bf16.mxu0 %v1093
    %1537 = vmatpush1.bf16.msra.mxu0 %v1092
    %1538 = vmatprep.subr.bf16.mxu0 %v1097
    %1539 = vmatpush1.bf16.msra.mxu0 %v1096
    %1540 = vmatprep.subr.bf16.mxu0 %v1101
    %1541 = vmatpush1.bf16.msra.mxu0 %v1100
    %1542 = vmatprep.subr.bf16.mxu0 %v1105
    %1543 = vmatpush1.bf16.msra.mxu0 %v1104
    %1544 = vmatprep.subr.bf16.mxu0 %v1109
    %1545 = vmatpush1.bf16.msra.mxu0 %v1108
    %1546 = vmatprep.subr.bf16.mxu0 %v1113
    %1547 = vmatpush1.bf16.msra.mxu0 %v1112
    %1548 = vmatprep.subr.bf16.mxu0 %v1117
    %1549 = vmatpush1.bf16.msra.mxu0 %v1116
    %1550 = vmatprep.subr.bf16.mxu0 %v1121
    %1551 = vmatpush1.bf16.msra.mxu0 %v1120
    %1552 = vmatprep.subr.bf16.mxu0 %v1125
    %1553 = vmatpush1.bf16.msra.mxu0 %v1124
    %1554 = vmatprep.subr.bf16.mxu0 %v1129
    %1555 = vmatpush1.bf16.msra.mxu0 %v1128
    %1556 = vmatprep.subr.bf16.mxu0 %v1133
    %1557 = vmatpush1.bf16.msra.mxu0 %v1132
    %1558 = vmatprep.subr.bf16.mxu0 %v1137
    %1559 = vmatpush1.bf16.msra.mxu0 %v1136
    %1560 = vmatprep.subr.bf16.mxu0 %v1141
    %1561 = vmatpush1.bf16.msra.mxu0 %v1140
    %1562 = vmatprep.subr.bf16.mxu0 %v1145
    %1563 = vmatpush1.bf16.msra.mxu0 %v1144
    %1564 = vmatprep.mubr.bf16.mxu0 %v399
    %1565 = vmatmul.mubr.bf16.gmra.mrb[0].mxu0 %v398
    %v1566 = vpop.f32.mrb[0].mxu0
    %v1567 = vadd.f32 %v359, %v1566
    %v1568 = vpop.f32.mrb[0].mxu0
    %v1569 = vadd.f32 %v363, %v1568
    %v1570 = vpop.f32.mrb[0].mxu0
    %v1571 = vadd.f32 %v359, %v1570
    %v1572 = vpop.f32.mrb[0].mxu0
    %v1573 = vadd.f32 %v363, %v1572
    %1574 = vdwg.mxu0
    %1575 = vmatprep.subr.bf16.mxu0 %v1149
    %1576 = vmatpush1.bf16.msra.mxu0 %v1148
    %1577 = vmatprep.subr.bf16.mxu0 %v1153
    %1578 = vmatpush1.bf16.msra.mxu0 %v1152
    %1579 = vmatprep.subr.bf16.mxu0 %v1157
    %1580 = vmatpush1.bf16.msra.mxu0 %v1156
    %1581 = vmatprep.subr.bf16.mxu0 %v1161
    %1582 = vmatpush1.bf16.msra.mxu0 %v1160
    %1583 = vmatprep.subr.bf16.mxu0 %v1165
    %1584 = vmatpush1.bf16.msra.mxu0 %v1164
    %1585 = vmatprep.subr.bf16.mxu0 %v1169
    %1586 = vmatpush1.bf16.msra.mxu0 %v1168
    %1587 = vmatprep.subr.bf16.mxu0 %v1173
    %1588 = vmatpush1.bf16.msra.mxu0 %v1172
    %1589 = vmatprep.subr.bf16.mxu0 %v1177
    %1590 = vmatpush1.bf16.msra.mxu0 %v1176
    %1591 = vmatprep.subr.bf16.mxu0 %v1181
    %1592 = vmatpush1.bf16.msra.mxu0 %v1180
    %1593 = vmatprep.subr.bf16.mxu0 %v1185
    %1594 = vmatpush1.bf16.msra.mxu0 %v1184
    %1595 = vmatprep.subr.bf16.mxu0 %v1189
    %1596 = vmatpush1.bf16.msra.mxu0 %v1188
    %1597 = vmatprep.subr.bf16.mxu0 %v1193
    %1598 = vmatpush1.bf16.msra.mxu0 %v1192
    %1599 = vmatprep.subr.bf16.mxu0 %v1197
    %1600 = vmatpush1.bf16.msra.mxu0 %v1196
    %1601 = vmatprep.subr.bf16.mxu0 %v1201
    %1602 = vmatpush1.bf16.msra.mxu0 %v1200
    %1603 = vmatprep.subr.bf16.mxu0 %v1205
    %1604 = vmatpush1.bf16.msra.mxu0 %v1204
    %1605 = vmatprep.subr.bf16.mxu0 %v1209
    %1606 = vmatpush1.bf16.msra.mxu0 %v1208
    %1607 = vmatprep.mubr.bf16.mxu0 %v401
    %1608 = vmatmul.mubr.bf16.gmra.mrb[0].mxu0 %v400
    %v1609 = vpop.f32.mrb[0].mxu0
    %v1610 = vadd.f32 %v1567, %v1609
    %v1611 = vpop.f32.mrb[0].mxu0
    %v1612 = vadd.f32 %v1569, %v1611
    %v1613 = vpop.f32.mrb[0].mxu0
    %v1614 = vadd.f32 %v1571, %v1613
    %v1615 = vpop.f32.mrb[0].mxu0
    %v1616 = vadd.f32 %v1573, %v1615
    %1617 = vdwg.mxu0
    %1618 = vmatprep.subr.bf16.mxu0 %v1213
    %1619 = vmatpush1.bf16.msra.mxu0 %v1212
    %1620 = vmatprep.subr.bf16.mxu0 %v1217
    %1621 = vmatpush1.bf16.msra.mxu0 %v1216
    %1622 = vmatprep.subr.bf16.mxu0 %v1221
    %1623 = vmatpush1.bf16.msra.mxu0 %v1220
    %1624 = vmatprep.subr.bf16.mxu0 %v1225
    %1625 = vmatpush1.bf16.msra.mxu0 %v1224
    %1626 = vmatprep.subr.bf16.mxu0 %v1229
    %1627 = vmatpush1.bf16.msra.mxu0 %v1228
    %1628 = vmatprep.subr.bf16.mxu0 %v1233
    %1629 = vmatpush1.bf16.msra.mxu0 %v1232
    %1630 = vmatprep.subr.bf16.mxu0 %v1237
    %1631 = vmatpush1.bf16.msra.mxu0 %v1236
    %1632 = vmatprep.subr.bf16.mxu0 %v1241
    %1633 = vmatpush1.bf16.msra.mxu0 %v1240
    %1634 = vmatprep.subr.bf16.mxu0 %v1245
    %1635 = vmatpush1.bf16.msra.mxu0 %v1244
    %1636 = vmatprep.subr.bf16.mxu0 %v1249
    %1637 = vmatpush1.bf16.msra.mxu0 %v1248
    %1638 = vmatprep.subr.bf16.mxu0 %v1253
    %1639 = vmatpush1.bf16.msra.mxu0 %v1252
    %1640 = vmatprep.subr.bf16.mxu0 %v1257
    %1641 = vmatpush1.bf16.msra.mxu0 %v1256
    %1642 = vmatprep.subr.bf16.mxu0 %v1261
    %1643 = vmatpush1.bf16.msra.mxu0 %v1260
    %1644 = vmatprep.subr.bf16.mxu0 %v1265
    %1645 = vmatpush1.bf16.msra.mxu0 %v1264
    %1646 = vmatprep.subr.bf16.mxu0 %v1269
    %1647 = vmatpush1.bf16.msra.mxu0 %v1268
    %1648 = vmatprep.subr.bf16.mxu0 %v1273
    %1649 = vmatpush1.bf16.msra.mxu0 %v1272
    %1650 = vmatprep.mubr.bf16.mxu0 %v403
    %1651 = vmatmul.mubr.bf16.gmra.mrb[0].mxu0 %v402
    %v1652 = vpop.f32.mrb[0].mxu0
    %v1653 = vadd.f32 %v1610, %v1652
    %v1654 = vpop.f32.mrb[0].mxu0
    %v1655 = vadd.f32 %v1612, %v1654
    %v1656 = vpop.f32.mrb[0].mxu0
    %v1657 = vadd.f32 %v1614, %v1656
    %v1658 = vpop.f32.mrb[0].mxu0
    %v1659 = vadd.f32 %v1616, %v1658
    %1660 = vdwg.mxu0
    %1661 = vmatprep.subr.bf16.mxu0 %v1277
    %1662 = vmatpush1.bf16.msra.mxu0 %v1276
    %1663 = vmatprep.subr.bf16.mxu0 %v1281
    %1664 = vmatpush1.bf16.msra.mxu0 %v1280
    %1665 = vmatprep.subr.bf16.mxu0 %v1285
    %1666 = vmatpush1.bf16.msra.mxu0 %v1284
    %1667 = vmatprep.subr.bf16.mxu0 %v1289
    %1668 = vmatpush1.bf16.msra.mxu0 %v1288
    %1669 = vmatprep.subr.bf16.mxu0 %v1293
    %1670 = vmatpush1.bf16.msra.mxu0 %v1292
    %1671 = vmatprep.subr.bf16.mxu0 %v1297
    %1672 = vmatpush1.bf16.msra.mxu0 %v1296
    %1673 = vmatprep.subr.bf16.mxu0 %v1301
    %1674 = vmatpush1.bf16.msra.mxu0 %v1300
    %1675 = vmatprep.subr.bf16.mxu0 %v1305
    %1676 = vmatpush1.bf16.msra.mxu0 %v1304
    %1677 = vmatprep.subr.bf16.mxu0 0
    %1678 = vmatpush1.bf16.msra.mxu0 0
    %1679 = vmatprep.subr.bf16.mxu0 0
    %1680 = vmatpush1.bf16.msra.mxu0 0
    %1681 = vmatprep.subr.bf16.mxu0 0
    %1682 = vmatpush1.bf16.msra.mxu0 0
    %1683 = vmatprep.subr.bf16.mxu0 0
    %1684 = vmatpush1.bf16.msra.mxu0 0
    %1685 = vmatprep.subr.bf16.mxu0 0
    %1686 = vmatpush1.bf16.msra.mxu0 0
    %1687 = vmatprep.subr.bf16.mxu0 0
    %1688 = vmatpush1.bf16.msra.mxu0 0
    %1689 = vmatprep.subr.bf16.mxu0 0
    %1690 = vmatpush1.bf16.msra.mxu0 0
    %1691 = vmatprep.subr.bf16.mxu0 0
    %1692 = vmatpush1.bf16.msra.mxu0 0
    %1693 = vmatprep.mubr.bf16.mxu0 0
    %1694 = vmatmul.mubr.bf16.gmra.mrb[0].mxu0 %v404
    %v1695 = vpop.f32.mrb[0].mxu0
    %v1696 = vadd.f32 %v1653, %v1695
    %v1697 = vpop.f32.mrb[0].mxu0
    %v1698 = vadd.f32 %v1655, %v1697
    %v1699 = vpop.f32.mrb[0].mxu0
    %v1700 = vadd.f32 %v1657, %v1699
    %v1701 = vpop.f32.mrb[0].mxu0
    %v1702 = vadd.f32 %v1659, %v1701
    %1703 = vdwg.mxu0
    %1704 = vmatprep.subr.bf16.mxu0 %v1087
    %1705 = vmatpush1.bf16.msra.mxu0 %v1086
    %1706 = vmatprep.subr.bf16.mxu0 %v1091
    %1707 = vmatpush1.bf16.msra.mxu0 %v1090
    %1708 = vmatprep.subr.bf16.mxu0 %v1095
    %1709 = vmatpush1.bf16.msra.mxu0 %v1094
    %1710 = vmatprep.subr.bf16.mxu0 %v1099
    %1711 = vmatpush1.bf16.msra.mxu0 %v1098
    %1712 = vmatprep.subr.bf16.mxu0 %v1103
    %1713 = vmatpush1.bf16.msra.mxu0 %v1102
    %1714 = vmatprep.subr.bf16.mxu0 %v1107
    %1715 = vmatpush1.bf16.msra.mxu0 %v1106
    %1716 = vmatprep.subr.bf16.mxu0 %v1111
    %1717 = vmatpush1.bf16.msra.mxu0 %v1110
    %1718 = vmatprep.subr.bf16.mxu0 %v1115
    %1719 = vmatpush1.bf16.msra.mxu0 %v1114
    %1720 = vmatprep.subr.bf16.mxu0 %v1119
    %1721 = vmatpush1.bf16.msra.mxu0 %v1118
    %1722 = vmatprep.subr.bf16.mxu0 %v1123
    %1723 = vmatpush1.bf16.msra.mxu0 %v1122
    %1724 = vmatprep.subr.bf16.mxu0 %v1127
    %1725 = vmatpush1.bf16.msra.mxu0 %v1126
    %1726 = vmatprep.subr.bf16.mxu0 %v1131
    %1727 = vmatpush1.bf16.msra.mxu0 %v1130
    %1728 = vmatprep.subr.bf16.mxu0 %v1135
    %1729 = vmatpush1.bf16.msra.mxu0 %v1134
    %1730 = vmatprep.subr.bf16.mxu0 %v1139
    %1731 = vmatpush1.bf16.msra.mxu0 %v1138
    %1732 = vmatprep.subr.bf16.mxu0 %v1143
    %1733 = vmatpush1.bf16.msra.mxu0 %v1142
    %1734 = vmatprep.subr.bf16.mxu0 %v1147
    %1735 = vmatpush1.bf16.msra.mxu0 %v1146
    %1736 = vmatprep.mubr.bf16.mxu0 %v399
    %1737 = vmatmul.mubr.bf16.gmra.mrb[0].mxu0 %v398
    %v1738 = vpop.f32.mrb[0].mxu0
    %v1739 = vadd.f32 %v367, %v1738
    %v1740 = vpop.f32.mrb[0].mxu0
    %v1741 = vadd.f32 %v371, %v1740
    %v1742 = vpop.f32.mrb[0].mxu0
    %v1743 = vadd.f32 %v367, %v1742
    %v1744 = vpop.f32.mrb[0].mxu0
    %v1745 = vadd.f32 %v371, %v1744
    %1746 = vdwg.mxu0
    %1747 = vmatprep.subr.bf16.mxu0 %v1151
    %1748 = vmatpush1.bf16.msra.mxu0 %v1150
    %1749 = vmatprep.subr.bf16.mxu0 %v1155
    %1750 = vmatpush1.bf16.msra.mxu0 %v1154
    %1751 = vmatprep.subr.bf16.mxu0 %v1159
    %1752 = vmatpush1.bf16.msra.mxu0 %v1158
    %1753 = vmatprep.subr.bf16.mxu0 %v1163
    %1754 = vmatpush1.bf16.msra.mxu0 %v1162
    %1755 = vmatprep.subr.bf16.mxu0 %v1167
    %1756 = vmatpush1.bf16.msra.mxu0 %v1166
    %1757 = vmatprep.subr.bf16.mxu0 %v1171
    %1758 = vmatpush1.bf16.msra.mxu0 %v1170
    %1759 = vmatprep.subr.bf16.mxu0 %v1175
    %1760 = vmatpush1.bf16.msra.mxu0 %v1174
    %1761 = vmatprep.subr.bf16.mxu0 %v1179
    %1762 = vmatpush1.bf16.msra.mxu0 %v1178
    %1763 = vmatprep.subr.bf16.mxu0 %v1183
    %1764 = vmatpush1.bf16.msra.mxu0 %v1182
    %1765 = vmatprep.subr.bf16.mxu0 %v1187
    %1766 = vmatpush1.bf16.msra.mxu0 %v1186
    %1767 = vmatprep.subr.bf16.mxu0 %v1191
    %1768 = vmatpush1.bf16.msra.mxu0 %v1190
    %1769 = vmatprep.subr.bf16.mxu0 %v1195
    %1770 = vmatpush1.bf16.msra.mxu0 %v1194
    %1771 = vmatprep.subr.bf16.mxu0 %v1199
    %1772 = vmatpush1.bf16.msra.mxu0 %v1198
    %1773 = vmatprep.subr.bf16.mxu0 %v1203
    %1774 = vmatpush1.bf16.msra.mxu0 %v1202
    %1775 = vmatprep.subr.bf16.mxu0 %v1207
    %1776 = vmatpush1.bf16.msra.mxu0 %v1206
    %1777 = vmatprep.subr.bf16.mxu0 %v1211
    %1778 = vmatpush1.bf16.msra.mxu0 %v1210
    %1779 = vmatprep.mubr.bf16.mxu0 %v401
    %1780 = vmatmul.mubr.bf16.gmra.mrb[0].mxu0 %v400
    %v1781 = vpop.f32.mrb[0].mxu0
    %v1782 = vadd.f32 %v1739, %v1781
    %v1783 = vpop.f32.mrb[0].mxu0
    %v1784 = vadd.f32 %v1741, %v1783
    %v1785 = vpop.f32.mrb[0].mxu0
    %v1786 = vadd.f32 %v1743, %v1785
    %v1787 = vpop.f32.mrb[0].mxu0
    %v1788 = vadd.f32 %v1745, %v1787
    %1789 = vdwg.mxu0
    %1790 = vmatprep.subr.bf16.mxu0 %v1215
    %1791 = vmatpush1.bf16.msra.mxu0 %v1214
    %1792 = vmatprep.subr.bf16.mxu0 %v1219
    %1793 = vmatpush1.bf16.msra.mxu0 %v1218
    %1794 = vmatprep.subr.bf16.mxu0 %v1223
    %1795 = vmatpush1.bf16.msra.mxu0 %v1222
    %1796 = vmatprep.subr.bf16.mxu0 %v1227
    %1797 = vmatpush1.bf16.msra.mxu0 %v1226
    %1798 = vmatprep.subr.bf16.mxu0 %v1231
    %1799 = vmatpush1.bf16.msra.mxu0 %v1230
    %1800 = vmatprep.subr.bf16.mxu0 %v1235
    %1801 = vmatpush1.bf16.msra.mxu0 %v1234
    %1802 = vmatprep.subr.bf16.mxu0 %v1239
    %1803 = vmatpush1.bf16.msra.mxu0 %v1238
    %1804 = vmatprep.subr.bf16.mxu0 %v1243
    %1805 = vmatpush1.bf16.msra.mxu0 %v1242
    %1806 = vmatprep.subr.bf16.mxu0 %v1247
    %1807 = vmatpush1.bf16.msra.mxu0 %v1246
    %1808 = vmatprep.subr.bf16.mxu0 %v1251
    %1809 = vmatpush1.bf16.msra.mxu0 %v1250
    %1810 = vmatprep.subr.bf16.mxu0 %v1255
    %1811 = vmatpush1.bf16.msra.mxu0 %v1254
    %1812 = vmatprep.subr.bf16.mxu0 %v1259
    %1813 = vmatpush1.bf16.msra.mxu0 %v1258
    %1814 = vmatprep.subr.bf16.mxu0 %v1263
    %1815 = vmatpush1.bf16.msra.mxu0 %v1262
    %1816 = vmatprep.subr.bf16.mxu0 %v1267
    %1817 = vmatpush1.bf16.msra.mxu0 %v1266
    %1818 = vmatprep.subr.bf16.mxu0 %v1271
    %1819 = vmatpush1.bf16.msra.mxu0 %v1270
    %1820 = vmatprep.subr.bf16.mxu0 %v1275
    %1821 = vmatpush1.bf16.msra.mxu0 %v1274
    %1822 = vmatprep.mubr.bf16.mxu0 %v403
    %1823 = vmatmul.mubr.bf16.gmra.mrb[0].mxu0 %v402
    %v1824 = vpop.f32.mrb[0].mxu0
    %v1825 = vadd.f32 %v1782, %v1824
    %v1826 = vpop.f32.mrb[0].mxu0
    %v1827 = vadd.f32 %v1784, %v1826
    %v1828 = vpop.f32.mrb[0].mxu0
    %v1829 = vadd.f32 %v1786, %v1828
    %v1830 = vpop.f32.mrb[0].mxu0
    %v1831 = vadd.f32 %v1788, %v1830
    %1832 = vdwg.mxu0
    %1833 = vmatprep.subr.bf16.mxu0 %v1279
    %1834 = vmatpush1.bf16.msra.mxu0 %v1278
    %1835 = vmatprep.subr.bf16.mxu0 %v1283
    %1836 = vmatpush1.bf16.msra.mxu0 %v1282
    %1837 = vmatprep.subr.bf16.mxu0 %v1287
    %1838 = vmatpush1.bf16.msra.mxu0 %v1286
    %1839 = vmatprep.subr.bf16.mxu0 %v1291
    %1840 = vmatpush1.bf16.msra.mxu0 %v1290
    %1841 = vmatprep.subr.bf16.mxu0 %v1295
    %1842 = vmatpush1.bf16.msra.mxu0 %v1294
    %1843 = vmatprep.subr.bf16.mxu0 %v1299
    %1844 = vmatpush1.bf16.msra.mxu0 %v1298
    %1845 = vmatprep.subr.bf16.mxu0 %v1303
    %1846 = vmatpush1.bf16.msra.mxu0 %v1302
    %1847 = vmatprep.subr.bf16.mxu0 %v1307
    %1848 = vmatpush1.bf16.msra.mxu0 %v1306
    %1849 = vmatprep.subr.bf16.mxu0 0
    %1850 = vmatpush1.bf16.msra.mxu0 0
    %1851 = vmatprep.subr.bf16.mxu0 0
    %1852 = vmatpush1.bf16.msra.mxu0 0
    %1853 = vmatprep.subr.bf16.mxu0 0
    %1854 = vmatpush1.bf16.msra.mxu0 0
    %1855 = vmatprep.subr.bf16.mxu0 0
    %1856 = vmatpush1.bf16.msra.mxu0 0
    %1857 = vmatprep.subr.bf16.mxu0 0
    %1858 = vmatpush1.bf16.msra.mxu0 0
    %1859 = vmatprep.subr.bf16.mxu0 0
    %1860 = vmatpush1.bf16.msra.mxu0 0
    %1861 = vmatprep.subr.bf16.mxu0 0
    %1862 = vmatpush1.bf16.msra.mxu0 0
    %1863 = vmatprep.subr.bf16.mxu0 0
    %1864 = vmatpush1.bf16.msra.mxu0 0
    %1865 = vmatprep.mubr.bf16.mxu0 0
    %1866 = vmatmul.mubr.bf16.gmra.mrb[0].mxu0 %v404
    %v1867 = vpop.f32.mrb[0].mxu0
    %v1868 = vadd.f32 %v1825, %v1867
    %v1869 = vpop.f32.mrb[0].mxu0
    %v1870 = vadd.f32 %v1827, %v1869
    %v1871 = vpop.f32.mrb[0].mxu0
    %v1872 = vadd.f32 %v1829, %v1871
    %v1873 = vpop.f32.mrb[0].mxu0
    %v1874 = vadd.f32 %v1831, %v1873
    %1875 = vdwg.mxu0
    %v1876 = vmax.f32 %v1696, 0.0
    %v1877 = vmax.f32 %v1698, 0.0
    %v1878 = vmax.f32 %v1868, 0.0
    %v1879 = vmax.f32 %v1870, 0.0
    %v1880 = vmax.f32 %v1700, 0.0
    %v1881 = vmax.f32 %v1702, 0.0
    %v1882 = vmax.f32 %v1872, 0.0
    %v1883 = vmax.f32 %v1874, 0.0
    %v1884 = vpack.c.bf16 %v1880, %v1876
    %v1885 = vpack.c.bf16 %v1881, %v1877
    %v1886 = vpack.c.bf16 %v1882, %v1878
    %v1887 = vpack.c.bf16 %v1883, %v1879
    %v1888 = vld [vmem:[#allocation7] sm:$0xf]
    %v1889 = vld [vmem:[#allocation7 + $0x4] sm:$0xf]
    %v1890 = vld [vmem:[#allocation7 + $0x8] sm:$0xf]
    %v1891 = vld [vmem:[#allocation7 + $0xc] sm:$0xf]
    %v1892 = vld [vmem:[#allocation7 + $0x10] sm:$0xf]
    %v1893 = vld [vmem:[#allocation7 + $0x14] sm:$0xf]
    %v1894 = vld [vmem:[#allocation7 + $0x18] sm:$0xf]
    %v1895 = vld [vmem:[#allocation7 + $0x1c] sm:$0xf]
    %v1896 = vld [vmem:[#allocation7 + $0x20] sm:$0xf]
    %v1897 = vld [vmem:[#allocation7 + $0x24] sm:$0xf]
    %v1898 = vld [vmem:[#allocation7 + $0x28] sm:$0xf]
    %v1899 = vld [vmem:[#allocation7 + $0x2c] sm:$0xf]
    %v1900 = vld [vmem:[#allocation7 + $0x30] sm:$0xf]
    %v1901 = vld [vmem:[#allocation7 + $0x34] sm:$0xf]
    %v1902 = vld [vmem:[#allocation7 + $0x38] sm:$0xf]
    %v1903 = vld [vmem:[#allocation7 + $0x3c] sm:$0xf]
    %v1904 = vld [vmem:[#allocation7 + $0x40] sm:$0xf]
    %v1905 = vld [vmem:[#allocation7 + $0x44] sm:$0xf]
    %v1906 = vld [vmem:[#allocation7 + $0x48] sm:$0xf]
    %v1907 = vld [vmem:[#allocation7 + $0x4c] sm:$0xf]
    %v1908 = vld [vmem:[#allocation7 + $0x50] sm:$0xf]
    %v1909 = vld [vmem:[#allocation7 + $0x54] sm:$0xf]
    %v1910 = vld [vmem:[#allocation7 + $0x58] sm:$0xf]
    %v1911 = vld [vmem:[#allocation7 + $0x5c] sm:$0xf]
    %v1912 = vld [vmem:[#allocation7 + $0x60] sm:$0xf]
    %v1913 = vld [vmem:[#allocation7 + $0x64] sm:$0xf]
    %v1914 = vld [vmem:[#allocation7 + $0x68] sm:$0xf]
    %v1915 = vld [vmem:[#allocation7 + $0x6c] sm:$0xf]
    %v1916 = vld [vmem:[#allocation7 + $0x70] sm:$0xf]
    %v1917 = vld [vmem:[#allocation7 + $0x74] sm:$0xf]
    %v1918 = vld [vmem:[#allocation7 + $0x78] sm:$0xf]
    %v1919 = vld [vmem:[#allocation7 + $0x7c] sm:$0xf]
    %v1920 = vld [vmem:[#allocation7 + $0x80] sm:$0xf]
    %v1921 = vld [vmem:[#allocation7 + $0x84] sm:$0xf]
    %v1922 = vld [vmem:[#allocation7 + $0x88] sm:$0xf]
    %v1923 = vld [vmem:[#allocation7 + $0x8c] sm:$0xf]
    %v1924 = vld [vmem:[#allocation7 + $0x90] sm:$0xf]
    %v1925 = vld [vmem:[#allocation7 + $0x94] sm:$0xf]
    %v1926 = vld [vmem:[#allocation7 + $0x98] sm:$0xf]
    %v1927 = vld [vmem:[#allocation7 + $0x9c] sm:$0xf]
    %v1928 = vld [vmem:[#allocation7 + $0xa0] sm:$0xf]
    %v1929 = vld [vmem:[#allocation7 + $0xa4] sm:$0xf]
    %v1930 = vld [vmem:[#allocation7 + $0xa8] sm:$0xf]
    %v1931 = vld [vmem:[#allocation7 + $0xac] sm:$0xf]
    %v1932 = vld [vmem:[#allocation7 + $0xb0] sm:$0xf]
    %v1933 = vld [vmem:[#allocation7 + $0xb4] sm:$0xf]
    %v1934 = vld [vmem:[#allocation7 + $0xb8] sm:$0xf]
    %v1935 = vld [vmem:[#allocation7 + $0xbc] sm:$0xf]
    %v1936 = vld [vmem:[#allocation7 + $0xc0] sm:$0xf]
    %v1937 = vld [vmem:[#allocation7 + $0xc4] sm:$0xf]
    %v1938 = vld [vmem:[#allocation7 + $0xc8] sm:$0xf]
    %v1939 = vld [vmem:[#allocation7 + $0xcc] sm:$0xf]
    %v1940 = vld [vmem:[#allocation7 + $0xd0] sm:$0xf]
    %v1941 = vld [vmem:[#allocation7 + $0xd4] sm:$0xf]
    %v1942 = vld [vmem:[#allocation7 + $0xd8] sm:$0xf]
    %v1943 = vld [vmem:[#allocation7 + $0xdc] sm:$0xf]
    %v1944 = vld [vmem:[#allocation7 + $0xe0] sm:$0xf]
    %v1945 = vld [vmem:[#allocation7 + $0xe4] sm:$0xf]
    %v1946 = vld [vmem:[#allocation7 + $0xe8] sm:$0xf]
    %v1947 = vld [vmem:[#allocation7 + $0xec] sm:$0xf]
    %v1948 = vld [vmem:[#allocation7 + $0xf0] sm:$0xf]
    %v1949 = vld [vmem:[#allocation7 + $0xf4] sm:$0xf]
    %v1950 = vld [vmem:[#allocation7 + $0xf8] sm:$0xf]
    %v1951 = vld [vmem:[#allocation7 + $0xfc] sm:$0xf]
    %v1952 = vld [vmem:[%s4] sm:$0x1]
    %v1954 = vlaneseq
    %v1955 = vshrl.u32 %v1954, 7
    %v1956 = vsub.s32 0, %v1955
    %v1957 = vrot.slane %v1952, %v1956
    %v2023 = vunpack.c.l.b16 %v1888
    %v2024 = vunpack.c.l.b16 %v1889
    %v2025 = vunpack.c.l.b16 %v1890
    %v2026 = vunpack.c.l.b16 %v1891
    %v2027 = vunpack.c.l.b16 %v1892
    %v2028 = vunpack.c.l.b16 %v1893
    %v2029 = vunpack.c.l.b16 %v1894
    %v2030 = vunpack.c.l.b16 %v1895
    %v2031 = vunpack.c.l.b16 %v1896
    %v2032 = vunpack.c.l.b16 %v1897
    %v2033 = vunpack.c.l.b16 %v1898
    %v2034 = vunpack.c.l.b16 %v1899
    %v2035 = vunpack.c.l.b16 %v1900
    %v2036 = vunpack.c.l.b16 %v1901
    %v2037 = vunpack.c.l.b16 %v1902
    %v2038 = vunpack.c.l.b16 %v1903
    %v2039 = vunpack.c.l.b16 %v1904
    %v2040 = vunpack.c.l.b16 %v1905
    %v2041 = vunpack.c.l.b16 %v1906
    %v2042 = vunpack.c.l.b16 %v1907
    %v2043 = vunpack.c.l.b16 %v1908
    %v2044 = vunpack.c.l.b16 %v1909
    %v2045 = vunpack.c.l.b16 %v1910
    %v2046 = vunpack.c.l.b16 %v1911
    %v2047 = vunpack.c.l.b16 %v1912
    %v2048 = vunpack.c.l.b16 %v1913
    %v2049 = vunpack.c.l.b16 %v1914
    %v2050 = vunpack.c.l.b16 %v1915
    %v2051 = vunpack.c.l.b16 %v1916
    %v2052 = vunpack.c.l.b16 %v1917
    %v2053 = vunpack.c.l.b16 %v1918
    %v2054 = vunpack.c.l.b16 %v1919
    %v2055 = vunpack.c.l.b16 %v1920
    %v2056 = vunpack.c.l.b16 %v1921
    %v2057 = vunpack.c.l.b16 %v1922
    %v2058 = vunpack.c.l.b16 %v1923
    %v2059 = vunpack.c.l.b16 %v1924
    %v2060 = vunpack.c.l.b16 %v1925
    %v2061 = vunpack.c.l.b16 %v1926
    %v2062 = vunpack.c.l.b16 %v1927
    %v2063 = vunpack.c.l.b16 %v1928
    %v2064 = vunpack.c.l.b16 %v1929
    %v2065 = vunpack.c.l.b16 %v1930
    %v2066 = vunpack.c.l.b16 %v1931
    %v2067 = vunpack.c.l.b16 %v1932
    %v2068 = vunpack.c.l.b16 %v1933
    %v2069 = vunpack.c.l.b16 %v1934
    %v2070 = vunpack.c.l.b16 %v1935
    %v2071 = vunpack.c.l.b16 %v1936
    %v2072 = vunpack.c.l.b16 %v1937
    %v2073 = vunpack.c.l.b16 %v1938
    %v2074 = vunpack.c.l.b16 %v1939
    %v2075 = vunpack.c.l.b16 %v1940
    %v2076 = vunpack.c.l.b16 %v1941
    %v2077 = vunpack.c.l.b16 %v1942
    %v2078 = vunpack.c.l.b16 %v1943
    %v2079 = vunpack.c.l.b16 %v1944
    %v2080 = vunpack.c.l.b16 %v1945
    %v2081 = vunpack.c.l.b16 %v1946
    %v2082 = vunpack.c.l.b16 %v1947
    %v2083 = vunpack.c.l.b16 %v1948
    %v2084 = vunpack.c.l.b16 %v1949
    %v2085 = vunpack.c.l.b16 %v1950
    %v2086 = vunpack.c.l.b16 %v1951
    %v2087 = vpack.c.b16 %v2024, %v2023
    %v2088 = vpack.c.b16 %v2026, %v2025
    %v2089 = vpack.c.b16 %v2028, %v2027
    %v2090 = vpack.c.b16 %v2030, %v2029
    %v2091 = vpack.c.b16 %v2032, %v2031
    %v2092 = vpack.c.b16 %v2034, %v2033
    %v2093 = vpack.c.b16 %v2036, %v2035
    %v2094 = vpack.c.b16 %v2038, %v2037
    %v2095 = vpack.c.b16 %v2040, %v2039
    %v2096 = vpack.c.b16 %v2042, %v2041
    %v2097 = vpack.c.b16 %v2044, %v2043
    %v2098 = vpack.c.b16 %v2046, %v2045
    %v2099 = vpack.c.b16 %v2048, %v2047
    %v2100 = vpack.c.b16 %v2050, %v2049
    %v2101 = vpack.c.b16 %v2052, %v2051
    %v2102 = vpack.c.b16 %v2054, %v2053
    %v2103 = vpack.c.b16 %v2056, %v2055
    %v2104 = vpack.c.b16 %v2058, %v2057
    %v2105 = vpack.c.b16 %v2060, %v2059
    %v2106 = vpack.c.b16 %v2062, %v2061
    %v2107 = vpack.c.b16 %v2064, %v2063
    %v2108 = vpack.c.b16 %v2066, %v2065
    %v2109 = vpack.c.b16 %v2068, %v2067
    %v2110 = vpack.c.b16 %v2070, %v2069
    %v2111 = vpack.c.b16 %v2072, %v2071
    %v2112 = vpack.c.b16 %v2074, %v2073
    %v2113 = vpack.c.b16 %v2076, %v2075
    %v2114 = vpack.c.b16 %v2078, %v2077
    %v2115 = vpack.c.b16 %v2080, %v2079
    %v2116 = vpack.c.b16 %v2082, %v2081
    %v2117 = vpack.c.b16 %v2084, %v2083
    %v2118 = vpack.c.b16 %v2086, %v2085
    %2151 = vmatprep.subr.bf16.mxu0 0
    %2152 = vmatpush1.bf16.msra.mxu0 %v2087
    %2153 = vmatprep.subr.bf16.mxu0 0
    %2154 = vmatpush1.bf16.msra.mxu0 %v2088
    %2155 = vmatprep.subr.bf16.mxu0 0
    %2156 = vmatpush1.bf16.msra.mxu0 %v2089
    %2157 = vmatprep.subr.bf16.mxu0 0
    %2158 = vmatpush1.bf16.msra.mxu0 %v2090
    %2159 = vmatprep.subr.bf16.mxu0 0
    %2160 = vmatpush1.bf16.msra.mxu0 %v2091
    %2161 = vmatprep.subr.bf16.mxu0 0
    %2162 = vmatpush1.bf16.msra.mxu0 %v2092
    %2163 = vmatprep.subr.bf16.mxu0 0
    %2164 = vmatpush1.bf16.msra.mxu0 %v2093
    %2165 = vmatprep.subr.bf16.mxu0 0
    %2166 = vmatpush1.bf16.msra.mxu0 %v2094
    %2167 = vmatprep.subr.bf16.mxu0 0
    %2168 = vmatpush1.bf16.msra.mxu0 %v2095
    %2169 = vmatprep.subr.bf16.mxu0 0
    %2170 = vmatpush1.bf16.msra.mxu0 %v2096
    %2171 = vmatprep.subr.bf16.mxu0 0
    %2172 = vmatpush1.bf16.msra.mxu0 %v2097
    %2173 = vmatprep.subr.bf16.mxu0 0
    %2174 = vmatpush1.bf16.msra.mxu0 %v2098
    %2175 = vmatprep.subr.bf16.mxu0 0
    %2176 = vmatpush1.bf16.msra.mxu0 %v2099
    %2177 = vmatprep.subr.bf16.mxu0 0
    %2178 = vmatpush1.bf16.msra.mxu0 %v2100
    %2179 = vmatprep.subr.bf16.mxu0 0
    %2180 = vmatpush1.bf16.msra.mxu0 %v2101
    %2181 = vmatprep.subr.bf16.mxu0 0
    %2182 = vmatpush1.bf16.msra.mxu0 %v2102
    %2183 = vmatprep.mubr.bf16.mxu0 %v1885
    %2184 = vmatmul.mubr.bf16.gmra.mrb[0].mxu0 %v1884
    %v2185 = vpop.f32.mrb[0].mxu0
    %v2186 = vadd.f32 %v1957, %v2185
    %v2187 = vpop.f32.mrb[0].mxu0
    %v2188 = vpop.f32.mrb[0].mxu0
    %v2189 = vadd.f32 %v1957, %v2188
    %v2190 = vpop.f32.mrb[0].mxu0
    %2191 = vdwg.mxu0
    %2192 = vmatprep.subr.bf16.mxu0 0
    %2193 = vmatpush1.bf16.msra.mxu0 %v2103
    %2194 = vmatprep.subr.bf16.mxu0 0
    %2195 = vmatpush1.bf16.msra.mxu0 %v2104
    %2196 = vmatprep.subr.bf16.mxu0 0
    %2197 = vmatpush1.bf16.msra.mxu0 %v2105
    %2198 = vmatprep.subr.bf16.mxu0 0
    %2199 = vmatpush1.bf16.msra.mxu0 %v2106
    %2200 = vmatprep.subr.bf16.mxu0 0
    %2201 = vmatpush1.bf16.msra.mxu0 %v2107
    %2202 = vmatprep.subr.bf16.mxu0 0
    %2203 = vmatpush1.bf16.msra.mxu0 %v2108
    %2204 = vmatprep.subr.bf16.mxu0 0
    %2205 = vmatpush1.bf16.msra.mxu0 %v2109
    %2206 = vmatprep.subr.bf16.mxu0 0
    %2207 = vmatpush1.bf16.msra.mxu0 %v2110
    %2208 = vmatprep.subr.bf16.mxu0 0
    %2209 = vmatpush1.bf16.msra.mxu0 %v2111
    %2210 = vmatprep.subr.bf16.mxu0 0
    %2211 = vmatpush1.bf16.msra.mxu0 %v2112
    %2212 = vmatprep.subr.bf16.mxu0 0
    %2213 = vmatpush1.bf16.msra.mxu0 %v2113
    %2214 = vmatprep.subr.bf16.mxu0 0
    %2215 = vmatpush1.bf16.msra.mxu0 %v2114
    %2216 = vmatprep.subr.bf16.mxu0 0
    %2217 = vmatpush1.bf16.msra.mxu0 %v2115
    %2218 = vmatprep.subr.bf16.mxu0 0
    %2219 = vmatpush1.bf16.msra.mxu0 %v2116
    %2220 = vmatprep.subr.bf16.mxu0 0
    %2221 = vmatpush1.bf16.msra.mxu0 %v2117
    %2222 = vmatprep.subr.bf16.mxu0 0
    %2223 = vmatpush1.bf16.msra.mxu0 %v2118
    %2224 = vmatprep.mubr.bf16.mxu0 %v1887
    %2225 = vmatmul.mubr.bf16.gmra.mrb[0].mxu0 %v1886
    %v2226 = vpop.f32.mrb[0].mxu0
    %v2227 = vadd.f32 %v2186, %v2226
    %v2228 = vpop.f32.mrb[0].mxu0
    %v2229 = vpop.f32.mrb[0].mxu0
    %v2230 = vadd.f32 %v2189, %v2229
    %v2231 = vpop.f32.mrb[0].mxu0
    %2232 = vdwg.mxu0
    %v2233 = vmax.f32 %v2227, 0.0
    %v2234 = vmax.f32 %v2230, 0.0
    %v2235 = vpack.c.bf16 %v2234, %v2233
    %v2236 = vld [vmem:[#allocation8] sm:$0xf]
    %v2237 = vld [vmem:[#allocation8 + $0x4] sm:$0xf]
    %v2238 = vld [vmem:[#allocation8 + $0x8] sm:$0xf]
    %v2239 = vld [vmem:[#allocation8 + $0xc] sm:$0xf]
    %v2240 = vld [vmem:[#allocation8 + $0x10] sm:$0xf]
    %v2241 = vld [vmem:[#allocation8 + $0x14] sm:$0xf]
    %v2242 = vld [vmem:[#allocation8 + $0x18] sm:$0xf]
    %v2243 = vld [vmem:[#allocation8 + $0x1c] sm:$0xf]
    %v2244 = vld [vmem:[#allocation8 + $0x20] sm:$0xf]
    %v2245 = vld [vmem:[#allocation8 + $0x24] sm:$0xf]
    %v2246 = vld [vmem:[#allocation8 + $0x28] sm:$0xf]
    %v2247 = vld [vmem:[#allocation8 + $0x2c] sm:$0xf]
    %v2248 = vld [vmem:[#allocation8 + $0x30] sm:$0xf]
    %v2249 = vld [vmem:[#allocation8 + $0x34] sm:$0xf]
    %v2250 = vld [vmem:[#allocation8 + $0x38] sm:$0xf]
    %v2251 = vld [vmem:[#allocation8 + $0x3c] sm:$0xf]
    %v2252 = vld [vmem:[%s6] sm:$0x1]
    %v2254 = vlaneseq
    %v2255 = vshrl.u32 %v2254, 7
    %v2256 = vsub.s32 0, %v2255
    %v2257 = vrot.slane %v2252, %v2256
    %v2275 = vunpack.c.l.b16 %v2236
    %v2276 = vunpack.c.l.b16 %v2237
    %v2277 = vunpack.c.l.b16 %v2238
    %v2278 = vunpack.c.l.b16 %v2239
    %v2279 = vunpack.c.l.b16 %v2240
    %v2280 = vunpack.c.l.b16 %v2241
    %v2281 = vunpack.c.l.b16 %v2242
    %v2282 = vunpack.c.l.b16 %v2243
    %v2283 = vunpack.c.l.b16 %v2244
    %v2284 = vunpack.c.l.b16 %v2245
    %v2285 = vunpack.c.l.b16 %v2246
    %v2286 = vunpack.c.l.b16 %v2247
    %v2287 = vunpack.c.l.b16 %v2248
    %v2288 = vunpack.c.l.b16 %v2249
    %v2289 = vunpack.c.l.b16 %v2250
    %v2290 = vunpack.c.l.b16 %v2251
    %v2291 = vpack.c.b16 %v2276, %v2275
    %v2292 = vpack.c.b16 %v2278, %v2277
    %v2293 = vpack.c.b16 %v2280, %v2279
    %v2294 = vpack.c.b16 %v2282, %v2281
    %v2295 = vpack.c.b16 %v2284, %v2283
    %v2296 = vpack.c.b16 %v2286, %v2285
    %v2297 = vpack.c.b16 %v2288, %v2287
    %v2298 = vpack.c.b16 %v2290, %v2289
    %2307 = vmatprep.subr.bf16.mxu0 0
    %2308 = vmatpush1.bf16.msra.mxu0 %v2291
    %2309 = vmatprep.subr.bf16.mxu0 0
    %2310 = vmatpush1.bf16.msra.mxu0 %v2292
    %2311 = vmatprep.subr.bf16.mxu0 0
    %2312 = vmatpush1.bf16.msra.mxu0 %v2293
    %2313 = vmatprep.subr.bf16.mxu0 0
    %2314 = vmatpush1.bf16.msra.mxu0 %v2294
    %2315 = vmatprep.subr.bf16.mxu0 0
    %2316 = vmatpush1.bf16.msra.mxu0 %v2295
    %2317 = vmatprep.subr.bf16.mxu0 0
    %2318 = vmatpush1.bf16.msra.mxu0 %v2296
    %2319 = vmatprep.subr.bf16.mxu0 0
    %2320 = vmatpush1.bf16.msra.mxu0 %v2297
    %2321 = vmatprep.subr.bf16.mxu0 0
    %2322 = vmatpush1.bf16.msra.mxu0 %v2298
    %2323 = vmatprep.subr.bf16.mxu0 0
    %2324 = vmatpush1.bf16.msra.mxu0 0
    %2325 = vmatprep.subr.bf16.mxu0 0
    %2326 = vmatpush1.bf16.msra.mxu0 0
    %2327 = vmatprep.subr.bf16.mxu0 0
    %2328 = vmatpush1.bf16.msra.mxu0 0
    %2329 = vmatprep.subr.bf16.mxu0 0
    %2330 = vmatpush1.bf16.msra.mxu0 0
    %2331 = vmatprep.subr.bf16.mxu0 0
    %2332 = vmatpush1.bf16.msra.mxu0 0
    %2333 = vmatprep.subr.bf16.mxu0 0
    %2334 = vmatpush1.bf16.msra.mxu0 0
    %2335 = vmatprep.subr.bf16.mxu0 0
    %2336 = vmatpush1.bf16.msra.mxu0 0
    %2337 = vmatprep.subr.bf16.mxu0 0
    %2338 = vmatpush1.bf16.msra.mxu0 0
    %2339 = vmatprep.mubr.bf16.mxu0 0
    %2340 = vmatmul.mubr.bf16.gmra.mrb[0].mxu0 %v2235
    %v2341 = vpop.f32.mrb[0].mxu0
    %v2342 = vadd.f32 %v2257, %v2341
    %v2343 = vpop.f32.mrb[0].mxu0
    %v2344 = vpop.f32.mrb[0].mxu0
    %v2345 = vadd.f32 %v2257, %v2344
    %v2346 = vpop.f32.mrb[0].mxu0
    %2347 = vdwg.mxu0
    %v2348 = vmax.f32 %v2342, 0.0
    %v2349 = vmax.f32 %v2345, 0.0
    %v2350 = vpack.c.bf16 %v2349, %v2348
    %v2351 = vld [vmem:[#allocation10] sm:$0xf]
    %v2352 = vld [vmem:[#allocation10 + $0x4] sm:$0xf]
    %v2353 = vld [vmem:[#allocation10 + $0x8] sm:$0xf]
    %v2354 = vld [vmem:[#allocation10 + $0xc] sm:$0xf]
    %v2355 = vld [vmem:[#allocation10 + $0x10] sm:$0xf]
    %v2356 = vld [vmem:[#allocation10 + $0x14] sm:$0xf]
    %v2357 = vld [vmem:[#allocation10 + $0x18] sm:$0xf]
    %v2358 = vld [vmem:[#allocation10 + $0x1c] sm:$0xf]
    %v2359 = vld [vmem:[#allocation10 + $0x20] sm:$0xf]
    %v2360 = vld [vmem:[#allocation10 + $0x24] sm:$0xf]
    %v2361 = vld [vmem:[#allocation10 + $0x28] sm:$0xf]
    %v2362 = vld [vmem:[#allocation10 + $0x2c] sm:$0xf]
    %v2363 = vld [vmem:[#allocation10 + $0x30] sm:$0xf]
    %v2364 = vld [vmem:[#allocation10 + $0x34] sm:$0xf]
    %v2365 = vld [vmem:[#allocation10 + $0x38] sm:$0xf]
    %v2366 = vld [vmem:[#allocation10 + $0x3c] sm:$0xf]
    %v2367 = vld [vmem:[%s8] sm:$0x1]
    %v2369 = vlaneseq
    %v2370 = vshrl.u32 %v2369, 7
    %v2371 = vsub.s32 0, %v2370
    %v2372 = vrot.slane %v2367, %v2371
    %v2390 = vunpack.c.l.b16 %v2351
    %v2391 = vunpack.c.l.b16 %v2352
    %v2392 = vunpack.c.l.b16 %v2353
    %v2393 = vunpack.c.l.b16 %v2354
    %v2394 = vunpack.c.l.b16 %v2355
    %v2395 = vunpack.c.l.b16 %v2356
    %v2396 = vunpack.c.l.b16 %v2357
    %v2397 = vunpack.c.l.b16 %v2358
    %v2398 = vunpack.c.l.b16 %v2359
    %v2399 = vunpack.c.l.b16 %v2360
    %v2400 = vunpack.c.l.b16 %v2361
    %v2401 = vunpack.c.l.b16 %v2362
    %v2402 = vunpack.c.l.b16 %v2363
    %v2403 = vunpack.c.l.b16 %v2364
    %v2404 = vunpack.c.l.b16 %v2365
    %v2405 = vunpack.c.l.b16 %v2366
    %v2406 = vpack.c.b16 %v2391, %v2390
    %v2407 = vpack.c.b16 %v2393, %v2392
    %v2408 = vpack.c.b16 %v2395, %v2394
    %v2409 = vpack.c.b16 %v2397, %v2396
    %v2410 = vpack.c.b16 %v2399, %v2398
    %v2411 = vpack.c.b16 %v2401, %v2400
    %v2412 = vpack.c.b16 %v2403, %v2402
    %v2413 = vpack.c.b16 %v2405, %v2404
    %2422 = vmatprep.subr.bf16.mxu0 0
    %2423 = vmatpush1.bf16.msra.mxu0 %v2406
    %2424 = vmatprep.subr.bf16.mxu0 0
    %2425 = vmatpush1.bf16.msra.mxu0 %v2407
    %2426 = vmatprep.subr.bf16.mxu0 0
    %2427 = vmatpush1.bf16.msra.mxu0 %v2408
    %2428 = vmatprep.subr.bf16.mxu0 0
    %2429 = vmatpush1.bf16.msra.mxu0 %v2409
    %2430 = vmatprep.subr.bf16.mxu0 0
    %2431 = vmatpush1.bf16.msra.mxu0 %v2410
    %2432 = vmatprep.subr.bf16.mxu0 0
    %2433 = vmatpush1.bf16.msra.mxu0 %v2411
    %2434 = vmatprep.subr.bf16.mxu0 0
    %2435 = vmatpush1.bf16.msra.mxu0 %v2412
    %2436 = vmatprep.subr.bf16.mxu0 0
    %2437 = vmatpush1.bf16.msra.mxu0 %v2413
    %2438 = vmatprep.subr.bf16.mxu0 0
    %2439 = vmatpush1.bf16.msra.mxu0 0
    %2440 = vmatprep.subr.bf16.mxu0 0
    %2441 = vmatpush1.bf16.msra.mxu0 0
    %2442 = vmatprep.subr.bf16.mxu0 0
    %2443 = vmatpush1.bf16.msra.mxu0 0
    %2444 = vmatprep.subr.bf16.mxu0 0
    %2445 = vmatpush1.bf16.msra.mxu0 0
    %2446 = vmatprep.subr.bf16.mxu0 0
    %2447 = vmatpush1.bf16.msra.mxu0 0
    %2448 = vmatprep.subr.bf16.mxu0 0
    %2449 = vmatpush1.bf16.msra.mxu0 0
    %2450 = vmatprep.subr.bf16.mxu0 0
    %2451 = vmatpush1.bf16.msra.mxu0 0
    %2452 = vmatprep.subr.bf16.mxu0 0
    %2453 = vmatpush1.bf16.msra.mxu0 0
    %2454 = vmatprep.mubr.bf16.mxu0 0
    %2455 = vmatmul.mubr.bf16.gmra.mrb[0].mxu0 %v2350
    %v2456 = vpop.f32.mrb[0].mxu0
    %v2457 = vadd.f32 %v2372, %v2456
    %v2458 = vpop.f32.mrb[0].mxu0
    %v2459 = vpop.f32.mrb[0].mxu0
    %v2460 = vadd.f32 %v2372, %v2459
    %v2461 = vpop.f32.mrb[0].mxu0
    %2462 = vdwg.mxu0
    %v2463 = vmax.f32 %v2457, 0.0
    %v2464 = vmax.f32 %v2460, 0.0
    %v2465 = vpack.c.bf16 %v2464, %v2463
    %v2466 = vld [vmem:[#allocation11] sm:$0xf]
    %v2467 = vld [vmem:[#allocation11 + $0x4] sm:$0xf]
    %v2468 = vld [vmem:[#allocation11 + $0x8] sm:$0xf]
    %v2469 = vld [vmem:[#allocation11 + $0xc] sm:$0xf]
    %v2470 = vld [vmem:[#allocation11 + $0x10] sm:$0xf]
    %v2471 = vld [vmem:[#allocation11 + $0x14] sm:$0xf]
    %v2472 = vld [vmem:[#allocation11 + $0x18] sm:$0xf]
    %v2473 = vld [vmem:[#allocation11 + $0x1c] sm:$0xf]
    %v2474 = vld [vmem:[#allocation11 + $0x20] sm:$0xf]
    %v2475 = vld [vmem:[#allocation11 + $0x24] sm:$0xf]
    %v2476 = vld [vmem:[#allocation11 + $0x28] sm:$0xf]
    %v2477 = vld [vmem:[#allocation11 + $0x2c] sm:$0xf]
    %v2478 = vld [vmem:[#allocation11 + $0x30] sm:$0xf]
    %v2479 = vld [vmem:[#allocation11 + $0x34] sm:$0xf]
    %v2480 = vld [vmem:[#allocation11 + $0x38] sm:$0xf]
    %v2481 = vld [vmem:[#allocation11 + $0x3c] sm:$0xf]
    %v2482 = vld [vmem:[%s10] sm:$0x1]
    %v2484 = vlaneseq
    %v2485 = vshrl.u32 %v2484, 7
    %v2486 = vsub.s32 0, %v2485
    %v2487 = vrot.slane %v2482, %v2486
    %v2505 = vunpack.c.l.b16 %v2466
    %v2506 = vunpack.c.l.b16 %v2467
    %v2507 = vunpack.c.l.b16 %v2468
    %v2508 = vunpack.c.l.b16 %v2469
    %v2509 = vunpack.c.l.b16 %v2470
    %v2510 = vunpack.c.l.b16 %v2471
    %v2511 = vunpack.c.l.b16 %v2472
    %v2512 = vunpack.c.l.b16 %v2473
    %v2513 = vunpack.c.l.b16 %v2474
    %v2514 = vunpack.c.l.b16 %v2475
    %v2515 = vunpack.c.l.b16 %v2476
    %v2516 = vunpack.c.l.b16 %v2477
    %v2517 = vunpack.c.l.b16 %v2478
    %v2518 = vunpack.c.l.b16 %v2479
    %v2519 = vunpack.c.l.b16 %v2480
    %v2520 = vunpack.c.l.b16 %v2481
    %v2521 = vpack.c.b16 %v2506, %v2505
    %v2522 = vpack.c.b16 %v2508, %v2507
    %v2523 = vpack.c.b16 %v2510, %v2509
    %v2524 = vpack.c.b16 %v2512, %v2511
    %v2525 = vpack.c.b16 %v2514, %v2513
    %v2526 = vpack.c.b16 %v2516, %v2515
    %v2527 = vpack.c.b16 %v2518, %v2517
    %v2528 = vpack.c.b16 %v2520, %v2519
    %2537 = vmatprep.subr.bf16.mxu0 0
    %2538 = vmatpush1.bf16.msra.mxu0 %v2521
    %2539 = vmatprep.subr.bf16.mxu0 0
    %2540 = vmatpush1.bf16.msra.mxu0 %v2522
    %2541 = vmatprep.subr.bf16.mxu0 0
    %2542 = vmatpush1.bf16.msra.mxu0 %v2523
    %2543 = vmatprep.subr.bf16.mxu0 0
    %2544 = vmatpush1.bf16.msra.mxu0 %v2524
    %2545 = vmatprep.subr.bf16.mxu0 0
    %2546 = vmatpush1.bf16.msra.mxu0 %v2525
    %2547 = vmatprep.subr.bf16.mxu0 0
    %2548 = vmatpush1.bf16.msra.mxu0 %v2526
    %2549 = vmatprep.subr.bf16.mxu0 0
    %2550 = vmatpush1.bf16.msra.mxu0 %v2527
    %2551 = vmatprep.subr.bf16.mxu0 0
    %2552 = vmatpush1.bf16.msra.mxu0 %v2528
    %2553 = vmatprep.subr.bf16.mxu0 0
    %2554 = vmatpush1.bf16.msra.mxu0 0
    %2555 = vmatprep.subr.bf16.mxu0 0
    %2556 = vmatpush1.bf16.msra.mxu0 0
    %2557 = vmatprep.subr.bf16.mxu0 0
    %2558 = vmatpush1.bf16.msra.mxu0 0
    %2559 = vmatprep.subr.bf16.mxu0 0
    %2560 = vmatpush1.bf16.msra.mxu0 0
    %2561 = vmatprep.subr.bf16.mxu0 0
    %2562 = vmatpush1.bf16.msra.mxu0 0
    %2563 = vmatprep.subr.bf16.mxu0 0
    %2564 = vmatpush1.bf16.msra.mxu0 0
    %2565 = vmatprep.subr.bf16.mxu0 0
    %2566 = vmatpush1.bf16.msra.mxu0 0
    %2567 = vmatprep.subr.bf16.mxu0 0
    %2568 = vmatpush1.bf16.msra.mxu0 0
    %2569 = vmatprep.mubr.bf16.mxu0 0
    %2570 = vmatmul.mubr.bf16.gmra.mrb[0].mxu0 %v2465
    %v2571 = vpop.f32.mrb[0].mxu0
    %v2572 = vadd.f32 %v2487, %v2571
    %v2573 = vpop.f32.mrb[0].mxu0
    %v2574 = vpop.f32.mrb[0].mxu0
    %v2575 = vadd.f32 %v2487, %v2574
    %v2576 = vpop.f32.mrb[0].mxu0
    %2577 = vdwg.mxu0
    %2578 = vst [vmem:[#allocation13] sm:$0xff] %v2572
    %2579 = vst [vmem:[#allocation13 + $0x8] sm:$0xff] %v2575
    // Predicated region
    $region70: #{tpu_custom_call.1} parent=1 // pred_check
      _
    $region71: #{tpu_custom_call.1} parent=1 // pred_check_branch
      %2581 = sbr.rel (0) target = $region73
    $region72: #{tpu_custom_call.1} parent=1 // pred_region
      %s2583 = ssub.s32 256, 256
      %2584 = vsyncadd [#allocation4], %s2583
      %s2585 = sshll.u32 [#allocation13], 4
      %s2586 = int_to_ptr.vmem [resolvable:$true] %s2585
      %2591 = dma.vmem_to_hbm [thread:$0]  %s2586, 256, %s11, [#allocation4], 128, 128, 8
    $region73: #{tpu_custom_call.1} parent=1 // pred_fallthru
      _
    // Predicated region
    $region74: #{tpu_custom_call.1} parent=1 // pred_check
      _
    $region75: #{tpu_custom_call.1} parent=1 // pred_check_branch
      %2593 = sbr.rel (0) target = $region77
    $region76: #{tpu_custom_call.1} parent=1 // pred_region
      %2594 = dma.done [#allocation4], 256
    $region77: #{tpu_custom_call.1} parent=1 // pred_fallthru
      _
    %2595 = vsyncpa [#allocation3], 1
    %2596 = vsyncpa [#allocation6], 1
    %2597 = vsyncpa [#allocation9], 1
    %2598 = vsyncpa [#allocation12], 1
    %2599 = vsyncpa [#allocation4], 1

// kernel: tpu_custom_call.1
$region0: #{tpu_custom_call.1}
  #allocation0 [shape = 'u32[]', space=smem, size = 0x4, offset = 0x4, fixed_abs, tag = 'smem constant byte address 0x4 - core index']
  #allocation1 [shape = 'u32[144,128]{1,0:T(1,128)}', space=vmem, size = 0x12000, scoped, tag = 'internal scratch']
  %s0 = inlined_call_operand.hbm [shape: bf16[16,896], index: 0, kind: input, shape index: {}]
  %s1 = inlined_call_operand.hbm [shape: bf16[896,512], index: 1, kind: input, shape index: {}]
  %s2 = inlined_call_operand.vmem [shape: f32[1,512], index: 2, kind: input, shape index: {}]
  %s3 = inlined_call_operand.hbm [shape: bf16[512,128], index: 3, kind: input, shape index: {}]
  %s4 = inlined_call_operand.vmem [shape: f32[1,128], index: 4, kind: input, shape index: {}]
  %s5 = inlined_call_operand.hbm [shape: bf16[128,128], index: 5, kind: input, shape index: {}]
  %s6 = inlined_call_operand.vmem [shape: f32[1,128], index: 6, kind: input, shape index: {}]
  %s7 = inlined_call_operand.hbm [shape: bf16[128,128], index: 7, kind: input, shape index: {}]
  %s8 = inlined_call_operand.vmem [shape: f32[1,128], index: 8, kind: input, shape index: {}]
  %s9 = inlined_call_operand.hbm [shape: bf16[128,128], index: 9, kind: input, shape index: {}]
  %s10 = inlined_call_operand.vmem [shape: f32[1,128], index: 10, kind: input, shape index: {}]
  %s11 = inlined_call_operand.hbm [shape: f32[16,128], index: 11, kind: output, shape index: {}]
  %s12 = sld [smem:[#allocation0]]
  $region78: #{tpu_custom_call.1} parent=0
    _
  %s14 = ssub.s32 1, %s12
  %s15 = scalar_select 0, %s14, %s12
  $region1: #{tpu_custom_call.1} parent=0
    #allocation2 [shape = 'u8[28672]{0}', space=vmem, size = 0x7000, scoped, tag = 'input window, operand 0, single buffered']
    #allocation3 [shape = 's32[1]{0}', space=sflag, size = 0x4, scoped, tag = 'scoped memory for tpu_custom_call.1']
    #allocation4 [shape = 's32[1]{0}', space=sflag, size = 0x4, scoped, tag = 'scoped memory for tpu_custom_call.1']
    #allocation5 [shape = 'u8[917504]{0}', space=vmem, size = 0xe0000, scoped, tag = 'input window, operand 1, single buffered']
    #allocation6 [shape = 's32[1]{0}', space=sflag, size = 0x4, scoped, tag = 'scoped memory for tpu_custom_call.1']
    #allocation7 [shape = 'u8[131072]{0}', space=vmem, size = 0x20000, scoped, tag = 'input window, operand 3, single buffered']
    #allocation8 [shape = 'u8[32768]{0}', space=vmem, size = 0x8000, scoped, tag = 'input window, operand 5, single buffered']
    #allocation9 [shape = 's32[1]{0}', space=sflag, size = 0x4, scoped, tag = 'scoped memory for tpu_custom_call.1']
    #allocation10 [shape = 'u8[32768]{0}', space=vmem, size = 0x8000, scoped, tag = 'input window, operand 7, single buffered']
    #allocation11 [shape = 'u8[32768]{0}', space=vmem, size = 0x8000, scoped, tag = 'input window, operand 9, single buffered']
    #allocation12 [shape = 's32[1]{0}', space=sflag, size = 0x4, scoped, tag = 'scoped memory for tpu_custom_call.1']
    #allocation13 [shape = 'u8[8192]{0}', space=vmem, size = 0x2000, scoped, tag = 'output window, operand 0, single buffered']
    %16 = vsyncpa [#allocation3], 0
    %17 = vsyncpa [#allocation6], 0
    %18 = vsyncpa [#allocation9], 0
    %19 = vsyncpa [#allocation12], 0
    %20 = vsyncpa [#allocation4], 0
    // Predicated region
    $region2: #{tpu_custom_call.1} parent=1 // pred_check
      _
    $region3: #{tpu_custom_call.1} parent=1 // pred_check_branch
      %22 = sbr.rel (0) target = $region5
    $region4: #{tpu_custom_call.1} parent=1 // pred_region
      %s24 = ssub.s32 896, 896
      %25 = vsyncadd [#allocation3], %s24
      %s26 = sshll.u32 [#allocation2], 4
      %s27 = int_to_ptr.vmem [resolvable:$true] %s26
      %32 = dma.hbm_to_vmem [thread:$0]  %s0, 896, %s27, [#allocation3], 448, 448, 28
    $region5: #{tpu_custom_call.1} parent=1 // pred_fallthru
      _
    // Predicated region
    $region6: #{tpu_custom_call.1} parent=1 // pred_check
      _
    $region7: #{tpu_custom_call.1} parent=1 // pred_check_branch
      %34 = sbr.rel (0) target = $region9
    $region8: #{tpu_custom_call.1} parent=1 // pred_region
      %s36 = ssub.s32 28672, 28672
      %37 = vsyncadd [#allocation6], %s36
      %s38 = sshll.u32 [#allocation5], 4
      %s39 = int_to_ptr.vmem [resolvable:$true] %s38
      %44 = dma.hbm_to_vmem [thread:$0]  %s1, 28672, %s39, [#allocation6], 256, 256, 16
    $region9: #{tpu_custom_call.1} parent=1 // pred_fallthru
      _
    // Predicated region
    $region10: #{tpu_custom_call.1} parent=1 // pred_check
      _
    $region11: #{tpu_custom_call.1} parent=1 // pred_check_branch
      %46 = sbr.rel (0) target = $region13
    $region12: #{tpu_custom_call.1} parent=1 // pred_region
      _
    $region13: #{tpu_custom_call.1} parent=1 // pred_fallthru
      _
    // Predicated region
    $region14: #{tpu_custom_call.1} parent=1 // pred_check
      _
    $region15: #{tpu_custom_call.1} parent=1 // pred_check_branch
      %48 = sbr.rel (0) target = $region17
    $region16: #{tpu_custom_call.1} parent=1 // pred_region
      %s50 = ssub.s32 4096, 4096
      %51 = vsyncadd [#allocation6], %s50
      %s52 = sshll.u32 [#allocation7], 4
      %s53 = int_to_ptr.vmem [resolvable:$true] %s52
      %58 = dma.hbm_to_vmem [thread:$0]  %s3, 4096, %s53, [#allocation6], 64, 64, 4
    $region17: #{tpu_custom_call.1} parent=1 // pred_fallthru
      _
    // Predicated region
    $region18: #{tpu_custom_call.1} parent=1 // pred_check
      _
    $region19: #{tpu_custom_call.1} parent=1 // pred_check_branch
      %60 = sbr.rel (0) target = $region21
    $region20: #{tpu_custom_call.1} parent=1 // pred_region
      _
    $region21: #{tpu_custom_call.1} parent=1 // pred_fallthru
      _
    // Predicated region
    $region22: #{tpu_custom_call.1} parent=1 // pred_check
      _
    $region23: #{tpu_custom_call.1} parent=1 // pred_check_branch
      %62 = sbr.rel (0) target = $region25
    $region24: #{tpu_custom_call.1} parent=1 // pred_region
      %s64 = ssub.s32 1024, 1024
      %65 = vsyncadd [#allocation9], %s64
      %s66 = sshll.u32 [#allocation8], 4
      %s67 = int_to_ptr.vmem [resolvable:$true] %s66
      %72 = dma.hbm_to_vmem [thread:$0]  %s5, 1024, %s67, [#allocation9], 64, 64, 4
    $region25: #{tpu_custom_call.1} parent=1 // pred_fallthru
      _
    // Predicated region
    $region26: #{tpu_custom_call.1} parent=1 // pred_check
      _
    $region27: #{tpu_custom_call.1} parent=1 // pred_check_branch
      %74 = sbr.rel (0) target = $region29
    $region28: #{tpu_custom_call.1} parent=1 // pred_region
      _
    $region29: #{tpu_custom_call.1} parent=1 // pred_fallthru
      _
    // Predicated region
    $region30: #{tpu_custom_call.1} parent=1 // pred_check
      _
    $region31: #{tpu_custom_call.1} parent=1 // pred_check_branch
      %76 = sbr.rel (0) target = $region33
    $region32: #{tpu_custom_call.1} parent=1 // pred_region
      %s78 = ssub.s32 1024, 1024
      %79 = vsyncadd [#allocation9], %s78
      %s80 = sshll.u32 [#allocation10], 4
      %s81 = int_to_ptr.vmem [resolvable:$true] %s80
      %86 = dma.hbm_to_vmem [thread:$0]  %s7, 1024, %s81, [#allocation9], 64, 64, 4
    $region33: #{tpu_custom_call.1} parent=1 // pred_fallthru
      _
    // Predicated region
    $region34: #{tpu_custom_call.1} parent=1 // pred_check
      _
    $region35: #{tpu_custom_call.1} parent=1 // pred_check_branch
      %88 = sbr.rel (0) target = $region37
    $region36: #{tpu_custom_call.1} parent=1 // pred_region
      _
    $region37: #{tpu_custom_call.1} parent=1 // pred_fallthru
      _
    // Predicated region
    $region38: #{tpu_custom_call.1} parent=1 // pred_check
      _
    $region39: #{tpu_custom_call.1} parent=1 // pred_check_branch
      %90 = sbr.rel (0) target = $region41
    $region40: #{tpu_custom_call.1} parent=1 // pred_region
      %s92 = ssub.s32 1024, 1024
      %93 = vsyncadd [#allocation12], %s92
      %s94 = sshll.u32 [#allocation11], 4
      %s95 = int_to_ptr.vmem [resolvable:$true] %s94
      %100 = dma.hbm_to_vmem [thread:$0]  %s9, 1024, %s95, [#allocation12], 64, 64, 4
    $region41: #{tpu_custom_call.1} parent=1 // pred_fallthru
      _
    // Predicated region
    $region42: #{tpu_custom_call.1} parent=1 // pred_check
      _
    $region43: #{tpu_custom_call.1} parent=1 // pred_check_branch
      %102 = sbr.rel (0) target = $region45
    $region44: #{tpu_custom_call.1} parent=1 // pred_region
      _
    $region45: #{tpu_custom_call.1} parent=1 // pred_fallthru
      _
    // Predicated region
    $region46: #{tpu_custom_call.1} parent=1 // pred_check
      _
    $region47: #{tpu_custom_call.1} parent=1 // pred_check_branch
      %104 = sbr.rel (0) target = $region49
    $region48: #{tpu_custom_call.1} parent=1 // pred_region
      %105 = dma.done [#allocation3], 896
    $region49: #{tpu_custom_call.1} parent=1 // pred_fallthru
      _
    // Predicated region
    $region50: #{tpu_custom_call.1} parent=1 // pred_check
      _
    $region51: #{tpu_custom_call.1} parent=1 // pred_check_branch
      %107 = sbr.rel (0) target = $region53
    $region52: #{tpu_custom_call.1} parent=1 // pred_region
      %108 = dma.done [#allocation6], 28672
    $region53: #{tpu_custom_call.1} parent=1 // pred_fallthru
      _
    // Predicated region
    $region54: #{tpu_custom_call.1} parent=1 // pred_check
      _
    $region55: #{tpu_custom_call.1} parent=1 // pred_check_branch
      %110 = sbr.rel (0) target = $region57
    $region56: #{tpu_custom_call.1} parent=1 // pred_region
      %111 = dma.done [#allocation6], 4096
    $region57: #{tpu_custom_call.1} parent=1 // pred_fallthru
      _
    // Predicated region
    $region58: #{tpu_custom_call.1} parent=1 // pred_check
      _
    $region59: #{tpu_custom_call.1} parent=1 // pred_check_branch
      %113 = sbr.rel (0) target = $region61
    $region60: #{tpu_custom_call.1} parent=1 // pred_region
      %114 = dma.done [#allocation9], 1024
    $region61: #{tpu_custom_call.1} parent=1 // pred_fallthru
      _
    // Predicated region
    $region62: #{tpu_custom_call.1} parent=1 // pred_check
      _
    $region63: #{tpu_custom_call.1} parent=1 // pred_check_branch
      %116 = sbr.rel (0) target = $region65
    $region64: #{tpu_custom_call.1} parent=1 // pred_region
      %117 = dma.done [#allocation9], 1024
    $region65: #{tpu_custom_call.1} parent=1 // pred_fallthru
      _
    // Predicated region
    $region66: #{tpu_custom_call.1} parent=1 // pred_check
      _
    $region67: #{tpu_custom_call.1} parent=1 // pred_check_branch
      %119 = sbr.rel (0) target = $region69
    $region68: #{tpu_custom_call.1} parent=1 // pred_region
      %120 = dma.done [#allocation12], 1024
    $region69: #{tpu_custom_call.1} parent=1 // pred_fallthru
      _
    %v122 = vld [vmem:[#allocation2] sm:$0xff]
    %v123 = vld [vmem:[#allocation2 + $0x8] sm:$0xff]
    %v124 = vld [vmem:[#allocation2 + $0x10] sm:$0xff]
    %v125 = vld [vmem:[#allocation2 + $0x18] sm:$0xf]
    %v126 = vld [vmem:[#allocation2 + $0x1c] sm:$0xff]
    %v127 = vld [vmem:[#allocation2 + $0x24] sm:$0xff]
    %v128 = vld [vmem:[#allocation2 + $0x2c] sm:$0xff]
    %v129 = vld [vmem:[#allocation2 + $0x34] sm:$0xf]
    %v130 = vld [vmem:[#allocation5] sm:$0xff]
    %v131 = vld [vmem:[#allocation5 + $0x8] sm:$0xff]
    %v132 = vld [vmem:[#allocation5 + $0x10] sm:$0xff]
    %v133 = vld [vmem:[#allocation5 + $0x18] sm:$0xff]
    %v134 = vld [vmem:[#allocation5 + $0x20] sm:$0xff]
    %v135 = vld [vmem:[#allocation5 + $0x28] sm:$0xff]
    %v136 = vld [vmem:[#allocation5 + $0x30] sm:$0xff]
    %v137 = vld [vmem:[#allocation5 + $0x38] sm:$0xff]
    %v138 = vld [vmem:[#allocation5 + $0x40] sm:$0xff]
    %v139 = vld [vmem:[#allocation5 + $0x48] sm:$0xff]
    %v140 = vld [vmem:[#allocation5 + $0x50] sm:$0xff]
    %v141 = vld [vmem:[#allocation5 + $0x58] sm:$0xff]
    %v142 = vld [vmem:[#allocation5 + $0x60] sm:$0xff]
    %v143 = vld [vmem:[#allocation5 + $0x68] sm:$0xff]
    %v144 = vld [vmem:[#allocation5 + $0x70] sm:$0xff]
    %v145 = vld [vmem:[#allocation5 + $0x78] sm:$0xff]
    %v146 = vld [vmem:[#allocation5 + $0x80] sm:$0xff]
    %v147 = vld [vmem:[#allocation5 + $0x88] sm:$0xff]
    %v148 = vld [vmem:[#allocation5 + $0x90] sm:$0xff]
    %v149 = vld [vmem:[#allocation5 + $0x98] sm:$0xff]
    %v150 = vld [vmem:[#allocation5 + $0xa0] sm:$0xff]
    %v151 = vld [vmem:[#allocation5 + $0xa8] sm:$0xff]
    %v152 = vld [vmem:[#allocation5 + $0xb0] sm:$0xff]
    %v153 = vld [vmem:[#allocation5 + $0xb8] sm:$0xff]
    %v154 = vld [vmem:[#allocation5 + $0xc0] sm:$0xff]
    %v155 = vld [vmem:[#allocation5 + $0xc8] sm:$0xff]
    %v156 = vld [vmem:[#allocation5 + $0xd0] sm:$0xff]
    %v157 = vld [vmem:[#allocation5 + $0xd8] sm:$0xff]
    %v158 = vld [vmem:[#allocation5 + $0xe0] sm:$0xff]
    %v159 = vld [vmem:[#allocation5 + $0xe8] sm:$0xff]
    %v160 = vld [vmem:[#allocation5 + $0xf0] sm:$0xff]
    %v161 = vld [vmem:[#allocation5 + $0xf8] sm:$0xff]
    %v162 = vld [vmem:[#allocation5 + $0x100] sm:$0xff]
    %v163 = vld [vmem:[#allocation5 + $0x108] sm:$0xff]
    %v164 = vld [vmem:[#allocation5 + $0x110] sm:$0xff]
    %v165 = vld [vmem:[#allocation5 + $0x118] sm:$0xff]
    %v166 = vld [vmem:[#allocation5 + $0x120] sm:$0xff]
    %v167 = vld [vmem:[#allocation5 + $0x128] sm:$0xff]
    %v168 = vld [vmem:[#allocation5 + $0x130] sm:$0xff]
    %v169 = vld [vmem:[#allocation5 + $0x138] sm:$0xff]
    %v170 = vld [vmem:[#allocation5 + $0x140] sm:$0xff]
    %v171 = vld [vmem:[#allocation5 + $0x148] sm:$0xff]
    %v172 = vld [vmem:[#allocation5 + $0x150] sm:$0xff]
    %v173 = vld [vmem:[#allocation5 + $0x158] sm:$0xff]
    %v174 = vld [vmem:[#allocation5 + $0x160] sm:$0xff]
    %v175 = vld [vmem:[#allocation5 + $0x168] sm:$0xff]
    %v176 = vld [vmem:[#allocation5 + $0x170] sm:$0xff]
    %v177 = vld [vmem:[#allocation5 + $0x178] sm:$0xff]
    %v178 = vld [vmem:[#allocation5 + $0x180] sm:$0xff]
    %v179 = vld [vmem:[#allocation5 + $0x188] sm:$0xff]
    %v180 = vld [vmem:[#allocation5 + $0x190] sm:$0xff]
    %v181 = vld [vmem:[#allocation5 + $0x198] sm:$0xff]
    %v182 = vld [vmem:[#allocation5 + $0x1a0] sm:$0xff]
    %v183 = vld [vmem:[#allocation5 + $0x1a8] sm:$0xff]
    %v184 = vld [vmem:[#allocation5 + $0x1b0] sm:$0xff]
    %v185 = vld [vmem:[#allocation5 + $0x1b8] sm:$0xff]
    %v186 = vld [vmem:[#allocation5 + $0x1c0] sm:$0xff]
    %v187 = vld [vmem:[#allocation5 + $0x1c8] sm:$0xff]
    %v188 = vld [vmem:[#allocation5 + $0x1d0] sm:$0xff]
    %v189 = vld [vmem:[#allocation5 + $0x1d8] sm:$0xff]
    %v190 = vld [vmem:[#allocation5 + $0x1e0] sm:$0xff]
    %v191 = vld [vmem:[#allocation5 + $0x1e8] sm:$0xff]
    %v192 = vld [vmem:[#allocation5 + $0x1f0] sm:$0xff]
    %v193 = vld [vmem:[#allocation5 + $0x1f8] sm:$0xff]
    %v194 = vld [vmem:[#allocation5 + $0x200] sm:$0xff]
    %v195 = vld [vmem:[#allocation5 + $0x208] sm:$0xff]
    %v196 = vld [vmem:[#allocation5 + $0x210] sm:$0xff]
    %v197 = vld [vmem:[#allocation5 + $0x218] sm:$0xff]
    %v198 = vld [vmem:[#allocation5 + $0x220] sm:$0xff]
    %v199 = vld [vmem:[#allocation5 + $0x228] sm:$0xff]
    %v200 = vld [vmem:[#allocation5 + $0x230] sm:$0xff]
    %v201 = vld [vmem:[#allocation5 + $0x238] sm:$0xff]
    %v202 = vld [vmem:[#allocation5 + $0x240] sm:$0xff]
    %v203 = vld [vmem:[#allocation5 + $0x248] sm:$0xff]
    %v204 = vld [vmem:[#allocation5 + $0x250] sm:$0xff]
    %v205 = vld [vmem:[#allocation5 + $0x258] sm:$0xff]
    %v206 = vld [vmem:[#allocation5 + $0x260] sm:$0xff]
    %v207 = vld [vmem:[#allocation5 + $0x268] sm:$0xff]
    %v208 = vld [vmem:[#allocation5 + $0x270] sm:$0xff]
    %v209 = vld [vmem:[#allocation5 + $0x278] sm:$0xff]
    %v210 = vld [vmem:[#allocation5 + $0x280] sm:$0xff]
    %v211 = vld [vmem:[#allocation5 + $0x288] sm:$0xff]
    %v212 = vld [vmem:[#allocation5 + $0x290] sm:$0xff]
    %v213 = vld [vmem:[#allocation5 + $0x298] sm:$0xff]
    %v214 = vld [vmem:[#allocation5 + $0x2a0] sm:$0xff]
    %v215 = vld [vmem:[#allocation5 + $0x2a8] sm:$0xff]
    %v216 = vld [vmem:[#allocation5 + $0x2b0] sm:$0xff]
    %v217 = vld [vmem:[#allocation5 + $0x2b8] sm:$0xff]
    %v218 = vld [vmem:[#allocation5 + $0x2c0] sm:$0xff]
    %v219 = vld [vmem:[#allocation5 + $0x2c8] sm:$0xff]
    %v220 = vld [vmem:[#allocation5 + $0x2d0] sm:$0xff]
    %v221 = vld [vmem:[#allocation5 + $0x2d8] sm:$0xff]
    %v222 = vld [vmem:[#allocation5 + $0x2e0] sm:$0xff]
    %v223 = vld [vmem:[#allocation5 + $0x2e8] sm:$0xff]
    %v224 = vld [vmem:[#allocation5 + $0x2f0] sm:$0xff]
    %v225 = vld [vmem:[#allocation5 + $0x2f8] sm:$0xff]
    %v226 = vld [vmem:[#allocation5 + $0x300] sm:$0xff]
    %v227 = vld [vmem:[#allocation5 + $0x308] sm:$0xff]
    %v228 = vld [vmem:[#allocation5 + $0x310] sm:$0xff]
    %v229 = vld [vmem:[#allocation5 + $0x318] sm:$0xff]
    %v230 = vld [vmem:[#allocation5 + $0x320] sm:$0xff]
    %v231 = vld [vmem:[#allocation5 + $0x328] sm:$0xff]
    %v232 = vld [vmem:[#allocation5 + $0x330] sm:$0xff]
    %v233 = vld [vmem:[#allocation5 + $0x338] sm:$0xff]
    %v234 = vld [vmem:[#allocation5 + $0x340] sm:$0xff]
    %v235 = vld [vmem:[#allocation5 + $0x348] sm:$0xff]
    %v236 = vld [vmem:[#allocation5 + $0x350] sm:$0xff]
    %v237 = vld [vmem:[#allocation5 + $0x358] sm:$0xff]
    %v238 = vld [vmem:[#allocation5 + $0x360] sm:$0xff]
    %v239 = vld [vmem:[#allocation5 + $0x368] sm:$0xff]
    %v240 = vld [vmem:[#allocation5 + $0x370] sm:$0xff]
    %v241 = vld [vmem:[#allocation5 + $0x378] sm:$0xff]
    %v242 = vld [vmem:[#allocation5 + $0x380] sm:$0xff]
    %v243 = vld [vmem:[#allocation5 + $0x388] sm:$0xff]
    %v244 = vld [vmem:[#allocation5 + $0x390] sm:$0xff]
    %v245 = vld [vmem:[#allocation5 + $0x398] sm:$0xff]
    %v246 = vld [vmem:[#allocation5 + $0x3a0] sm:$0xff]
    %v247 = vld [vmem:[#allocation5 + $0x3a8] sm:$0xff]
    %v248 = vld [vmem:[#allocation5 + $0x3b0] sm:$0xff]
    %v249 = vld [vmem:[#allocation5 + $0x3b8] sm:$0xff]
    %v250 = vld [vmem:[#allocation5 + $0x3c0] sm:$0xff]
    %v251 = vld [vmem:[#allocation5 + $0x3c8] sm:$0xff]
    %v252 = vld [vmem:[#allocation5 + $0x3d0] sm:$0xff]
    %v253 = vld [vmem:[#allocation5 + $0x3d8] sm:$0xff]
    %v254 = vld [vmem:[#allocation5 + $0x3e0] sm:$0xff]
    %v255 = vld [vmem:[#allocation5 + $0x3e8] sm:$0xff]
    %v256 = vld [vmem:[#allocation5 + $0x3f0] sm:$0xff]
    %v257 = vld [vmem:[#allocation5 + $0x3f8] sm:$0xff]
    %v258 = vld [vmem:[#allocation5 + $0x400] sm:$0xff]
    %v259 = vld [vmem:[#allocation5 + $0x408] sm:$0xff]
    %v260 = vld [vmem:[#allocation5 + $0x410] sm:$0xff]
    %v261 = vld [vmem:[#allocation5 + $0x418] sm:$0xff]
    %v262 = vld [vmem:[#allocation5 + $0x420] sm:$0xff]
    %v263 = vld [vmem:[#allocation5 + $0x428] sm:$0xff]
    %v264 = vld [vmem:[#allocation5 + $0x430] sm:$0xff]
    %v265 = vld [vmem:[#allocation5 + $0x438] sm:$0xff]
    %v266 = vld [vmem:[#allocation5 + $0x440] sm:$0xff]
    %v267 = vld [vmem:[#allocation5 + $0x448] sm:$0xff]
    %v268 = vld [vmem:[#allocation5 + $0x450] sm:$0xff]
    %v269 = vld [vmem:[#allocation5 + $0x458] sm:$0xff]
    %v270 = vld [vmem:[#allocation5 + $0x460] sm:$0xff]
    %v271 = vld [vmem:[#allocation5 + $0x468] sm:$0xff]
    %v272 = vld [vmem:[#allocation5 + $0x470] sm:$0xff]
    %v273 = vld [vmem:[#allocation5 + $0x478] sm:$0xff]
    %v274 = vld [vmem:[#allocation5 + $0x480] sm:$0xff]
    %v275 = vld [vmem:[#allocation5 + $0x488] sm:$0xff]
    %v276 = vld [vmem:[#allocation5 + $0x490] sm:$0xff]
    %v277 = vld [vmem:[#allocation5 + $0x498] sm:$0xff]
    %v278 = vld [vmem:[#allocation5 + $0x4a0] sm:$0xff]
    %v279 = vld [vmem:[#allocation5 + $0x4a8] sm:$0xff]
    %v280 = vld [vmem:[#allocation5 + $0x4b0] sm:$0xff]
    %v281 = vld [vmem:[#allocation5 + $0x4b8] sm:$0xff]
    %v282 = vld [vmem:[#allocation5 + $0x4c0] sm:$0xff]
    %v283 = vld [vmem:[#allocation5 + $0x4c8] sm:$0xff]
    %v284 = vld [vmem:[#allocation5 + $0x4d0] sm:$0xff]
    %v285 = vld [vmem:[#allocation5 + $0x4d8] sm:$0xff]
    %v286 = vld [vmem:[#allocation5 + $0x4e0] sm:$0xff]
    %v287 = vld [vmem:[#allocation5 + $0x4e8] sm:$0xff]
    %v288 = vld [vmem:[#allocation5 + $0x4f0] sm:$0xff]
    %v289 = vld [vmem:[#allocation5 + $0x4f8] sm:$0xff]
    %v290 = vld [vmem:[#allocation5 + $0x500] sm:$0xff]
    %v291 = vld [vmem:[#allocation5 + $0x508] sm:$0xff]
    %v292 = vld [vmem:[#allocation5 + $0x510] sm:$0xff]
    %v293 = vld [vmem:[#allocation5 + $0x518] sm:$0xff]
    %v294 = vld [vmem:[#allocation5 + $0x520] sm:$0xff]
    %v295 = vld [vmem:[#allocation5 + $0x528] sm:$0xff]
    %v296 = vld [vmem:[#allocation5 + $0x530] sm:$0xff]
    %v297 = vld [vmem:[#allocation5 + $0x538] sm:$0xff]
    %v298 = vld [vmem:[#allocation5 + $0x540] sm:$0xff]
    %v299 = vld [vmem:[#allocation5 + $0x548] sm:$0xff]
    %v300 = vld [vmem:[#allocation5 + $0x550] sm:$0xff]
    %v301 = vld [vmem:[#allocation5 + $0x558] sm:$0xff]
    %v302 = vld [vmem:[#allocation5 + $0x560] sm:$0xff]
    %v303 = vld [vmem:[#allocation5 + $0x568] sm:$0xff]
    %v304 = vld [vmem:[#allocation5 + $0x570] sm:$0xff]
    %v305 = vld [vmem:[#allocation5 + $0x578] sm:$0xff]
    %v306 = vld [vmem:[#allocation5 + $0x580] sm:$0xff]
    %v307 = vld [vmem:[#allocation5 + $0x588] sm:$0xff]
    %v308 = vld [vmem:[#allocation5 + $0x590] sm:$0xff]
    %v309 = vld [vmem:[#allocation5 + $0x598] sm:$0xff]
    %v310 = vld [vmem:[#allocation5 + $0x5a0] sm:$0xff]
    %v311 = vld [vmem:[#allocation5 + $0x5a8] sm:$0xff]
    %v312 = vld [vmem:[#allocation5 + $0x5b0] sm:$0xff]
    %v313 = vld [vmem:[#allocation5 + $0x5b8] sm:$0xff]
    %v314 = vld [vmem:[#allocation5 + $0x5c0] sm:$0xff]
    %v315 = vld [vmem:[#allocation5 + $0x5c8] sm:$0xff]
    %v316 = vld [vmem:[#allocation5 + $0x5d0] sm:$0xff]
    %v317 = vld [vmem:[#allocation5 + $0x5d8] sm:$0xff]
    %v318 = vld [vmem:[#allocation5 + $0x5e0] sm:$0xff]
    %v319 = vld [vmem:[#allocation5 + $0x5e8] sm:$0xff]
    %v320 = vld [vmem:[#allocation5 + $0x5f0] sm:$0xff]
    %v321 = vld [vmem:[#allocation5 + $0x5f8] sm:$0xff]
    %v322 = vld [vmem:[#allocation5 + $0x600] sm:$0xff]
    %v323 = vld [vmem:[#allocation5 + $0x608] sm:$0xff]
    %v324 = vld [vmem:[#allocation5 + $0x610] sm:$0xff]
    %v325 = vld [vmem:[#allocation5 + $0x618] sm:$0xff]
    %v326 = vld [vmem:[#allocation5 + $0x620] sm:$0xff]
    %v327 = vld [vmem:[#allocation5 + $0x628] sm:$0xff]
    %v328 = vld [vmem:[#allocation5 + $0x630] sm:$0xff]
    %v329 = vld [vmem:[#allocation5 + $0x638] sm:$0xff]
    %v330 = vld [vmem:[#allocation5 + $0x640] sm:$0xff]
    %v331 = vld [vmem:[#allocation5 + $0x648] sm:$0xff]
    %v332 = vld [vmem:[#allocation5 + $0x650] sm:$0xff]
    %v333 = vld [vmem:[#allocation5 + $0x658] sm:$0xff]
    %v334 = vld [vmem:[#allocation5 + $0x660] sm:$0xff]
    %v335 = vld [vmem:[#allocation5 + $0x668] sm:$0xff]
    %v336 = vld [vmem:[#allocation5 + $0x670] sm:$0xff]
    %v337 = vld [vmem:[#allocation5 + $0x678] sm:$0xff]
    %v338 = vld [vmem:[#allocation5 + $0x680] sm:$0xff]
    %v339 = vld [vmem:[#allocation5 + $0x688] sm:$0xff]
    %v340 = vld [vmem:[#allocation5 + $0x690] sm:$0xff]
    %v341 = vld [vmem:[#allocation5 + $0x698] sm:$0xff]
    %v342 = vld [vmem:[#allocation5 + $0x6a0] sm:$0xff]
    %v343 = vld [vmem:[#allocation5 + $0x6a8] sm:$0xff]
    %v344 = vld [vmem:[#allocation5 + $0x6b0] sm:$0xff]
    %v345 = vld [vmem:[#allocation5 + $0x6b8] sm:$0xff]
    %v346 = vld [vmem:[#allocation5 + $0x6c0] sm:$0xff]
    %v347 = vld [vmem:[#allocation5 + $0x6c8] sm:$0xff]
    %v348 = vld [vmem:[#allocation5 + $0x6d0] sm:$0xff]
    %v349 = vld [vmem:[#allocation5 + $0x6d8] sm:$0xff]
    %v350 = vld [vmem:[#allocation5 + $0x6e0] sm:$0xff]
    %v351 = vld [vmem:[#allocation5 + $0x6e8] sm:$0xff]
    %v352 = vld [vmem:[#allocation5 + $0x6f0] sm:$0xff]
    %v353 = vld [vmem:[#allocation5 + $0x6f8] sm:$0xff]
    %v354 = vld [vmem:[%s2] sm:$0xf]
    %v356 = vlaneseq
    %v357 = vshrl.u32 %v356, 7
    %v358 = vsub.s32 0, %v357
    %v359 = vrot.slane %v354, %v358
    %v360 = vlaneseq
    %v361 = vshrl.u32 %v360, 7
    %v362 = vsub.s32 1, %v361
    %v363 = vrot.slane %v354, %v362
    %v364 = vlaneseq
    %v365 = vshrl.u32 %v364, 7
    %v366 = vsub.s32 2, %v365
    %v367 = vrot.slane %v354, %v366
    %v368 = vlaneseq
    %v369 = vshrl.u32 %v368, 7
    %v370 = vsub.s32 3, %v369
    %v371 = vrot.slane %v354, %v370
    %v384 = vunpack.c.l.b16 %v122
    %v385 = vunpack.c.h.b16 %v122
    %v386 = vunpack.c.l.b16 %v123
    %v387 = vunpack.c.h.b16 %v123
    %v388 = vunpack.c.l.b16 %v124
    %v389 = vunpack.c.h.b16 %v124
    %v390 = vunpack.c.l.b16 %v125
    %v391 = vunpack.c.l.b16 %v126
    %v392 = vunpack.c.h.b16 %v126
    %v393 = vunpack.c.l.b16 %v127
    %v394 = vunpack.c.h.b16 %v127
    %v395 = vunpack.c.l.b16 %v128
    %v396 = vunpack.c.h.b16 %v128
    %v397 = vunpack.c.l.b16 %v129
    %v398 = vpack.c.b16 %v391, %v384
    %v399 = vpack.c.b16 %v392, %v385
    %v400 = vpack.c.b16 %v393, %v386
    %v401 = vpack.c.b16 %v394, %v387
    %v402 = vpack.c.b16 %v395, %v388
    %v403 = vpack.c.b16 %v396, %v389
    %v404 = vpack.c.b16 %v397, %v390
    %v636 = vunpack.c.l.b16 %v130
    %v637 = vunpack.c.h.b16 %v130
    %v638 = vunpack.c.l.b16 %v131
    %v639 = vunpack.c.h.b16 %v131
    %v640 = vunpack.c.l.b16 %v132
    %v641 = vunpack.c.h.b16 %v132
    %v642 = vunpack.c.l.b16 %v133
    %v643 = vunpack.c.h.b16 %v133
    %v644 = vunpack.c.l.b16 %v134
    %v645 = vunpack.c.h.b16 %v134
    %v646 = vunpack.c.l.b16 %v135
    %v647 = vunpack.c.h.b16 %v135
    %v648 = vunpack.c.l.b16 %v136
    %v649 = vunpack.c.h.b16 %v136
    %v650 = vunpack.c.l.b16 %v137
    %v651 = vunpack.c.h.b16 %v137
    %v652 = vunpack.c.l.b16 %v138
    %v653 = vunpack.c.h.b16 %v138
    %v654 = vunpack.c.l.b16 %v139
    %v655 = vunpack.c.h.b16 %v139
    %v656 = vunpack.c.l.b16 %v140
    %v657 = vunpack.c.h.b16 %v140
    %v658 = vunpack.c.l.b16 %v141
    %v659 = vunpack.c.h.b16 %v141
    %v660 = vunpack.c.l.b16 %v142
    %v661 = vunpack.c.h.b16 %v142
    %v662 = vunpack.c.l.b16 %v143
    %v663 = vunpack.c.h.b16 %v143
    %v664 = vunpack.c.l.b16 %v144
    %v665 = vunpack.c.h.b16 %v144
    %v666 = vunpack.c.l.b16 %v145
    %v667 = vunpack.c.h.b16 %v145
    %v668 = vunpack.c.l.b16 %v146
    %v669 = vunpack.c.h.b16 %v146
    %v670 = vunpack.c.l.b16 %v147
    %v671 = vunpack.c.h.b16 %v147
    %v672 = vunpack.c.l.b16 %v148
    %v673 = vunpack.c.h.b16 %v148
    %v674 = vunpack.c.l.b16 %v149
    %v675 = vunpack.c.h.b16 %v149
    %v676 = vunpack.c.l.b16 %v150
    %v677 = vunpack.c.h.b16 %v150
    %v678 = vunpack.c.l.b16 %v151
    %v679 = vunpack.c.h.b16 %v151
    %v680 = vunpack.c.l.b16 %v152
    %v681 = vunpack.c.h.b16 %v152
    %v682 = vunpack.c.l.b16 %v153
    %v683 = vunpack.c.h.b16 %v153
    %v684 = vunpack.c.l.b16 %v154
    %v685 = vunpack.c.h.b16 %v154
    %v686 = vunpack.c.l.b16 %v155
    %v687 = vunpack.c.h.b16 %v155
    %v688 = vunpack.c.l.b16 %v156
    %v689 = vunpack.c.h.b16 %v156
    %v690 = vunpack.c.l.b16 %v157
    %v691 = vunpack.c.h.b16 %v157
    %v692 = vunpack.c.l.b16 %v158
    %v693 = vunpack.c.h.b16 %v158
    %v694 = vunpack.c.l.b16 %v159
    %v695 = vunpack.c.h.b16 %v159
    %v696 = vunpack.c.l.b16 %v160
    %v697 = vunpack.c.h.b16 %v160
    %v698 = vunpack.c.l.b16 %v161
    %v699 = vunpack.c.h.b16 %v161
    %v700 = vunpack.c.l.b16 %v162
    %v701 = vunpack.c.h.b16 %v162
    %v702 = vunpack.c.l.b16 %v163
    %v703 = vunpack.c.h.b16 %v163
    %v704 = vunpack.c.l.b16 %v164
    %v705 = vunpack.c.h.b16 %v164
    %v706 = vunpack.c.l.b16 %v165
    %v707 = vunpack.c.h.b16 %v165
    %v708 = vunpack.c.l.b16 %v166
    %v709 = vunpack.c.h.b16 %v166
    %v710 = vunpack.c.l.b16 %v167
    %v711 = vunpack.c.h.b16 %v167
    %v712 = vunpack.c.l.b16 %v168
    %v713 = vunpack.c.h.b16 %v168
    %v714 = vunpack.c.l.b16 %v169
    %v715 = vunpack.c.h.b16 %v169
    %v716 = vunpack.c.l.b16 %v170
    %v717 = vunpack.c.h.b16 %v170
    %v718 = vunpack.c.l.b16 %v171
    %v719 = vunpack.c.h.b16 %v171
    %v720 = vunpack.c.l.b16 %v172
    %v721 = vunpack.c.h.b16 %v172
    %v722 = vunpack.c.l.b16 %v173
    %v723 = vunpack.c.h.b16 %v173
    %v724 = vunpack.c.l.b16 %v174
    %v725 = vunpack.c.h.b16 %v174
    %v726 = vunpack.c.l.b16 %v175
    %v727 = vunpack.c.h.b16 %v175
    %v728 = vunpack.c.l.b16 %v176
    %v729 = vunpack.c.h.b16 %v176
    %v730 = vunpack.c.l.b16 %v177
    %v731 = vunpack.c.h.b16 %v177
    %v732 = vunpack.c.l.b16 %v178
    %v733 = vunpack.c.h.b16 %v178
    %v734 = vunpack.c.l.b16 %v179
    %v735 = vunpack.c.h.b16 %v179
    %v736 = vunpack.c.l.b16 %v180
    %v737 = vunpack.c.h.b16 %v180
    %v738 = vunpack.c.l.b16 %v181
    %v739 = vunpack.c.h.b16 %v181
    %v740 = vunpack.c.l.b16 %v182
    %v741 = vunpack.c.h.b16 %v182
    %v742 = vunpack.c.l.b16 %v183
    %v743 = vunpack.c.h.b16 %v183
    %v744 = vunpack.c.l.b16 %v184
    %v745 = vunpack.c.h.b16 %v184
    %v746 = vunpack.c.l.b16 %v185
    %v747 = vunpack.c.h.b16 %v185
    %v748 = vunpack.c.l.b16 %v186
    %v749 = vunpack.c.h.b16 %v186
    %v750 = vunpack.c.l.b16 %v187
    %v751 = vunpack.c.h.b16 %v187
    %v752 = vunpack.c.l.b16 %v188
    %v753 = vunpack.c.h.b16 %v188
    %v754 = vunpack.c.l.b16 %v189
    %v755 = vunpack.c.h.b16 %v189
    %v756 = vunpack.c.l.b16 %v190
    %v757 = vunpack.c.h.b16 %v190
    %v758 = vunpack.c.l.b16 %v191
    %v759 = vunpack.c.h.b16 %v191
    %v760 = vunpack.c.l.b16 %v192
    %v761 = vunpack.c.h.b16 %v192
    %v762 = vunpack.c.l.b16 %v193
    %v763 = vunpack.c.h.b16 %v193
    %v764 = vunpack.c.l.b16 %v194
    %v765 = vunpack.c.h.b16 %v194
    %v766 = vunpack.c.l.b16 %v195
    %v767 = vunpack.c.h.b16 %v195
    %v768 = vunpack.c.l.b16 %v196
    %v769 = vunpack.c.h.b16 %v196
    %v770 = vunpack.c.l.b16 %v197
    %v771 = vunpack.c.h.b16 %v197
    %v772 = vunpack.c.l.b16 %v198
    %v773 = vunpack.c.h.b16 %v198
    %v774 = vunpack.c.l.b16 %v199
    %v775 = vunpack.c.h.b16 %v199
    %v776 = vunpack.c.l.b16 %v200
    %v777 = vunpack.c.h.b16 %v200
    %v778 = vunpack.c.l.b16 %v201
    %v779 = vunpack.c.h.b16 %v201
    %v780 = vunpack.c.l.b16 %v202
    %v781 = vunpack.c.h.b16 %v202
    %v782 = vunpack.c.l.b16 %v203
    %v783 = vunpack.c.h.b16 %v203
    %v784 = vunpack.c.l.b16 %v204
    %v785 = vunpack.c.h.b16 %v204
    %v786 = vunpack.c.l.b16 %v205
    %v787 = vunpack.c.h.b16 %v205
    %v788 = vunpack.c.l.b16 %v206
    %v789 = vunpack.c.h.b16 %v206
    %v790 = vunpack.c.l.b16 %v207
    %v791 = vunpack.c.h.b16 %v207
    %v792 = vunpack.c.l.b16 %v208
    %v793 = vunpack.c.h.b16 %v208
    %v794 = vunpack.c.l.b16 %v209
    %v795 = vunpack.c.h.b16 %v209
    %v796 = vunpack.c.l.b16 %v210
    %v797 = vunpack.c.h.b16 %v210
    %v798 = vunpack.c.l.b16 %v211
    %v799 = vunpack.c.h.b16 %v211
    %v800 = vunpack.c.l.b16 %v212
    %v801 = vunpack.c.h.b16 %v212
    %v802 = vunpack.c.l.b16 %v213
    %v803 = vunpack.c.h.b16 %v213
    %v804 = vunpack.c.l.b16 %v214
    %v805 = vunpack.c.h.b16 %v214
    %v806 = vunpack.c.l.b16 %v215
    %v807 = vunpack.c.h.b16 %v215
    %v808 = vunpack.c.l.b16 %v216
    %v809 = vunpack.c.h.b16 %v216
    %v810 = vunpack.c.l.b16 %v217
    %v811 = vunpack.c.h.b16 %v217
    %v812 = vunpack.c.l.b16 %v218
    %v813 = vunpack.c.h.b16 %v218
    %v814 = vunpack.c.l.b16 %v219
    %v815 = vunpack.c.h.b16 %v219
    %v816 = vunpack.c.l.b16 %v220
    %v817 = vunpack.c.h.b16 %v220
    %v818 = vunpack.c.l.b16 %v221
    %v819 = vunpack.c.h.b16 %v221
    %v820 = vunpack.c.l.b16 %v222
    %v821 = vunpack.c.h.b16 %v222
    %v822 = vunpack.c.l.b16 %v223
    %v823 = vunpack.c.h.b16 %v223
    %v824 = vunpack.c.l.b16 %v224
    %v825 = vunpack.c.h.b16 %v224
    %v826 = vunpack.c.l.b16 %v225
    %v827 = vunpack.c.h.b16 %v225
    %v828 = vunpack.c.l.b16 %v226
    %v829 = vunpack.c.h.b16 %v226
    %v830 = vunpack.c.l.b16 %v227
    %v831 = vunpack.c.h.b16 %v227
    %v832 = vunpack.c.l.b16 %v228
    %v833 = vunpack.c.h.b16 %v228
    %v834 = vunpack.c.l.b16 %v229
    %v835 = vunpack.c.h.b16 %v229
    %v836 = vunpack.c.l.b16 %v230
    %v837 = vunpack.c.h.b16 %v230
    %v838 = vunpack.c.l.b16 %v231
    %v839 = vunpack.c.h.b16 %v231
    %v840 = vunpack.c.l.b16 %v232
    %v841 = vunpack.c.h.b16 %v232
    %v842 = vunpack.c.l.b16 %v233
    %v843 = vunpack.c.h.b16 %v233
    %v844 = vunpack.c.l.b16 %v234
    %v845 = vunpack.c.h.b16 %v234
    %v846 = vunpack.c.l.b16 %v235
    %v847 = vunpack.c.h.b16 %v235
    %v848 = vunpack.c.l.b16 %v236
    %v849 = vunpack.c.h.b16 %v236
    %v850 = vunpack.c.l.b16 %v237
    %v851 = vunpack.c.h.b16 %v237
    %v852 = vunpack.c.l.b16 %v238
    %v853 = vunpack.c.h.b16 %v238
    %v854 = vunpack.c.l.b16 %v239
    %v855 = vunpack.c.h.b16 %v239
    %v856 = vunpack.c.l.b16 %v240
    %v857 = vunpack.c.h.b16 %v240
    %v858 = vunpack.c.l.b16 %v241
    %v859 = vunpack.c.h.b16 %v241
    %v860 = vunpack.c.l.b16 %v242
    %v861 = vunpack.c.h.b16 %v242
    %v862 = vunpack.c.l.b16 %v243
    %v863 = vunpack.c.h.b16 %v243
    %v864 = vunpack.c.l.b16 %v244
    %v865 = vunpack.c.h.b16 %v244
    %v866 = vunpack.c.l.b16 %v245
    %v867 = vunpack.c.h.b16 %v245
    %v868 = vunpack.c.l.b16 %v246
    %v869 = vunpack.c.h.b16 %v246
    %v870 = vunpack.c.l.b16 %v247
    %v871 = vunpack.c.h.b16 %v247
    %v872 = vunpack.c.l.b16 %v248
    %v873 = vunpack.c.h.b16 %v248
    %v874 = vunpack.c.l.b16 %v249
    %v875 = vunpack.c.h.b16 %v249
    %v876 = vunpack.c.l.b16 %v250
    %v877 = vunpack.c.h.b16 %v250
    %v878 = vunpack.c.l.b16 %v251
    %v879 = vunpack.c.h.b16 %v251
    %v880 = vunpack.c.l.b16 %v252
    %v881 = vunpack.c.h.b16 %v252
    %v882 = vunpack.c.l.b16 %v253
    %v883 = vunpack.c.h.b16 %v253
    %v884 = vunpack.c.l.b16 %v254
    %v885 = vunpack.c.h.b16 %v254
    %v886 = vunpack.c.l.b16 %v255
    %v887 = vunpack.c.h.b16 %v255
    %v888 = vunpack.c.l.b16 %v256
    %v889 = vunpack.c.h.b16 %v256
    %v890 = vunpack.c.l.b16 %v257
    %v891 = vunpack.c.h.b16 %v257
    %v892 = vunpack.c.l.b16 %v258
    %v893 = vunpack.c.h.b16 %v258
    %v894 = vunpack.c.l.b16 %v259
    %v895 = vunpack.c.h.b16 %v259
    %v896 = vunpack.c.l.b16 %v260
    %v897 = vunpack.c.h.b16 %v260
    %v898 = vunpack.c.l.b16 %v261
    %v899 = vunpack.c.h.b16 %v261
    %v900 = vunpack.c.l.b16 %v262
    %v901 = vunpack.c.h.b16 %v262
    %v902 = vunpack.c.l.b16 %v263
    %v903 = vunpack.c.h.b16 %v263
    %v904 = vunpack.c.l.b16 %v264
    %v905 = vunpack.c.h.b16 %v264
    %v906 = vunpack.c.l.b16 %v265
    %v907 = vunpack.c.h.b16 %v265
    %v908 = vunpack.c.l.b16 %v266
    %v909 = vunpack.c.h.b16 %v266
    %v910 = vunpack.c.l.b16 %v267
    %v911 = vunpack.c.h.b16 %v267
    %v912 = vunpack.c.l.b16 %v268
    %v913 = vunpack.c.h.b16 %v268
    %v914 = vunpack.c.l.b16 %v269
    %v915 = vunpack.c.h.b16 %v269
    %v916 = vunpack.c.l.b16 %v270
    %v917 = vunpack.c.h.b16 %v270
    %v918 = vunpack.c.l.b16 %v271
    %v919 = vunpack.c.h.b16 %v271
    %v920 = vunpack.c.l.b16 %v272
    %v921 = vunpack.c.h.b16 %v272
    %v922 = vunpack.c.l.b16 %v273
    %v923 = vunpack.c.h.b16 %v273
    %v924 = vunpack.c.l.b16 %v274
    %v925 = vunpack.c.h.b16 %v274
    %v926 = vunpack.c.l.b16 %v275
    %v927 = vunpack.c.h.b16 %v275
    %v928 = vunpack.c.l.b16 %v276
    %v929 = vunpack.c.h.b16 %v276
    %v930 = vunpack.c.l.b16 %v277
    %v931 = vunpack.c.h.b16 %v277
    %v932 = vunpack.c.l.b16 %v278
    %v933 = vunpack.c.h.b16 %v278
    %v934 = vunpack.c.l.b16 %v279
    %v935 = vunpack.c.h.b16 %v279
    %v936 = vunpack.c.l.b16 %v280
    %v937 = vunpack.c.h.b16 %v280
    %v938 = vunpack.c.l.b16 %v281
    %v939 = vunpack.c.h.b16 %v281
    %v940 = vunpack.c.l.b16 %v282
    %v941 = vunpack.c.h.b16 %v282
    %v942 = vunpack.c.l.b16 %v283
    %v943 = vunpack.c.h.b16 %v283
    %v944 = vunpack.c.l.b16 %v284
    %v945 = vunpack.c.h.b16 %v284
    %v946 = vunpack.c.l.b16 %v285
    %v947 = vunpack.c.h.b16 %v285
    %v948 = vunpack.c.l.b16 %v286
    %v949 = vunpack.c.h.b16 %v286
    %v950 = vunpack.c.l.b16 %v287
    %v951 = vunpack.c.h.b16 %v287
    %v952 = vunpack.c.l.b16 %v288
    %v953 = vunpack.c.h.b16 %v288
    %v954 = vunpack.c.l.b16 %v289
    %v955 = vunpack.c.h.b16 %v289
    %v956 = vunpack.c.l.b16 %v290
    %v957 = vunpack.c.h.b16 %v290
    %v958 = vunpack.c.l.b16 %v291
    %v959 = vunpack.c.h.b16 %v291
    %v960 = vunpack.c.l.b16 %v292
    %v961 = vunpack.c.h.b16 %v292
    %v962 = vunpack.c.l.b16 %v293
    %v963 = vunpack.c.h.b16 %v293
    %v964 = vunpack.c.l.b16 %v294
    %v965 = vunpack.c.h.b16 %v294
    %v966 = vunpack.c.l.b16 %v295
    %v967 = vunpack.c.h.b16 %v295
    %v968 = vunpack.c.l.b16 %v296
    %v969 = vunpack.c.h.b16 %v296
    %v970 = vunpack.c.l.b16 %v297
    %v971 = vunpack.c.h.b16 %v297
    %v972 = vunpack.c.l.b16 %v298
    %v973 = vunpack.c.h.b16 %v298
    %v974 = vunpack.c.l.b16 %v299
    %v975 = vunpack.c.h.b16 %v299
    %v976 = vunpack.c.l.b16 %v300
    %v977 = vunpack.c.h.b16 %v300
    %v978 = vunpack.c.l.b16 %v301
    %v979 = vunpack.c.h.b16 %v301
    %v980 = vunpack.c.l.b16 %v302
    %v981 = vunpack.c.h.b16 %v302
    %v982 = vunpack.c.l.b16 %v303
    %v983 = vunpack.c.h.b16 %v303
    %v984 = vunpack.c.l.b16 %v304
    %v985 = vunpack.c.h.b16 %v304
    %v986 = vunpack.c.l.b16 %v305
    %v987 = vunpack.c.h.b16 %v305
    %v988 = vunpack.c.l.b16 %v306
    %v989 = vunpack.c.h.b16 %v306
    %v990 = vunpack.c.l.b16 %v307
    %v991 = vunpack.c.h.b16 %v307
    %v992 = vunpack.c.l.b16 %v308
    %v993 = vunpack.c.h.b16 %v308
    %v994 = vunpack.c.l.b16 %v309
    %v995 = vunpack.c.h.b16 %v309
    %v996 = vunpack.c.l.b16 %v310
    %v997 = vunpack.c.h.b16 %v310
    %v998 = vunpack.c.l.b16 %v311
    %v999 = vunpack.c.h.b16 %v311
    %v1000 = vunpack.c.l.b16 %v312
    %v1001 = vunpack.c.h.b16 %v312
    %v1002 = vunpack.c.l.b16 %v313
    %v1003 = vunpack.c.h.b16 %v313
    %v1004 = vunpack.c.l.b16 %v314
    %v1005 = vunpack.c.h.b16 %v314
    %v1006 = vunpack.c.l.b16 %v315
    %v1007 = vunpack.c.h.b16 %v315
    %v1008 = vunpack.c.l.b16 %v316
    %v1009 = vunpack.c.h.b16 %v316
    %v1010 = vunpack.c.l.b16 %v317
    %v1011 = vunpack.c.h.b16 %v317
    %v1012 = vunpack.c.l.b16 %v318
    %v1013 = vunpack.c.h.b16 %v318
    %v1014 = vunpack.c.l.b16 %v319
    %v1015 = vunpack.c.h.b16 %v319
    %v1016 = vunpack.c.l.b16 %v320
    %v1017 = vunpack.c.h.b16 %v320
    %v1018 = vunpack.c.l.b16 %v321
    %v1019 = vunpack.c.h.b16 %v321
    %v1020 = vunpack.c.l.b16 %v322
    %v1021 = vunpack.c.h.b16 %v322
    %v1022 = vunpack.c.l.b16 %v323
    %v1023 = vunpack.c.h.b16 %v323
    %v1024 = vunpack.c.l.b16 %v324
    %v1025 = vunpack.c.h.b16 %v324
    %v1026 = vunpack.c.l.b16 %v325
    %v1027 = vunpack.c.h.b16 %v325
    %v1028 = vunpack.c.l.b16 %v326
    %v1029 = vunpack.c.h.b16 %v326
    %v1030 = vunpack.c.l.b16 %v327
    %v1031 = vunpack.c.h.b16 %v327
    %v1032 = vunpack.c.l.b16 %v328
    %v1033 = vunpack.c.h.b16 %v328
    %v1034 = vunpack.c.l.b16 %v329
    %v1035 = vunpack.c.h.b16 %v329
    %v1036 = vunpack.c.l.b16 %v330
    %v1037 = vunpack.c.h.b16 %v330
    %v1038 = vunpack.c.l.b16 %v331
    %v1039 = vunpack.c.h.b16 %v331
    %v1040 = vunpack.c.l.b16 %v332
    %v1041 = vunpack.c.h.b16 %v332
    %v1042 = vunpack.c.l.b16 %v333
    %v1043 = vunpack.c.h.b16 %v333
    %v1044 = vunpack.c.l.b16 %v334
    %v1045 = vunpack.c.h.b16 %v334
    %v1046 = vunpack.c.l.b16 %v335
    %v1047 = vunpack.c.h.b16 %v335
    %v1048 = vunpack.c.l.b16 %v336
    %v1049 = vunpack.c.h.b16 %v336
    %v1050 = vunpack.c.l.b16 %v337
    %v1051 = vunpack.c.h.b16 %v337
    %v1052 = vunpack.c.l.b16 %v338
    %v1053 = vunpack.c.h.b16 %v338
    %v1054 = vunpack.c.l.b16 %v339
    %v1055 = vunpack.c.h.b16 %v339
    %v1056 = vunpack.c.l.b16 %v340
    %v1057 = vunpack.c.h.b16 %v340
    %v1058 = vunpack.c.l.b16 %v341
    %v1059 = vunpack.c.h.b16 %v341
    %v1060 = vunpack.c.l.b16 %v342
    %v1061 = vunpack.c.h.b16 %v342
    %v1062 = vunpack.c.l.b16 %v343
    %v1063 = vunpack.c.h.b16 %v343
    %v1064 = vunpack.c.l.b16 %v344
    %v1065 = vunpack.c.h.b16 %v344
    %v1066 = vunpack.c.l.b16 %v345
    %v1067 = vunpack.c.h.b16 %v345
    %v1068 = vunpack.c.l.b16 %v346
    %v1069 = vunpack.c.h.b16 %v346
    %v1070 = vunpack.c.l.b16 %v347
    %v1071 = vunpack.c.h.b16 %v347
    %v1072 = vunpack.c.l.b16 %v348
    %v1073 = vunpack.c.h.b16 %v348
    %v1074 = vunpack.c.l.b16 %v349
    %v1075 = vunpack.c.h.b16 %v349
    %v1076 = vunpack.c.l.b16 %v350
    %v1077 = vunpack.c.h.b16 %v350
    %v1078 = vunpack.c.l.b16 %v351
    %v1079 = vunpack.c.h.b16 %v351
    %v1080 = vunpack.c.l.b16 %v352
    %v1081 = vunpack.c.h.b16 %v352
    %v1082 = vunpack.c.l.b16 %v353
    %v1083 = vunpack.c.h.b16 %v353
    %v1084 = vpack.c.b16 %v640, %v636
    %v1085 = vpack.c.b16 %v641, %v637
    %v1086 = vpack.c.b16 %v642, %v638
    %v1087 = vpack.c.b16 %v643, %v639
    %v1088 = vpack.c.b16 %v648, %v644
    %v1089 = vpack.c.b16 %v649, %v645
    %v1090 = vpack.c.b16 %v650, %v646
    %v1091 = vpack.c.b16 %v651, %v647
    %v1092 = vpack.c.b16 %v656, %v652
    %v1093 = vpack.c.b16 %v657, %v653
    %v1094 = vpack.c.b16 %v658, %v654
    %v1095 = vpack.c.b16 %v659, %v655
    %v1096 = vpack.c.b16 %v664, %v660
    %v1097 = vpack.c.b16 %v665, %v661
    %v1098 = vpack.c.b16 %v666, %v662
    %v1099 = vpack.c.b16 %v667, %v663
    %v1100 = vpack.c.b16 %v672, %v668
    %v1101 = vpack.c.b16 %v673, %v669
    %v1102 = vpack.c.b16 %v674, %v670
    %v1103 = vpack.c.b16 %v675, %v671
    %v1104 = vpack.c.b16 %v680, %v676
    %v1105 = vpack.c.b16 %v681, %v677
    %v1106 = vpack.c.b16 %v682, %v678
    %v1107 = vpack.c.b16 %v683, %v679
    %v1108 = vpack.c.b16 %v688, %v684
    %v1109 = vpack.c.b16 %v689, %v685
    %v1110 = vpack.c.b16 %v690, %v686
    %v1111 = vpack.c.b16 %v691, %v687
    %v1112 = vpack.c.b16 %v696, %v692
    %v1113 = vpack.c.b16 %v697, %v693
    %v1114 = vpack.c.b16 %v698, %v694
    %v1115 = vpack.c.b16 %v699, %v695
    %v1116 = vpack.c.b16 %v704, %v700
    %v1117 = vpack.c.b16 %v705, %v701
    %v1118 = vpack.c.b16 %v706, %v702
    %v1119 = vpack.c.b16 %v707, %v703
    %v1120 = vpack.c.b16 %v712, %v708
    %v1121 = vpack.c.b16 %v713, %v709
    %v1122 = vpack.c.b16 %v714, %v710
    %v1123 = vpack.c.b16 %v715, %v711
    %v1124 = vpack.c.b16 %v720, %v716
    %v1125 = vpack.c.b16 %v721, %v717
    %v1126 = vpack.c.b16 %v722, %v718
    %v1127 = vpack.c.b16 %v723, %v719
    %v1128 = vpack.c.b16 %v728, %v724
    %v1129 = vpack.c.b16 %v729, %v725
    %v1130 = vpack.c.b16 %v730, %v726
    %v1131 = vpack.c.b16 %v731, %v727
    %v1132 = vpack.c.b16 %v736, %v732
    %v1133 = vpack.c.b16 %v737, %v733
    %v1134 = vpack.c.b16 %v738, %v734
    %v1135 = vpack.c.b16 %v739, %v735
    %v1136 = vpack.c.b16 %v744, %v740
    %v1137 = vpack.c.b16 %v745, %v741
    %v1138 = vpack.c.b16 %v746, %v742
    %v1139 = vpack.c.b16 %v747, %v743
    %v1140 = vpack.c.b16 %v752, %v748
    %v1141 = vpack.c.b16 %v753, %v749
    %v1142 = vpack.c.b16 %v754, %v750
    %v1143 = vpack.c.b16 %v755, %v751
    %v1144 = vpack.c.b16 %v760, %v756
    %v1145 = vpack.c.b16 %v761, %v757
    %v1146 = vpack.c.b16 %v762, %v758
    %v1147 = vpack.c.b16 %v763, %v759
    %v1148 = vpack.c.b16 %v768, %v764
    %v1149 = vpack.c.b16 %v769, %v765
    %v1150 = vpack.c.b16 %v770, %v766
    %v1151 = vpack.c.b16 %v771, %v767
    %v1152 = vpack.c.b16 %v776, %v772
    %v1153 = vpack.c.b16 %v777, %v773
    %v1154 = vpack.c.b16 %v778, %v774
    %v1155 = vpack.c.b16 %v779, %v775
    %v1156 = vpack.c.b16 %v784, %v780
    %v1157 = vpack.c.b16 %v785, %v781
    %v1158 = vpack.c.b16 %v786, %v782
    %v1159 = vpack.c.b16 %v787, %v783
    %v1160 = vpack.c.b16 %v792, %v788
    %v1161 = vpack.c.b16 %v793, %v789
    %v1162 = vpack.c.b16 %v794, %v790
    %v1163 = vpack.c.b16 %v795, %v791
    %v1164 = vpack.c.b16 %v800, %v796
    %v1165 = vpack.c.b16 %v801, %v797
    %v1166 = vpack.c.b16 %v802, %v798
    %v1167 = vpack.c.b16 %v803, %v799
    %v1168 = vpack.c.b16 %v808, %v804
    %v1169 = vpack.c.b16 %v809, %v805
    %v1170 = vpack.c.b16 %v810, %v806
    %v1171 = vpack.c.b16 %v811, %v807
    %v1172 = vpack.c.b16 %v816, %v812
    %v1173 = vpack.c.b16 %v817, %v813
    %v1174 = vpack.c.b16 %v818, %v814
    %v1175 = vpack.c.b16 %v819, %v815
    %v1176 = vpack.c.b16 %v824, %v820
    %v1177 = vpack.c.b16 %v825, %v821
    %v1178 = vpack.c.b16 %v826, %v822
    %v1179 = vpack.c.b16 %v827, %v823
    %v1180 = vpack.c.b16 %v832, %v828
    %v1181 = vpack.c.b16 %v833, %v829
    %v1182 = vpack.c.b16 %v834, %v830
    %v1183 = vpack.c.b16 %v835, %v831
    %v1184 = vpack.c.b16 %v840, %v836
    %v1185 = vpack.c.b16 %v841, %v837
    %v1186 = vpack.c.b16 %v842, %v838
    %v1187 = vpack.c.b16 %v843, %v839
    %v1188 = vpack.c.b16 %v848, %v844
    %v1189 = vpack.c.b16 %v849, %v845
    %v1190 = vpack.c.b16 %v850, %v846
    %v1191 = vpack.c.b16 %v851, %v847
    %v1192 = vpack.c.b16 %v856, %v852
    %v1193 = vpack.c.b16 %v857, %v853
    %v1194 = vpack.c.b16 %v858, %v854
    %v1195 = vpack.c.b16 %v859, %v855
    %v1196 = vpack.c.b16 %v864, %v860
    %v1197 = vpack.c.b16 %v865, %v861
    %v1198 = vpack.c.b16 %v866, %v862
    %v1199 = vpack.c.b16 %v867, %v863
    %v1200 = vpack.c.b16 %v872, %v868
    %v1201 = vpack.c.b16 %v873, %v869
    %v1202 = vpack.c.b16 %v874, %v870
    %v1203 = vpack.c.b16 %v875, %v871
    %v1204 = vpack.c.b16 %v880, %v876
    %v1205 = vpack.c.b16 %v881, %v877
    %v1206 = vpack.c.b16 %v882, %v878
    %v1207 = vpack.c.b16 %v883, %v879
    %v1208 = vpack.c.b16 %v888, %v884
    %v1209 = vpack.c.b16 %v889, %v885
    %v1210 = vpack.c.b16 %v890, %v886
    %v1211 = vpack.c.b16 %v891, %v887
    %v1212 = vpack.c.b16 %v896, %v892
    %v1213 = vpack.c.b16 %v897, %v893
    %v1214 = vpack.c.b16 %v898, %v894
    %v1215 = vpack.c.b16 %v899, %v895
    %v1216 = vpack.c.b16 %v904, %v900
    %v1217 = vpack.c.b16 %v905, %v901
    %v1218 = vpack.c.b16 %v906, %v902
    %v1219 = vpack.c.b16 %v907, %v903
    %v1220 = vpack.c.b16 %v912, %v908
    %v1221 = vpack.c.b16 %v913, %v909
    %v1222 = vpack.c.b16 %v914, %v910
    %v1223 = vpack.c.b16 %v915, %v911
    %v1224 = vpack.c.b16 %v920, %v916
    %v1225 = vpack.c.b16 %v921, %v917
    %v1226 = vpack.c.b16 %v922, %v918
    %v1227 = vpack.c.b16 %v923, %v919
    %v1228 = vpack.c.b16 %v928, %v924
    %v1229 = vpack.c.b16 %v929, %v925
    %v1230 = vpack.c.b16 %v930, %v926
    %v1231 = vpack.c.b16 %v931, %v927
    %v1232 = vpack.c.b16 %v936, %v932
    %v1233 = vpack.c.b16 %v937, %v933
    %v1234 = vpack.c.b16 %v938, %v934
    %v1235 = vpack.c.b16 %v939, %v935
    %v1236 = vpack.c.b16 %v944, %v940
    %v1237 = vpack.c.b16 %v945, %v941
    %v1238 = vpack.c.b16 %v946, %v942
    %v1239 = vpack.c.b16 %v947, %v943
    %v1240 = vpack.c.b16 %v952, %v948
    %v1241 = vpack.c.b16 %v953, %v949
    %v1242 = vpack.c.b16 %v954, %v950
    %v1243 = vpack.c.b16 %v955, %v951
    %v1244 = vpack.c.b16 %v960, %v956
    %v1245 = vpack.c.b16 %v961, %v957
    %v1246 = vpack.c.b16 %v962, %v958
    %v1247 = vpack.c.b16 %v963, %v959
    %v1248 = vpack.c.b16 %v968, %v964
    %v1249 = vpack.c.b16 %v969, %v965
    %v1250 = vpack.c.b16 %v970, %v966
    %v1251 = vpack.c.b16 %v971, %v967
    %v1252 = vpack.c.b16 %v976, %v972
    %v1253 = vpack.c.b16 %v977, %v973
    %v1254 = vpack.c.b16 %v978, %v974
    %v1255 = vpack.c.b16 %v979, %v975
    %v1256 = vpack.c.b16 %v984, %v980
    %v1257 = vpack.c.b16 %v985, %v981
    %v1258 = vpack.c.b16 %v986, %v982
    %v1259 = vpack.c.b16 %v987, %v983
    %v1260 = vpack.c.b16 %v992, %v988
    %v1261 = vpack.c.b16 %v993, %v989
    %v1262 = vpack.c.b16 %v994, %v990
    %v1263 = vpack.c.b16 %v995, %v991
    %v1264 = vpack.c.b16 %v1000, %v996
    %v1265 = vpack.c.b16 %v1001, %v997
    %v1266 = vpack.c.b16 %v1002, %v998
    %v1267 = vpack.c.b16 %v1003, %v999
    %v1268 = vpack.c.b16 %v1008, %v1004
    %v1269 = vpack.c.b16 %v1009, %v1005
    %v1270 = vpack.c.b16 %v1010, %v1006
    %v1271 = vpack.c.b16 %v1011, %v1007
    %v1272 = vpack.c.b16 %v1016, %v1012
    %v1273 = vpack.c.b16 %v1017, %v1013
    %v1274 = vpack.c.b16 %v1018, %v1014
    %v1275 = vpack.c.b16 %v1019, %v1015
    %v1276 = vpack.c.b16 %v1024, %v1020
    %v1277 = vpack.c.b16 %v1025, %v1021
    %v1278 = vpack.c.b16 %v1026, %v1022
    %v1279 = vpack.c.b16 %v1027, %v1023
    %v1280 = vpack.c.b16 %v1032, %v1028
    %v1281 = vpack.c.b16 %v1033, %v1029
    %v1282 = vpack.c.b16 %v1034, %v1030
    %v1283 = vpack.c.b16 %v1035, %v1031
    %v1284 = vpack.c.b16 %v1040, %v1036
    %v1285 = vpack.c.b16 %v1041, %v1037
    %v1286 = vpack.c.b16 %v1042, %v1038
    %v1287 = vpack.c.b16 %v1043, %v1039
    %v1288 = vpack.c.b16 %v1048, %v1044
    %v1289 = vpack.c.b16 %v1049, %v1045
    %v1290 = vpack.c.b16 %v1050, %v1046
    %v1291 = vpack.c.b16 %v1051, %v1047
    %v1292 = vpack.c.b16 %v1056, %v1052
    %v1293 = vpack.c.b16 %v1057, %v1053
    %v1294 = vpack.c.b16 %v1058, %v1054
    %v1295 = vpack.c.b16 %v1059, %v1055
    %v1296 = vpack.c.b16 %v1064, %v1060
    %v1297 = vpack.c.b16 %v1065, %v1061
    %v1298 = vpack.c.b16 %v1066, %v1062
    %v1299 = vpack.c.b16 %v1067, %v1063
    %v1300 = vpack.c.b16 %v1072, %v1068
    %v1301 = vpack.c.b16 %v1073, %v1069
    %v1302 = vpack.c.b16 %v1074, %v1070
    %v1303 = vpack.c.b16 %v1075, %v1071
    %v1304 = vpack.c.b16 %v1080, %v1076
    %v1305 = vpack.c.b16 %v1081, %v1077
    %v1306 = vpack.c.b16 %v1082, %v1078
    %v1307 = vpack.c.b16 %v1083, %v1079
    %1532 = vmatprep.subr.bf16.mxu0 %v1085
    %1533 = vmatpush1.bf16.msra.mxu0 %v1084
    %1534 = vmatprep.subr.bf16.mxu0 %v1089
    %1535 = vmatpush1.bf16.msra.mxu0 %v1088
    %1536 = vmatprep.subr.bf16.mxu0 %v1093
    %1537 = vmatpush1.bf16.msra.mxu0 %v1092
    %1538 = vmatprep.subr.bf16.mxu0 %v1097
    %1539 = vmatpush1.bf16.msra.mxu0 %v1096
    %1540 = vmatprep.subr.bf16.mxu0 %v1101
    %1541 = vmatpush1.bf16.msra.mxu0 %v1100
    %1542 = vmatprep.subr.bf16.mxu0 %v1105
    %1543 = vmatpush1.bf16.msra.mxu0 %v1104
    %1544 = vmatprep.subr.bf16.mxu0 %v1109
    %1545 = vmatpush1.bf16.msra.mxu0 %v1108
    %1546 = vmatprep.subr.bf16.mxu0 %v1113
    %1547 = vmatpush1.bf16.msra.mxu0 %v1112
    %1548 = vmatprep.subr.bf16.mxu0 %v1117
    %1549 = vmatpush1.bf16.msra.mxu0 %v1116
    %1550 = vmatprep.subr.bf16.mxu0 %v1121
    %1551 = vmatpush1.bf16.msra.mxu0 %v1120
    %1552 = vmatprep.subr.bf16.mxu0 %v1125
    %1553 = vmatpush1.bf16.msra.mxu0 %v1124
    %1554 = vmatprep.subr.bf16.mxu0 %v1129
    %1555 = vmatpush1.bf16.msra.mxu0 %v1128
    %1556 = vmatprep.subr.bf16.mxu0 %v1133
    %1557 = vmatpush1.bf16.msra.mxu0 %v1132
    %1558 = vmatprep.subr.bf16.mxu0 %v1137
    %1559 = vmatpush1.bf16.msra.mxu0 %v1136
    %1560 = vmatprep.subr.bf16.mxu0 %v1141
    %1561 = vmatpush1.bf16.msra.mxu0 %v1140
    %1562 = vmatprep.subr.bf16.mxu0 %v1145
    %1563 = vmatpush1.bf16.msra.mxu0 %v1144
    %1564 = vmatprep.mubr.bf16.mxu0 %v399
    %1565 = vmatmul.mubr.bf16.gmra.mrb[0].mxu0 %v398
    %v1566 = vpop.f32.mrb[0].mxu0
    %v1567 = vadd.f32 %v359, %v1566
    %v1568 = vpop.f32.mrb[0].mxu0
    %v1569 = vadd.f32 %v363, %v1568
    %v1570 = vpop.f32.mrb[0].mxu0
    %v1571 = vadd.f32 %v359, %v1570
    %v1572 = vpop.f32.mrb[0].mxu0
    %v1573 = vadd.f32 %v363, %v1572
    %1574 = vdwg.mxu0
    %1575 = vmatprep.subr.bf16.mxu0 %v1149
    %1576 = vmatpush1.bf16.msra.mxu0 %v1148
    %1577 = vmatprep.subr.bf16.mxu0 %v1153
    %1578 = vmatpush1.bf16.msra.mxu0 %v1152
    %1579 = vmatprep.subr.bf16.mxu0 %v1157
    %1580 = vmatpush1.bf16.msra.mxu0 %v1156
    %1581 = vmatprep.subr.bf16.mxu0 %v1161
    %1582 = vmatpush1.bf16.msra.mxu0 %v1160
    %1583 = vmatprep.subr.bf16.mxu0 %v1165
    %1584 = vmatpush1.bf16.msra.mxu0 %v1164
    %1585 = vmatprep.subr.bf16.mxu0 %v1169
    %1586 = vmatpush1.bf16.msra.mxu0 %v1168
    %1587 = vmatprep.subr.bf16.mxu0 %v1173
    %1588 = vmatpush1.bf16.msra.mxu0 %v1172
    %1589 = vmatprep.subr.bf16.mxu0 %v1177
    %1590 = vmatpush1.bf16.msra.mxu0 %v1176
    %1591 = vmatprep.subr.bf16.mxu0 %v1181
    %1592 = vmatpush1.bf16.msra.mxu0 %v1180
    %1593 = vmatprep.subr.bf16.mxu0 %v1185
    %1594 = vmatpush1.bf16.msra.mxu0 %v1184
    %1595 = vmatprep.subr.bf16.mxu0 %v1189
    %1596 = vmatpush1.bf16.msra.mxu0 %v1188
    %1597 = vmatprep.subr.bf16.mxu0 %v1193
    %1598 = vmatpush1.bf16.msra.mxu0 %v1192
    %1599 = vmatprep.subr.bf16.mxu0 %v1197
    %1600 = vmatpush1.bf16.msra.mxu0 %v1196
    %1601 = vmatprep.subr.bf16.mxu0 %v1201
    %1602 = vmatpush1.bf16.msra.mxu0 %v1200
    %1603 = vmatprep.subr.bf16.mxu0 %v1205
    %1604 = vmatpush1.bf16.msra.mxu0 %v1204
    %1605 = vmatprep.subr.bf16.mxu0 %v1209
    %1606 = vmatpush1.bf16.msra.mxu0 %v1208
    %1607 = vmatprep.mubr.bf16.mxu0 %v401
    %1608 = vmatmul.mubr.bf16.gmra.mrb[0].mxu0 %v400
    %v1609 = vpop.f32.mrb[0].mxu0
    %v1610 = vadd.f32 %v1567, %v1609
    %v1611 = vpop.f32.mrb[0].mxu0
    %v1612 = vadd.f32 %v1569, %v1611
    %v1613 = vpop.f32.mrb[0].mxu0
    %v1614 = vadd.f32 %v1571, %v1613
    %v1615 = vpop.f32.mrb[0].mxu0
    %v1616 = vadd.f32 %v1573, %v1615
    %1617 = vdwg.mxu0
    %1618 = vmatprep.subr.bf16.mxu0 %v1213
    %1619 = vmatpush1.bf16.msra.mxu0 %v1212
    %1620 = vmatprep.subr.bf16.mxu0 %v1217
    %1621 = vmatpush1.bf16.msra.mxu0 %v1216
    %1622 = vmatprep.subr.bf16.mxu0 %v1221
    %1623 = vmatpush1.bf16.msra.mxu0 %v1220
    %1624 = vmatprep.subr.bf16.mxu0 %v1225
    %1625 = vmatpush1.bf16.msra.mxu0 %v1224
    %1626 = vmatprep.subr.bf16.mxu0 %v1229
    %1627 = vmatpush1.bf16.msra.mxu0 %v1228
    %1628 = vmatprep.subr.bf16.mxu0 %v1233
    %1629 = vmatpush1.bf16.msra.mxu0 %v1232
    %1630 = vmatprep.subr.bf16.mxu0 %v1237
    %1631 = vmatpush1.bf16.msra.mxu0 %v1236
    %1632 = vmatprep.subr.bf16.mxu0 %v1241
    %1633 = vmatpush1.bf16.msra.mxu0 %v1240
    %1634 = vmatprep.subr.bf16.mxu0 %v1245
    %1635 = vmatpush1.bf16.msra.mxu0 %v1244
    %1636 = vmatprep.subr.bf16.mxu0 %v1249
    %1637 = vmatpush1.bf16.msra.mxu0 %v1248
    %1638 = vmatprep.subr.bf16.mxu0 %v1253
    %1639 = vmatpush1.bf16.msra.mxu0 %v1252
    %1640 = vmatprep.subr.bf16.mxu0 %v1257
    %1641 = vmatpush1.bf16.msra.mxu0 %v1256
    %1642 = vmatprep.subr.bf16.mxu0 %v1261
    %1643 = vmatpush1.bf16.msra.mxu0 %v1260
    %1644 = vmatprep.subr.bf16.mxu0 %v1265
    %1645 = vmatpush1.bf16.msra.mxu0 %v1264
    %1646 = vmatprep.subr.bf16.mxu0 %v1269
    %1647 = vmatpush1.bf16.msra.mxu0 %v1268
    %1648 = vmatprep.subr.bf16.mxu0 %v1273
    %1649 = vmatpush1.bf16.msra.mxu0 %v1272
    %1650 = vmatprep.mubr.bf16.mxu0 %v403
    %1651 = vmatmul.mubr.bf16.gmra.mrb[0].mxu0 %v402
    %v1652 = vpop.f32.mrb[0].mxu0
    %v1653 = vadd.f32 %v1610, %v1652
    %v1654 = vpop.f32.mrb[0].mxu0
    %v1655 = vadd.f32 %v1612, %v1654
    %v1656 = vpop.f32.mrb[0].mxu0
    %v1657 = vadd.f32 %v1614, %v1656
    %v1658 = vpop.f32.mrb[0].mxu0
    %v1659 = vadd.f32 %v1616, %v1658
    %1660 = vdwg.mxu0
    %1661 = vmatprep.subr.bf16.mxu0 %v1277
    %1662 = vmatpush1.bf16.msra.mxu0 %v1276
    %1663 = vmatprep.subr.bf16.mxu0 %v1281
    %1664 = vmatpush1.bf16.msra.mxu0 %v1280
    %1665 = vmatprep.subr.bf16.mxu0 %v1285
    %1666 = vmatpush1.bf16.msra.mxu0 %v1284
    %1667 = vmatprep.subr.bf16.mxu0 %v1289
    %1668 = vmatpush1.bf16.msra.mxu0 %v1288
    %1669 = vmatprep.subr.bf16.mxu0 %v1293
    %1670 = vmatpush1.bf16.msra.mxu0 %v1292
    %1671 = vmatprep.subr.bf16.mxu0 %v1297
    %1672 = vmatpush1.bf16.msra.mxu0 %v1296
    %1673 = vmatprep.subr.bf16.mxu0 %v1301
    %1674 = vmatpush1.bf16.msra.mxu0 %v1300
    %1675 = vmatprep.subr.bf16.mxu0 %v1305
    %1676 = vmatpush1.bf16.msra.mxu0 %v1304
    %1677 = vmatprep.subr.bf16.mxu0 0
    %1678 = vmatpush1.bf16.msra.mxu0 0
    %1679 = vmatprep.subr.bf16.mxu0 0
    %1680 = vmatpush1.bf16.msra.mxu0 0
    %1681 = vmatprep.subr.bf16.mxu0 0
    %1682 = vmatpush1.bf16.msra.mxu0 0
    %1683 = vmatprep.subr.bf16.mxu0 0
    %1684 = vmatpush1.bf16.msra.mxu0 0
    %1685 = vmatprep.subr.bf16.mxu0 0
    %1686 = vmatpush1.bf16.msra.mxu0 0
    %1687 = vmatprep.subr.bf16.mxu0 0
    %1688 = vmatpush1.bf16.msra.mxu0 0
    %1689 = vmatprep.subr.bf16.mxu0 0
    %1690 = vmatpush1.bf16.msra.mxu0 0
    %1691 = vmatprep.subr.bf16.mxu0 0
    %1692 = vmatpush1.bf16.msra.mxu0 0
    %1693 = vmatprep.mubr.bf16.mxu0 0
    %1694 = vmatmul.mubr.bf16.gmra.mrb[0].mxu0 %v404
    %v1695 = vpop.f32.mrb[0].mxu0
    %v1696 = vadd.f32 %v1653, %v1695
    %v1697 = vpop.f32.mrb[0].mxu0
    %v1698 = vadd.f32 %v1655, %v1697
    %v1699 = vpop.f32.mrb[0].mxu0
    %v1700 = vadd.f32 %v1657, %v1699
    %v1701 = vpop.f32.mrb[0].mxu0
    %v1702 = vadd.f32 %v1659, %v1701
    %1703 = vdwg.mxu0
    %1704 = vmatprep.subr.bf16.mxu0 %v1087
    %1705 = vmatpush1.bf16.msra.mxu0 %v1086
    %1706 = vmatprep.subr.bf16.mxu0 %v1091
    %1707 = vmatpush1.bf16.msra.mxu0 %v1090
    %1708 = vmatprep.subr.bf16.mxu0 %v1095
    %1709 = vmatpush1.bf16.msra.mxu0 %v1094
    %1710 = vmatprep.subr.bf16.mxu0 %v1099
    %1711 = vmatpush1.bf16.msra.mxu0 %v1098
    %1712 = vmatprep.subr.bf16.mxu0 %v1103
    %1713 = vmatpush1.bf16.msra.mxu0 %v1102
    %1714 = vmatprep.subr.bf16.mxu0 %v1107
    %1715 = vmatpush1.bf16.msra.mxu0 %v1106
    %1716 = vmatprep.subr.bf16.mxu0 %v1111
    %1717 = vmatpush1.bf16.msra.mxu0 %v1110
    %1718 = vmatprep.subr.bf16.mxu0 %v1115
    %1719 = vmatpush1.bf16.msra.mxu0 %v1114
    %1720 = vmatprep.subr.bf16.mxu0 %v1119
    %1721 = vmatpush1.bf16.msra.mxu0 %v1118
    %1722 = vmatprep.subr.bf16.mxu0 %v1123
    %1723 = vmatpush1.bf16.msra.mxu0 %v1122
    %1724 = vmatprep.subr.bf16.mxu0 %v1127
    %1725 = vmatpush1.bf16.msra.mxu0 %v1126
    %1726 = vmatprep.subr.bf16.mxu0 %v1131
    %1727 = vmatpush1.bf16.msra.mxu0 %v1130
    %1728 = vmatprep.subr.bf16.mxu0 %v1135
    %1729 = vmatpush1.bf16.msra.mxu0 %v1134
    %1730 = vmatprep.subr.bf16.mxu0 %v1139
    %1731 = vmatpush1.bf16.msra.mxu0 %v1138
    %1732 = vmatprep.subr.bf16.mxu0 %v1143
    %1733 = vmatpush1.bf16.msra.mxu0 %v1142
    %1734 = vmatprep.subr.bf16.mxu0 %v1147
    %1735 = vmatpush1.bf16.msra.mxu0 %v1146
    %1736 = vmatprep.mubr.bf16.mxu0 %v399
    %1737 = vmatmul.mubr.bf16.gmra.mrb[0].mxu0 %v398
    %v1738 = vpop.f32.mrb[0].mxu0
    %v1739 = vadd.f32 %v367, %v1738
    %v1740 = vpop.f32.mrb[0].mxu0
    %v1741 = vadd.f32 %v371, %v1740
    %v1742 = vpop.f32.mrb[0].mxu0
    %v1743 = vadd.f32 %v367, %v1742
    %v1744 = vpop.f32.mrb[0].mxu0
    %v1745 = vadd.f32 %v371, %v1744
    %1746 = vdwg.mxu0
    %1747 = vmatprep.subr.bf16.mxu0 %v1151
    %1748 = vmatpush1.bf16.msra.mxu0 %v1150
    %1749 = vmatprep.subr.bf16.mxu0 %v1155
    %1750 = vmatpush1.bf16.msra.mxu0 %v1154
    %1751 = vmatprep.subr.bf16.mxu0 %v1159
    %1752 = vmatpush1.bf16.msra.mxu0 %v1158
    %1753 = vmatprep.subr.bf16.mxu0 %v1163
    %1754 = vmatpush1.bf16.msra.mxu0 %v1162
    %1755 = vmatprep.subr.bf16.mxu0 %v1167
    %1756 = vmatpush1.bf16.msra.mxu0 %v1166
    %1757 = vmatprep.subr.bf16.mxu0 %v1171
    %1758 = vmatpush1.bf16.msra.mxu0 %v1170
    %1759 = vmatprep.subr.bf16.mxu0 %v1175
    %1760 = vmatpush1.bf16.msra.mxu0 %v1174
    %1761 = vmatprep.subr.bf16.mxu0 %v1179
    %1762 = vmatpush1.bf16.msra.mxu0 %v1178
    %1763 = vmatprep.subr.bf16.mxu0 %v1183
    %1764 = vmatpush1.bf16.msra.mxu0 %v1182
    %1765 = vmatprep.subr.bf16.mxu0 %v1187
    %1766 = vmatpush1.bf16.msra.mxu0 %v1186
    %1767 = vmatprep.subr.bf16.mxu0 %v1191
    %1768 = vmatpush1.bf16.msra.mxu0 %v1190
    %1769 = vmatprep.subr.bf16.mxu0 %v1195
    %1770 = vmatpush1.bf16.msra.mxu0 %v1194
    %1771 = vmatprep.subr.bf16.mxu0 %v1199
    %1772 = vmatpush1.bf16.msra.mxu0 %v1198
    %1773 = vmatprep.subr.bf16.mxu0 %v1203
    %1774 = vmatpush1.bf16.msra.mxu0 %v1202
    %1775 = vmatprep.subr.bf16.mxu0 %v1207
    %1776 = vmatpush1.bf16.msra.mxu0 %v1206
    %1777 = vmatprep.subr.bf16.mxu0 %v1211
    %1778 = vmatpush1.bf16.msra.mxu0 %v1210
    %1779 = vmatprep.mubr.bf16.mxu0 %v401
    %1780 = vmatmul.mubr.bf16.gmra.mrb[0].mxu0 %v400
    %v1781 = vpop.f32.mrb[0].mxu0
    %v1782 = vadd.f32 %v1739, %v1781
    %v1783 = vpop.f32.mrb[0].mxu0
    %v1784 = vadd.f32 %v1741, %v1783
    %v1785 = vpop.f32.mrb[0].mxu0
    %v1786 = vadd.f32 %v1743, %v1785
    %v1787 = vpop.f32.mrb[0].mxu0
    %v1788 = vadd.f32 %v1745, %v1787
    %1789 = vdwg.mxu0
    %1790 = vmatprep.subr.bf16.mxu0 %v1215
    %1791 = vmatpush1.bf16.msra.mxu0 %v1214
    %1792 = vmatprep.subr.bf16.mxu0 %v1219
    %1793 = vmatpush1.bf16.msra.mxu0 %v1218
    %1794 = vmatprep.subr.bf16.mxu0 %v1223
    %1795 = vmatpush1.bf16.msra.mxu0 %v1222
    %1796 = vmatprep.subr.bf16.mxu0 %v1227
    %1797 = vmatpush1.bf16.msra.mxu0 %v1226
    %1798 = vmatprep.subr.bf16.mxu0 %v1231
    %1799 = vmatpush1.bf16.msra.mxu0 %v1230
    %1800 = vmatprep.subr.bf16.mxu0 %v1235
    %1801 = vmatpush1.bf16.msra.mxu0 %v1234
    %1802 = vmatprep.subr.bf16.mxu0 %v1239
    %1803 = vmatpush1.bf16.msra.mxu0 %v1238
    %1804 = vmatprep.subr.bf16.mxu0 %v1243
    %1805 = vmatpush1.bf16.msra.mxu0 %v1242
    %1806 = vmatprep.subr.bf16.mxu0 %v1247
    %1807 = vmatpush1.bf16.msra.mxu0 %v1246
    %1808 = vmatprep.subr.bf16.mxu0 %v1251
    %1809 = vmatpush1.bf16.msra.mxu0 %v1250
    %1810 = vmatprep.subr.bf16.mxu0 %v1255
    %1811 = vmatpush1.bf16.msra.mxu0 %v1254
    %1812 = vmatprep.subr.bf16.mxu0 %v1259
    %1813 = vmatpush1.bf16.msra.mxu0 %v1258
    %1814 = vmatprep.subr.bf16.mxu0 %v1263
    %1815 = vmatpush1.bf16.msra.mxu0 %v1262
    %1816 = vmatprep.subr.bf16.mxu0 %v1267
    %1817 = vmatpush1.bf16.msra.mxu0 %v1266
    %1818 = vmatprep.subr.bf16.mxu0 %v1271
    %1819 = vmatpush1.bf16.msra.mxu0 %v1270
    %1820 = vmatprep.subr.bf16.mxu0 %v1275
    %1821 = vmatpush1.bf16.msra.mxu0 %v1274
    %1822 = vmatprep.mubr.bf16.mxu0 %v403
    %1823 = vmatmul.mubr.bf16.gmra.mrb[0].mxu0 %v402
    %v1824 = vpop.f32.mrb[0].mxu0
    %v1825 = vadd.f32 %v1782, %v1824
    %v1826 = vpop.f32.mrb[0].mxu0
    %v1827 = vadd.f32 %v1784, %v1826
    %v1828 = vpop.f32.mrb[0].mxu0
    %v1829 = vadd.f32 %v1786, %v1828
    %v1830 = vpop.f32.mrb[0].mxu0
    %v1831 = vadd.f32 %v1788, %v1830
    %1832 = vdwg.mxu0
    %1833 = vmatprep.subr.bf16.mxu0 %v1279
    %1834 = vmatpush1.bf16.msra.mxu0 %v1278
    %1835 = vmatprep.subr.bf16.mxu0 %v1283
    %1836 = vmatpush1.bf16.msra.mxu0 %v1282
    %1837 = vmatprep.subr.bf16.mxu0 %v1287
    %1838 = vmatpush1.bf16.msra.mxu0 %v1286
    %1839 = vmatprep.subr.bf16.mxu0 %v1291
    %1840 = vmatpush1.bf16.msra.mxu0 %v1290
    %1841 = vmatprep.subr.bf16.mxu0 %v1295
    %1842 = vmatpush1.bf16.msra.mxu0 %v1294
    %1843 = vmatprep.subr.bf16.mxu0 %v1299
    %1844 = vmatpush1.bf16.msra.mxu0 %v1298
    %1845 = vmatprep.subr.bf16.mxu0 %v1303
    %1846 = vmatpush1.bf16.msra.mxu0 %v1302
    %1847 = vmatprep.subr.bf16.mxu0 %v1307
    %1848 = vmatpush1.bf16.msra.mxu0 %v1306
    %1849 = vmatprep.subr.bf16.mxu0 0
    %1850 = vmatpush1.bf16.msra.mxu0 0
    %1851 = vmatprep.subr.bf16.mxu0 0
    %1852 = vmatpush1.bf16.msra.mxu0 0
    %1853 = vmatprep.subr.bf16.mxu0 0
    %1854 = vmatpush1.bf16.msra.mxu0 0
    %1855 = vmatprep.subr.bf16.mxu0 0
    %1856 = vmatpush1.bf16.msra.mxu0 0
    %1857 = vmatprep.subr.bf16.mxu0 0
    %1858 = vmatpush1.bf16.msra.mxu0 0
    %1859 = vmatprep.subr.bf16.mxu0 0
    %1860 = vmatpush1.bf16.msra.mxu0 0
    %1861 = vmatprep.subr.bf16.mxu0 0
    %1862 = vmatpush1.bf16.msra.mxu0 0
    %1863 = vmatprep.subr.bf16.mxu0 0
    %1864 = vmatpush1.bf16.msra.mxu0 0
    %1865 = vmatprep.mubr.bf16.mxu0 0
    %1866 = vmatmul.mubr.bf16.gmra.mrb[0].mxu0 %v404
    %v1867 = vpop.f32.mrb[0].mxu0
    %v1868 = vadd.f32 %v1825, %v1867
    %v1869 = vpop.f32.mrb[0].mxu0
    %v1870 = vadd.f32 %v1827, %v1869
    %v1871 = vpop.f32.mrb[0].mxu0
    %v1872 = vadd.f32 %v1829, %v1871
    %v1873 = vpop.f32.mrb[0].mxu0
    %v1874 = vadd.f32 %v1831, %v1873
    %1875 = vdwg.mxu0
    %v1876 = vmax.f32 %v1696, 0.0
    %v1877 = vmax.f32 %v1698, 0.0
    %v1878 = vmax.f32 %v1868, 0.0
    %v1879 = vmax.f32 %v1870, 0.0
    %v1880 = vmax.f32 %v1700, 0.0
    %v1881 = vmax.f32 %v1702, 0.0
    %v1882 = vmax.f32 %v1872, 0.0
    %v1883 = vmax.f32 %v1874, 0.0
    %v1884 = vpack.c.bf16 %v1880, %v1876
    %v1885 = vpack.c.bf16 %v1881, %v1877
    %v1886 = vpack.c.bf16 %v1882, %v1878
    %v1887 = vpack.c.bf16 %v1883, %v1879
    %v1888 = vld [vmem:[#allocation7] sm:$0xf]
    %v1889 = vld [vmem:[#allocation7 + $0x4] sm:$0xf]
    %v1890 = vld [vmem:[#allocation7 + $0x8] sm:$0xf]
    %v1891 = vld [vmem:[#allocation7 + $0xc] sm:$0xf]
    %v1892 = vld [vmem:[#allocation7 + $0x10] sm:$0xf]
    %v1893 = vld [vmem:[#allocation7 + $0x14] sm:$0xf]
    %v1894 = vld [vmem:[#allocation7 + $0x18] sm:$0xf]
    %v1895 = vld [vmem:[#allocation7 + $0x1c] sm:$0xf]
    %v1896 = vld [vmem:[#allocation7 + $0x20] sm:$0xf]
    %v1897 = vld [vmem:[#allocation7 + $0x24] sm:$0xf]
    %v1898 = vld [vmem:[#allocation7 + $0x28] sm:$0xf]
    %v1899 = vld [vmem:[#allocation7 + $0x2c] sm:$0xf]
    %v1900 = vld [vmem:[#allocation7 + $0x30] sm:$0xf]
    %v1901 = vld [vmem:[#allocation7 + $0x34] sm:$0xf]
    %v1902 = vld [vmem:[#allocation7 + $0x38] sm:$0xf]
    %v1903 = vld [vmem:[#allocation7 + $0x3c] sm:$0xf]
    %v1904 = vld [vmem:[#allocation7 + $0x40] sm:$0xf]
    %v1905 = vld [vmem:[#allocation7 + $0x44] sm:$0xf]
    %v1906 = vld [vmem:[#allocation7 + $0x48] sm:$0xf]
    %v1907 = vld [vmem:[#allocation7 + $0x4c] sm:$0xf]
    %v1908 = vld [vmem:[#allocation7 + $0x50] sm:$0xf]
    %v1909 = vld [vmem:[#allocation7 + $0x54] sm:$0xf]
    %v1910 = vld [vmem:[#allocation7 + $0x58] sm:$0xf]
    %v1911 = vld [vmem:[#allocation7 + $0x5c] sm:$0xf]
    %v1912 = vld [vmem:[#allocation7 + $0x60] sm:$0xf]
    %v1913 = vld [vmem:[#allocation7 + $0x64] sm:$0xf]
    %v1914 = vld [vmem:[#allocation7 + $0x68] sm:$0xf]
    %v1915 = vld [vmem:[#allocation7 + $0x6c] sm:$0xf]
    %v1916 = vld [vmem:[#allocation7 + $0x70] sm:$0xf]
    %v1917 = vld [vmem:[#allocation7 + $0x74] sm:$0xf]
    %v1918 = vld [vmem:[#allocation7 + $0x78] sm:$0xf]
    %v1919 = vld [vmem:[#allocation7 + $0x7c] sm:$0xf]
    %v1920 = vld [vmem:[#allocation7 + $0x80] sm:$0xf]
    %v1921 = vld [vmem:[#allocation7 + $0x84] sm:$0xf]
    %v1922 = vld [vmem:[#allocation7 + $0x88] sm:$0xf]
    %v1923 = vld [vmem:[#allocation7 + $0x8c] sm:$0xf]
    %v1924 = vld [vmem:[#allocation7 + $0x90] sm:$0xf]
    %v1925 = vld [vmem:[#allocation7 + $0x94] sm:$0xf]
    %v1926 = vld [vmem:[#allocation7 + $0x98] sm:$0xf]
    %v1927 = vld [vmem:[#allocation7 + $0x9c] sm:$0xf]
    %v1928 = vld [vmem:[#allocation7 + $0xa0] sm:$0xf]
    %v1929 = vld [vmem:[#allocation7 + $0xa4] sm:$0xf]
    %v1930 = vld [vmem:[#allocation7 + $0xa8] sm:$0xf]
    %v1931 = vld [vmem:[#allocation7 + $0xac] sm:$0xf]
    %v1932 = vld [vmem:[#allocation7 + $0xb0] sm:$0xf]
    %v1933 = vld [vmem:[#allocation7 + $0xb4] sm:$0xf]
    %v1934 = vld [vmem:[#allocation7 + $0xb8] sm:$0xf]
    %v1935 = vld [vmem:[#allocation7 + $0xbc] sm:$0xf]
    %v1936 = vld [vmem:[#allocation7 + $0xc0] sm:$0xf]
    %v1937 = vld [vmem:[#allocation7 + $0xc4] sm:$0xf]
    %v1938 = vld [vmem:[#allocation7 + $0xc8] sm:$0xf]
    %v1939 = vld [vmem:[#allocation7 + $0xcc] sm:$0xf]
    %v1940 = vld [vmem:[#allocation7 + $0xd0] sm:$0xf]
    %v1941 = vld [vmem:[#allocation7 + $0xd4] sm:$0xf]
    %v1942 = vld [vmem:[#allocation7 + $0xd8] sm:$0xf]
    %v1943 = vld [vmem:[#allocation7 + $0xdc] sm:$0xf]
    %v1944 = vld [vmem:[#allocation7 + $0xe0] sm:$0xf]
    %v1945 = vld [vmem:[#allocation7 + $0xe4] sm:$0xf]
    %v1946 = vld [vmem:[#allocation7 + $0xe8] sm:$0xf]
    %v1947 = vld [vmem:[#allocation7 + $0xec] sm:$0xf]
    %v1948 = vld [vmem:[#allocation7 + $0xf0] sm:$0xf]
    %v1949 = vld [vmem:[#allocation7 + $0xf4] sm:$0xf]
    %v1950 = vld [vmem:[#allocation7 + $0xf8] sm:$0xf]
    %v1951 = vld [vmem:[#allocation7 + $0xfc] sm:$0xf]
    %v1952 = vld [vmem:[%s4] sm:$0x1]
    %v1954 = vlaneseq
    %v1955 = vshrl.u32 %v1954, 7
    %v1956 = vsub.s32 0, %v1955
    %v1957 = vrot.slane %v1952, %v1956
    %v2023 = vunpack.c.l.b16 %v1888
    %v2024 = vunpack.c.l.b16 %v1889
    %v2025 = vunpack.c.l.b16 %v1890
    %v2026 = vunpack.c.l.b16 %v1891
    %v2027 = vunpack.c.l.b16 %v1892
    %v2028 = vunpack.c.l.b16 %v1893
    %v2029 = vunpack.c.l.b16 %v1894
    %v2030 = vunpack.c.l.b16 %v1895
    %v2031 = vunpack.c.l.b16 %v1896
    %v2032 = vunpack.c.l.b16 %v1897
    %v2033 = vunpack.c.l.b16 %v1898
    %v2034 = vunpack.c.l.b16 %v1899
    %v2035 = vunpack.c.l.b16 %v1900
    %v2036 = vunpack.c.l.b16 %v1901
    %v2037 = vunpack.c.l.b16 %v1902
    %v2038 = vunpack.c.l.b16 %v1903
    %v2039 = vunpack.c.l.b16 %v1904
    %v2040 = vunpack.c.l.b16 %v1905
    %v2041 = vunpack.c.l.b16 %v1906
    %v2042 = vunpack.c.l.b16 %v1907
    %v2043 = vunpack.c.l.b16 %v1908
    %v2044 = vunpack.c.l.b16 %v1909
    %v2045 = vunpack.c.l.b16 %v1910
    %v2046 = vunpack.c.l.b16 %v1911
    %v2047 = vunpack.c.l.b16 %v1912
    %v2048 = vunpack.c.l.b16 %v1913
    %v2049 = vunpack.c.l.b16 %v1914
    %v2050 = vunpack.c.l.b16 %v1915
    %v2051 = vunpack.c.l.b16 %v1916
    %v2052 = vunpack.c.l.b16 %v1917
    %v2053 = vunpack.c.l.b16 %v1918
    %v2054 = vunpack.c.l.b16 %v1919
    %v2055 = vunpack.c.l.b16 %v1920
    %v2056 = vunpack.c.l.b16 %v1921
    %v2057 = vunpack.c.l.b16 %v1922
    %v2058 = vunpack.c.l.b16 %v1923
    %v2059 = vunpack.c.l.b16 %v1924
    %v2060 = vunpack.c.l.b16 %v1925
    %v2061 = vunpack.c.l.b16 %v1926
    %v2062 = vunpack.c.l.b16 %v1927
    %v2063 = vunpack.c.l.b16 %v1928
    %v2064 = vunpack.c.l.b16 %v1929
    %v2065 = vunpack.c.l.b16 %v1930
    %v2066 = vunpack.c.l.b16 %v1931
    %v2067 = vunpack.c.l.b16 %v1932
    %v2068 = vunpack.c.l.b16 %v1933
    %v2069 = vunpack.c.l.b16 %v1934
    %v2070 = vunpack.c.l.b16 %v1935
    %v2071 = vunpack.c.l.b16 %v1936
    %v2072 = vunpack.c.l.b16 %v1937
    %v2073 = vunpack.c.l.b16 %v1938
    %v2074 = vunpack.c.l.b16 %v1939
    %v2075 = vunpack.c.l.b16 %v1940
    %v2076 = vunpack.c.l.b16 %v1941
    %v2077 = vunpack.c.l.b16 %v1942
    %v2078 = vunpack.c.l.b16 %v1943
    %v2079 = vunpack.c.l.b16 %v1944
    %v2080 = vunpack.c.l.b16 %v1945
    %v2081 = vunpack.c.l.b16 %v1946
    %v2082 = vunpack.c.l.b16 %v1947
    %v2083 = vunpack.c.l.b16 %v1948
    %v2084 = vunpack.c.l.b16 %v1949
    %v2085 = vunpack.c.l.b16 %v1950
    %v2086 = vunpack.c.l.b16 %v1951
    %v2087 = vpack.c.b16 %v2024, %v2023
    %v2088 = vpack.c.b16 %v2026, %v2025
    %v2089 = vpack.c.b16 %v2028, %v2027
    %v2090 = vpack.c.b16 %v2030, %v2029
    %v2091 = vpack.c.b16 %v2032, %v2031
    %v2092 = vpack.c.b16 %v2034, %v2033
    %v2093 = vpack.c.b16 %v2036, %v2035
    %v2094 = vpack.c.b16 %v2038, %v2037
    %v2095 = vpack.c.b16 %v2040, %v2039
    %v2096 = vpack.c.b16 %v2042, %v2041
    %v2097 = vpack.c.b16 %v2044, %v2043
    %v2098 = vpack.c.b16 %v2046, %v2045
    %v2099 = vpack.c.b16 %v2048, %v2047
    %v2100 = vpack.c.b16 %v2050, %v2049
    %v2101 = vpack.c.b16 %v2052, %v2051
    %v2102 = vpack.c.b16 %v2054, %v2053
    %v2103 = vpack.c.b16 %v2056, %v2055
    %v2104 = vpack.c.b16 %v2058, %v2057
    %v2105 = vpack.c.b16 %v2060, %v2059
    %v2106 = vpack.c.b16 %v2062, %v2061
    %v2107 = vpack.c.b16 %v2064, %v2063
    %v2108 = vpack.c.b16 %v2066, %v2065
    %v2109 = vpack.c.b16 %v2068, %v2067
    %v2110 = vpack.c.b16 %v2070, %v2069
    %v2111 = vpack.c.b16 %v2072, %v2071
    %v2112 = vpack.c.b16 %v2074, %v2073
    %v2113 = vpack.c.b16 %v2076, %v2075
    %v2114 = vpack.c.b16 %v2078, %v2077
    %v2115 = vpack.c.b16 %v2080, %v2079
    %v2116 = vpack.c.b16 %v2082, %v2081
    %v2117 = vpack.c.b16 %v2084, %v2083
    %v2118 = vpack.c.b16 %v2086, %v2085
    %2151 = vmatprep.subr.bf16.mxu0 0
    %2152 = vmatpush1.bf16.msra.mxu0 %v2087
    %2153 = vmatprep.subr.bf16.mxu0 0
    %2154 = vmatpush1.bf16.msra.mxu0 %v2088
    %2155 = vmatprep.subr.bf16.mxu0 0
    %2156 = vmatpush1.bf16.msra.mxu0 %v2089
    %2157 = vmatprep.subr.bf16.mxu0 0
    %2158 = vmatpush1.bf16.msra.mxu0 %v2090
    %2159 = vmatprep.subr.bf16.mxu0 0
    %2160 = vmatpush1.bf16.msra.mxu0 %v2091
    %2161 = vmatprep.subr.bf16.mxu0 0
    %2162 = vmatpush1.bf16.msra.mxu0 %v2092
    %2163 = vmatprep.subr.bf16.mxu0 0
    %2164 = vmatpush1.bf16.msra.mxu0 %v2093
    %2165 = vmatprep.subr.bf16.mxu0 0
    %2166 = vmatpush1.bf16.msra.mxu0 %v2094
    %2167 = vmatprep.subr.bf16.mxu0 0
    %2168 = vmatpush1.bf16.msra.mxu0 %v2095
    %2169 = vmatprep.subr.bf16.mxu0 0
    %2170 = vmatpush1.bf16.msra.mxu0 %v2096
    %2171 = vmatprep.subr.bf16.mxu0 0
    %2172 = vmatpush1.bf16.msra.mxu0 %v2097
    %2173 = vmatprep.subr.bf16.mxu0 0
    %2174 = vmatpush1.bf16.msra.mxu0 %v2098
    %2175 = vmatprep.subr.bf16.mxu0 0
    %2176 = vmatpush1.bf16.msra.mxu0 %v2099
    %2177 = vmatprep.subr.bf16.mxu0 0
    %2178 = vmatpush1.bf16.msra.mxu0 %v2100
    %2179 = vmatprep.subr.bf16.mxu0 0
    %2180 = vmatpush1.bf16.msra.mxu0 %v2101
    %2181 = vmatprep.subr.bf16.mxu0 0
    %2182 = vmatpush1.bf16.msra.mxu0 %v2102
    %2183 = vmatprep.mubr.bf16.mxu0 %v1885
    %2184 = vmatmul.mubr.bf16.gmra.mrb[0].mxu0 %v1884
    %v2185 = vpop.f32.mrb[0].mxu0
    %v2186 = vadd.f32 %v1957, %v2185
    %v2187 = vpop.f32.mrb[0].mxu0
    %v2188 = vpop.f32.mrb[0].mxu0
    %v2189 = vadd.f32 %v1957, %v2188
    %v2190 = vpop.f32.mrb[0].mxu0
    %2191 = vdwg.mxu0
    %2192 = vmatprep.subr.bf16.mxu0 0
    %2193 = vmatpush1.bf16.msra.mxu0 %v2103
    %2194 = vmatprep.subr.bf16.mxu0 0
    %2195 = vmatpush1.bf16.msra.mxu0 %v2104
    %2196 = vmatprep.subr.bf16.mxu0 0
    %2197 = vmatpush1.bf16.msra.mxu0 %v2105
    %2198 = vmatprep.subr.bf16.mxu0 0
    %2199 = vmatpush1.bf16.msra.mxu0 %v2106
    %2200 = vmatprep.subr.bf16.mxu0 0
    %2201 = vmatpush1.bf16.msra.mxu0 %v2107
    %2202 = vmatprep.subr.bf16.mxu0 0
    %2203 = vmatpush1.bf16.msra.mxu0 %v2108
    %2204 = vmatprep.subr.bf16.mxu0 0
    %2205 = vmatpush1.bf16.msra.mxu0 %v2109
    %2206 = vmatprep.subr.bf16.mxu0 0
    %2207 = vmatpush1.bf16.msra.mxu0 %v2110
    %2208 = vmatprep.subr.bf16.mxu0 0
    %2209 = vmatpush1.bf16.msra.mxu0 %v2111
    %2210 = vmatprep.subr.bf16.mxu0 0
    %2211 = vmatpush1.bf16.msra.mxu0 %v2112
    %2212 = vmatprep.subr.bf16.mxu0 0
    %2213 = vmatpush1.bf16.msra.mxu0 %v2113
    %2214 = vmatprep.subr.bf16.mxu0 0
    %2215 = vmatpush1.bf16.msra.mxu0 %v2114
    %2216 = vmatprep.subr.bf16.mxu0 0
    %2217 = vmatpush1.bf16.msra.mxu0 %v2115
    %2218 = vmatprep.subr.bf16.mxu0 0
    %2219 = vmatpush1.bf16.msra.mxu0 %v2116
    %2220 = vmatprep.subr.bf16.mxu0 0
    %2221 = vmatpush1.bf16.msra.mxu0 %v2117
    %2222 = vmatprep.subr.bf16.mxu0 0
    %2223 = vmatpush1.bf16.msra.mxu0 %v2118
    %2224 = vmatprep.mubr.bf16.mxu0 %v1887
    %2225 = vmatmul.mubr.bf16.gmra.mrb[0].mxu0 %v1886
    %v2226 = vpop.f32.mrb[0].mxu0
    %v2227 = vadd.f32 %v2186, %v2226
    %v2228 = vpop.f32.mrb[0].mxu0
    %v2229 = vpop.f32.mrb[0].mxu0
    %v2230 = vadd.f32 %v2189, %v2229
    %v2231 = vpop.f32.mrb[0].mxu0
    %2232 = vdwg.mxu0
    %v2233 = vmax.f32 %v2227, 0.0
    %v2234 = vmax.f32 %v2230, 0.0
    %v2235 = vpack.c.bf16 %v2234, %v2233
    %v2236 = vld [vmem:[#allocation8] sm:$0xf]
    %v2237 = vld [vmem:[#allocation8 + $0x4] sm:$0xf]
    %v2238 = vld [vmem:[#allocation8 + $0x8] sm:$0xf]
    %v2239 = vld [vmem:[#allocation8 + $0xc] sm:$0xf]
    %v2240 = vld [vmem:[#allocation8 + $0x10] sm:$0xf]
    %v2241 = vld [vmem:[#allocation8 + $0x14] sm:$0xf]
    %v2242 = vld [vmem:[#allocation8 + $0x18] sm:$0xf]
    %v2243 = vld [vmem:[#allocation8 + $0x1c] sm:$0xf]
    %v2244 = vld [vmem:[#allocation8 + $0x20] sm:$0xf]
    %v2245 = vld [vmem:[#allocation8 + $0x24] sm:$0xf]
    %v2246 = vld [vmem:[#allocation8 + $0x28] sm:$0xf]
    %v2247 = vld [vmem:[#allocation8 + $0x2c] sm:$0xf]
    %v2248 = vld [vmem:[#allocation8 + $0x30] sm:$0xf]
    %v2249 = vld [vmem:[#allocation8 + $0x34] sm:$0xf]
    %v2250 = vld [vmem:[#allocation8 + $0x38] sm:$0xf]
    %v2251 = vld [vmem:[#allocation8 + $0x3c] sm:$0xf]
    %v2252 = vld [vmem:[%s6] sm:$0x1]
    %v2254 = vlaneseq
    %v2255 = vshrl.u32 %v2254, 7
    %v2256 = vsub.s32 0, %v2255
    %v2257 = vrot.slane %v2252, %v2256
    %v2275 = vunpack.c.l.b16 %v2236
    %v2276 = vunpack.c.l.b16 %v2237
    %v2277 = vunpack.c.l.b16 %v2238
    %v2278 = vunpack.c.l.b16 %v2239
    %v2279 = vunpack.c.l.b16 %v2240
    %v2280 = vunpack.c.l.b16 %v2241
    %v2281 = vunpack.c.l.b16 %v2242
    %v2282 = vunpack.c.l.b16 %v2243
    %v2283 = vunpack.c.l.b16 %v2244
    %v2284 = vunpack.c.l.b16 %v2245
    %v2285 = vunpack.c.l.b16 %v2246
    %v2286 = vunpack.c.l.b16 %v2247
    %v2287 = vunpack.c.l.b16 %v2248
    %v2288 = vunpack.c.l.b16 %v2249
    %v2289 = vunpack.c.l.b16 %v2250
    %v2290 = vunpack.c.l.b16 %v2251
    %v2291 = vpack.c.b16 %v2276, %v2275
    %v2292 = vpack.c.b16 %v2278, %v2277
    %v2293 = vpack.c.b16 %v2280, %v2279
    %v2294 = vpack.c.b16 %v2282, %v2281
    %v2295 = vpack.c.b16 %v2284, %v2283
    %v2296 = vpack.c.b16 %v2286, %v2285
    %v2297 = vpack.c.b16 %v2288, %v2287
    %v2298 = vpack.c.b16 %v2290, %v2289
    %2307 = vmatprep.subr.bf16.mxu0 0
    %2308 = vmatpush1.bf16.msra.mxu0 %v2291
    %2309 = vmatprep.subr.bf16.mxu0 0
    %2310 = vmatpush1.bf16.msra.mxu0 %v2292
    %2311 = vmatprep.subr.bf16.mxu0 0
    %2312 = vmatpush1.bf16.msra.mxu0 %v2293
    %2313 = vmatprep.subr.bf16.mxu0 0
    %2314 = vmatpush1.bf16.msra.mxu0 %v2294
    %2315 = vmatprep.subr.bf16.mxu0 0
    %2316 = vmatpush1.bf16.msra.mxu0 %v2295
    %2317 = vmatprep.subr.bf16.mxu0 0
    %2318 = vmatpush1.bf16.msra.mxu0 %v2296
    %2319 = vmatprep.subr.bf16.mxu0 0
    %2320 = vmatpush1.bf16.msra.mxu0 %v2297
    %2321 = vmatprep.subr.bf16.mxu0 0
    %2322 = vmatpush1.bf16.msra.mxu0 %v2298
    %2323 = vmatprep.subr.bf16.mxu0 0
    %2324 = vmatpush1.bf16.msra.mxu0 0
    %2325 = vmatprep.subr.bf16.mxu0 0
    %2326 = vmatpush1.bf16.msra.mxu0 0
    %2327 = vmatprep.subr.bf16.mxu0 0
    %2328 = vmatpush1.bf16.msra.mxu0 0
    %2329 = vmatprep.subr.bf16.mxu0 0
    %2330 = vmatpush1.bf16.msra.mxu0 0
    %2331 = vmatprep.subr.bf16.mxu0 0
    %2332 = vmatpush1.bf16.msra.mxu0 0
    %2333 = vmatprep.subr.bf16.mxu0 0
    %2334 = vmatpush1.bf16.msra.mxu0 0
    %2335 = vmatprep.subr.bf16.mxu0 0
    %2336 = vmatpush1.bf16.msra.mxu0 0
    %2337 = vmatprep.subr.bf16.mxu0 0
    %2338 = vmatpush1.bf16.msra.mxu0 0
    %2339 = vmatprep.mubr.bf16.mxu0 0
    %2340 = vmatmul.mubr.bf16.gmra.mrb[0].mxu0 %v2235
    %v2341 = vpop.f32.mrb[0].mxu0
    %v2342 = vadd.f32 %v2257, %v2341
    %v2343 = vpop.f32.mrb[0].mxu0
    %v2344 = vpop.f32.mrb[0].mxu0
    %v2345 = vadd.f32 %v2257, %v2344
    %v2346 = vpop.f32.mrb[0].mxu0
    %2347 = vdwg.mxu0
    %v2348 = vmax.f32 %v2342, 0.0
    %v2349 = vmax.f32 %v2345, 0.0
    %v2350 = vpack.c.bf16 %v2349, %v2348
    %v2351 = vld [vmem:[#allocation10] sm:$0xf]
    %v2352 = vld [vmem:[#allocation10 + $0x4] sm:$0xf]
    %v2353 = vld [vmem:[#allocation10 + $0x8] sm:$0xf]
    %v2354 = vld [vmem:[#allocation10 + $0xc] sm:$0xf]
    %v2355 = vld [vmem:[#allocation10 + $0x10] sm:$0xf]
    %v2356 = vld [vmem:[#allocation10 + $0x14] sm:$0xf]
    %v2357 = vld [vmem:[#allocation10 + $0x18] sm:$0xf]
    %v2358 = vld [vmem:[#allocation10 + $0x1c] sm:$0xf]
    %v2359 = vld [vmem:[#allocation10 + $0x20] sm:$0xf]
    %v2360 = vld [vmem:[#allocation10 + $0x24] sm:$0xf]
    %v2361 = vld [vmem:[#allocation10 + $0x28] sm:$0xf]
    %v2362 = vld [vmem:[#allocation10 + $0x2c] sm:$0xf]
    %v2363 = vld [vmem:[#allocation10 + $0x30] sm:$0xf]
    %v2364 = vld [vmem:[#allocation10 + $0x34] sm:$0xf]
    %v2365 = vld [vmem:[#allocation10 + $0x38] sm:$0xf]
    %v2366 = vld [vmem:[#allocation10 + $0x3c] sm:$0xf]
    %v2367 = vld [vmem:[%s8] sm:$0x1]
    %v2369 = vlaneseq
    %v2370 = vshrl.u32 %v2369, 7
    %v2371 = vsub.s32 0, %v2370
    %v2372 = vrot.slane %v2367, %v2371
    %v2390 = vunpack.c.l.b16 %v2351
    %v2391 = vunpack.c.l.b16 %v2352
    %v2392 = vunpack.c.l.b16 %v2353
    %v2393 = vunpack.c.l.b16 %v2354
    %v2394 = vunpack.c.l.b16 %v2355
    %v2395 = vunpack.c.l.b16 %v2356
    %v2396 = vunpack.c.l.b16 %v2357
    %v2397 = vunpack.c.l.b16 %v2358
    %v2398 = vunpack.c.l.b16 %v2359
    %v2399 = vunpack.c.l.b16 %v2360
    %v2400 = vunpack.c.l.b16 %v2361
    %v2401 = vunpack.c.l.b16 %v2362
    %v2402 = vunpack.c.l.b16 %v2363
    %v2403 = vunpack.c.l.b16 %v2364
    %v2404 = vunpack.c.l.b16 %v2365
    %v2405 = vunpack.c.l.b16 %v2366
    %v2406 = vpack.c.b16 %v2391, %v2390
    %v2407 = vpack.c.b16 %v2393, %v2392
    %v2408 = vpack.c.b16 %v2395, %v2394
    %v2409 = vpack.c.b16 %v2397, %v2396
    %v2410 = vpack.c.b16 %v2399, %v2398
    %v2411 = vpack.c.b16 %v2401, %v2400
    %v2412 = vpack.c.b16 %v2403, %v2402
    %v2413 = vpack.c.b16 %v2405, %v2404
    %2422 = vmatprep.subr.bf16.mxu0 0
    %2423 = vmatpush1.bf16.msra.mxu0 %v2406
    %2424 = vmatprep.subr.bf16.mxu0 0
    %2425 = vmatpush1.bf16.msra.mxu0 %v2407
    %2426 = vmatprep.subr.bf16.mxu0 0
    %2427 = vmatpush1.bf16.msra.mxu0 %v2408
    %2428 = vmatprep.subr.bf16.mxu0 0
    %2429 = vmatpush1.bf16.msra.mxu0 %v2409
    %2430 = vmatprep.subr.bf16.mxu0 0
    %2431 = vmatpush1.bf16.msra.mxu0 %v2410
    %2432 = vmatprep.subr.bf16.mxu0 0
    %2433 = vmatpush1.bf16.msra.mxu0 %v2411
    %2434 = vmatprep.subr.bf16.mxu0 0
    %2435 = vmatpush1.bf16.msra.mxu0 %v2412
    %2436 = vmatprep.subr.bf16.mxu0 0
    %2437 = vmatpush1.bf16.msra.mxu0 %v2413
    %2438 = vmatprep.subr.bf16.mxu0 0
    %2439 = vmatpush1.bf16.msra.mxu0 0
    %2440 = vmatprep.subr.bf16.mxu0 0
    %2441 = vmatpush1.bf16.msra.mxu0 0
    %2442 = vmatprep.subr.bf16.mxu0 0
    %2443 = vmatpush1.bf16.msra.mxu0 0
    %2444 = vmatprep.subr.bf16.mxu0 0
    %2445 = vmatpush1.bf16.msra.mxu0 0
    %2446 = vmatprep.subr.bf16.mxu0 0
    %2447 = vmatpush1.bf16.msra.mxu0 0
    %2448 = vmatprep.subr.bf16.mxu0 0
    %2449 = vmatpush1.bf16.msra.mxu0 0
    %2450 = vmatprep.subr.bf16.mxu0 0
    %2451 = vmatpush1.bf16.msra.mxu0 0
    %2452 = vmatprep.subr.bf16.mxu0 0
    %2453 = vmatpush1.bf16.msra.mxu0 0
    %2454 = vmatprep.mubr.bf16.mxu0 0
    %2455 = vmatmul.mubr.bf16.gmra.mrb[0].mxu0 %v2350
    %v2456 = vpop.f32.mrb[0].mxu0
    %v2457 = vadd.f32 %v2372, %v2456
    %v2458 = vpop.f32.mrb[0].mxu0
    %v2459 = vpop.f32.mrb[0].mxu0
    %v2460 = vadd.f32 %v2372, %v2459
    %v2461 = vpop.f32.mrb[0].mxu0
    %2462 = vdwg.mxu0
    %v2463 = vmax.f32 %v2457, 0.0
    %v2464 = vmax.f32 %v2460, 0.0
    %v2465 = vpack.c.bf16 %v2464, %v2463
    %v2466 = vld [vmem:[#allocation11] sm:$0xf]
    %v2467 = vld [vmem:[#allocation11 + $0x4] sm:$0xf]
    %v2468 = vld [vmem:[#allocation11 + $0x8] sm:$0xf]
    %v2469 = vld [vmem:[#allocation11 + $0xc] sm:$0xf]
    %v2470 = vld [vmem:[#allocation11 + $0x10] sm:$0xf]
    %v2471 = vld [vmem:[#allocation11 + $0x14] sm:$0xf]
    %v2472 = vld [vmem:[#allocation11 + $0x18] sm:$0xf]
    %v2473 = vld [vmem:[#allocation11 + $0x1c] sm:$0xf]
    %v2474 = vld [vmem:[#allocation11 + $0x20] sm:$0xf]
    %v2475 = vld [vmem:[#allocation11 + $0x24] sm:$0xf]
    %v2476 = vld [vmem:[#allocation11 + $0x28] sm:$0xf]
    %v2477 = vld [vmem:[#allocation11 + $0x2c] sm:$0xf]
    %v2478 = vld [vmem:[#allocation11 + $0x30] sm:$0xf]
    %v2479 = vld [vmem:[#allocation11 + $0x34] sm:$0xf]
    %v2480 = vld [vmem:[#allocation11 + $0x38] sm:$0xf]
    %v2481 = vld [vmem:[#allocation11 + $0x3c] sm:$0xf]
    %v2482 = vld [vmem:[%s10] sm:$0x1]
    %v2484 = vlaneseq
    %v2485 = vshrl.u32 %v2484, 7
    %v2486 = vsub.s32 0, %v2485
    %v2487 = vrot.slane %v2482, %v2486
    %v2505 = vunpack.c.l.b16 %v2466
    %v2506 = vunpack.c.l.b16 %v2467
    %v2507 = vunpack.c.l.b16 %v2468
    %v2508 = vunpack.c.l.b16 %v2469
    %v2509 = vunpack.c.l.b16 %v2470
    %v2510 = vunpack.c.l.b16 %v2471
    %v2511 = vunpack.c.l.b16 %v2472
    %v2512 = vunpack.c.l.b16 %v2473
    %v2513 = vunpack.c.l.b16 %v2474
    %v2514 = vunpack.c.l.b16 %v2475
    %v2515 = vunpack.c.l.b16 %v2476
    %v2516 = vunpack.c.l.b16 %v2477
    %v2517 = vunpack.c.l.b16 %v2478
    %v2518 = vunpack.c.l.b16 %v2479
    %v2519 = vunpack.c.l.b16 %v2480
    %v2520 = vunpack.c.l.b16 %v2481
    %v2521 = vpack.c.b16 %v2506, %v2505
    %v2522 = vpack.c.b16 %v2508, %v2507
    %v2523 = vpack.c.b16 %v2510, %v2509
    %v2524 = vpack.c.b16 %v2512, %v2511
    %v2525 = vpack.c.b16 %v2514, %v2513
    %v2526 = vpack.c.b16 %v2516, %v2515
    %v2527 = vpack.c.b16 %v2518, %v2517
    %v2528 = vpack.c.b16 %v2520, %v2519
    %2537 = vmatprep.subr.bf16.mxu0 0
    %2538 = vmatpush1.bf16.msra.mxu0 %v2521
    %2539 = vmatprep.subr.bf16.mxu0 0
    %2540 = vmatpush1.bf16.msra.mxu0 %v2522
    %2541 = vmatprep.subr.bf16.mxu0 0
    %2542 = vmatpush1.bf16.msra.mxu0 %v2523
    %2543 = vmatprep.subr.bf16.mxu0 0
    %2544 = vmatpush1.bf16.msra.mxu0 %v2524
    %2545 = vmatprep.subr.bf16.mxu0 0
    %2546 = vmatpush1.bf16.msra.mxu0 %v2525
    %2547 = vmatprep.subr.bf16.mxu0 0
    %2548 = vmatpush1.bf16.msra.mxu0 %v2526
    %2549 = vmatprep.subr.bf16.mxu0 0
    %2550 = vmatpush1.bf16.msra.mxu0 %v2527
    %2551 = vmatprep.subr.bf16.mxu0 0
    %2552 = vmatpush1.bf16.msra.mxu0 %v2528
    %2553 = vmatprep.subr.bf16.mxu0 0
    %2554 = vmatpush1.bf16.msra.mxu0 0
    %2555 = vmatprep.subr.bf16.mxu0 0
    %2556 = vmatpush1.bf16.msra.mxu0 0
    %2557 = vmatprep.subr.bf16.mxu0 0
    %2558 = vmatpush1.bf16.msra.mxu0 0
    %2559 = vmatprep.subr.bf16.mxu0 0
    %2560 = vmatpush1.bf16.msra.mxu0 0
    %2561 = vmatprep.subr.bf16.mxu0 0
    %2562 = vmatpush1.bf16.msra.mxu0 0
    %2563 = vmatprep.subr.bf16.mxu0 0
    %2564 = vmatpush1.bf16.msra.mxu0 0
    %2565 = vmatprep.subr.bf16.mxu0 0
    %2566 = vmatpush1.bf16.msra.mxu0 0
    %2567 = vmatprep.subr.bf16.mxu0 0
    %2568 = vmatpush1.bf16.msra.mxu0 0
    %2569 = vmatprep.mubr.bf16.mxu0 0
    %2570 = vmatmul.mubr.bf16.gmra.mrb[0].mxu0 %v2465
    %v2571 = vpop.f32.mrb[0].mxu0
    %v2572 = vadd.f32 %v2487, %v2571
    %v2573 = vpop.f32.mrb[0].mxu0
    %v2574 = vpop.f32.mrb[0].mxu0
    %v2575 = vadd.f32 %v2487, %v2574
    %v2576 = vpop.f32.mrb[0].mxu0
    %2577 = vdwg.mxu0
    %2578 = vst [vmem:[#allocation13] sm:$0xff] %v2572
    %2579 = vst [vmem:[#allocation13 + $0x8] sm:$0xff] %v2575
    // Predicated region
    $region70: #{tpu_custom_call.1} parent=1 // pred_check
      _
    $region71: #{tpu_custom_call.1} parent=1 // pred_check_branch
      %2581 = sbr.rel (0) target = $region73
    $region72: #{tpu_custom_call.1} parent=1 // pred_region
      %s2583 = ssub.s32 256, 256
      %2584 = vsyncadd [#allocation4], %s2583
      %s2585 = sshll.u32 [#allocation13], 4
      %s2586 = int_to_ptr.vmem [resolvable:$true] %s2585
      %2591 = dma.vmem_to_hbm [thread:$0]  %s2586, 256, %s11, [#allocation4], 128, 128, 8
    $region73: #{tpu_custom_call.1} parent=1 // pred_fallthru
      _
    // Predicated region
    $region74: #{tpu_custom_call.1} parent=1 // pred_check
      _
    $region75: #{tpu_custom_call.1} parent=1 // pred_check_branch
      %2593 = sbr.rel (0) target = $region77
    $region76: #{tpu_custom_call.1} parent=1 // pred_region
      %2594 = dma.done [#allocation4], 256
    $region77: #{tpu_custom_call.1} parent=1 // pred_fallthru
      _
    %2595 = vsyncpa [#allocation3], 1
    %2596 = vsyncpa [#allocation6], 1
    %2597 = vsyncpa [#allocation9], 1
    %2598 = vsyncpa [#allocation12], 1
    %2599 = vsyncpa [#allocation4], 1

</llo_original>
